<compile_context>
chip_gen: v5e
topology: v5e:2x2
jax: 0.10.0
libtpu: 0.0.40
codegen_flags: <defaults>
</compile_context>

<pallas_src>
import functools

import jax
import jax.numpy as jnp
from jax.experimental import pallas as pl
from jax.experimental.pallas import tpu as pltpu

PB = 128          # lane-dense width reserved for the (P@A)^T pool columns / partial rows
NODE_ALIGN = 512  # node-dim padding granularity (>=512 keeps the A stream near HBM roofline)


def _round_up(x, m):
    return ((x + m - 1) // m) * m


def padded_num_nodes(n):
    return _round_up(max(n, 1), NODE_ALIGN)


def _pick_tile(n_pad):
    # Largest tile in {2048, 1024, 512} dividing n_pad while keeping >= 2 row blocks
    # when possible (so the "parallel" i axis can shard across v7x's 2 TensorCores).
    for t in (2048, 1024):
        if n_pad % t == 0 and n_pad // t >= 2:
            return t
    return 512


# -----------------------------------------------------------------------------
# Fused kernel.  Grid = (node-row blocks i [parallel], A_hat column blocks k
# [reduction]).  For row block i it emits parts[i] = (P@A)[:, i-block] @ h_i where
# h_i = relu(A[i,:] @ X @ W1 + b1)  (eval-mode dropout = identity).
# -----------------------------------------------------------------------------
def gcn_fused_kernel(*refs, agg_x_first, fuse_pa, acc_cols):
    if fuse_pa:
        a_ref, s_ref, w1_ref, b1_ref, parts_ref, acc_ref = refs
        pa_ref = None
    else:
        a_ref, s_ref, w1_ref, b1_ref, pa_ref, parts_ref, acc_ref = refs

    k = pl.program_id(1)
    nk = pl.num_programs(1)

    @pl.when(k == 0)
    def _():
        acc_ref[...] = jnp.zeros_like(acc_ref)

    # Single streamed MXU pass per (i, k) tile of A_hat (streamed from HBM once):
    #   acc[:, :acc_cols] += A[i,k] @ (XW1 or X)[k]     (layer-1 aggregation)
    #   acc[:, acc_cols:] += A[i,k] @ P[:, k]^T         ((P@A)^T rows; A_hat symmetric)
    acc_ref[...] += jnp.dot(a_ref[...], s_ref[...],
                            preferred_element_type=jnp.float32)

    @pl.when(k == nk - 1)
    def _():
        acc = acc_ref[...]
        h = acc[:, :acc_cols]
        if agg_x_first:
            h = jnp.dot(h, w1_ref[...], preferred_element_type=jnp.float32)
        h = jnp.maximum(h + b1_ref[...], 0.0).astype(jnp.bfloat16)
        # F.dropout(h, training=self.training) is identity in eval mode.
        # TODO(synk): training-mode dropout (pltpu.prng_seed + prng_random_bits) not implemented.
        if fuse_pa:
            pa_blk = acc[:, acc_cols:].T.astype(jnp.bfloat16)   # (PB, T) = (P@A)[:, i-block]
        else:
            pa_blk = pa_ref[...]                                # (PB, T) bf16, precomputed
        # (PB, H_pad) pooled partial for this node-row block (lane/sublane-dense store).
        parts_ref[0] = jnp.dot(pa_blk, h, preferred_element_type=jnp.float32)


def gcn_encoder_forward(ahat, x, w1, b1, w2, b2, pool, *, assume_symmetric=True):
    """out = P @ (A relu(A X W1 + b1) W2 + b2), A = GCN-normalized adjacency, P = mean pool.

    `ahat` should be the node-padded bf16 matrix from build_gcn_norm_adj (avoids an extra
    N^2 pad/cast copy); a plain (N, N) float matrix is also accepted.
    assume_symmetric=True fuses P@A into the single A_hat stream (exact for the symmetric
    GCN normalization of undirected graphs); use False for directed edge sets.
    """
    N, F = x.shape
    H = w1.shape[1]
    B = pool.shape[0]
    assert B <= PB, "TODO(synk): tile the graph/batch axis when num_graphs > 128"

    # --- A_hat: use a pre-padded bf16 matrix as-is; otherwise pad/cast once. ---
    if (ahat.dtype == jnp.bfloat16 and ahat.ndim == 2
            and ahat.shape[0] == ahat.shape[1]
            and ahat.shape[0] >= N and ahat.shape[0] % NODE_ALIGN == 0):
        ahat_p = ahat
        n_pad = ahat.shape[0]
    else:
        n_pad = padded_num_nodes(N)
        ahat_p = jnp.zeros((n_pad, n_pad), jnp.bfloat16).at[:N, :N].set(
            ahat[:N, :N].astype(jnp.bfloat16))
    T = _pick_tile(n_pad)
    ni = n_pad // T
    nk = n_pad // T

    H_pad = _round_up(H, 128)
    F_pad = _round_up(F, 128)
    # Associate by MXU pass count, not raw width: (T,T)@(T,4) costs the same passes as
    # (T,T)@(T,128), so only aggregate A@X first when F needs strictly fewer strips.
    agg_x_first = pl.cdiv(F, 128) < pl.cdiv(H, 128)
    acc_cols = F_pad if agg_x_first else H_pad
    fuse_pa = bool(assume_symmetric)
    W = acc_cols + (PB if fuse_pa else 0)

    # --- Streamed RHS  S = [ (X@W1 or X)  |  P^T ]  (node dim padded, bf16). ---
    s = jnp.zeros((n_pad, W), jnp.bfloat16)
    if agg_x_first:
        s = s.at[:N, :F].set(x.astype(jnp.bfloat16))
    else:
        xw1 = jnp.dot(x.astype(jnp.float32), w1.astype(jnp.float32))   # hoisted X@W1 (once)
        s = s.at[:N, :H].set(xw1.astype(jnp.bfloat16))
    if fuse_pa:
        s = s.at[:N, acc_cols:acc_cols + B].set(pool.T.astype(jnp.bfloat16))

    w1_p = jnp.zeros((F_pad, H_pad), jnp.float32).at[:F, :H].set(w1.astype(jnp.float32))
    b1_p = jnp.zeros((1, H_pad), jnp.float32).at[0, :H].set(
        b1.reshape(-1).astype(jnp.float32))

    in_specs = [
        pl.BlockSpec((T, T), lambda i, k: (i, k)),           # A_hat tile (bf16, single stream)
        pl.BlockSpec((T, W), lambda i, k: (k, 0)),           # S rows for column block k
        pl.BlockSpec((F_pad, H_pad), lambda i, k: (0, 0)),   # W1 (resident; used iff agg_x_first)
        pl.BlockSpec((1, H_pad), lambda i, k: (0, 0)),       # b1 (resident)
    ]
    args = [ahat_p, s, w1_p, b1_p]
    if not fuse_pa:
        # Directed-graph fallback: P@A computed once from the bf16 copy in the wrapper.
        pool_pad = jnp.zeros((PB, n_pad), jnp.bfloat16).at[:B, :N].set(
            pool.astype(jnp.bfloat16))
        pa_p = jnp.dot(pool_pad, ahat_p,
                       preferred_element_type=jnp.float32).astype(jnp.bfloat16)
        in_specs.append(pl.BlockSpec((PB, T), lambda i, k: (0, i)))
        args.append(pa_p)

    flops = 2 * n_pad * n_pad * W + ni * 2 * T * PB * H_pad
    if agg_x_first:
        flops += ni * 2 * T * F_pad * H_pad
    bytes_accessed = (n_pad * n_pad * 2 + ni * n_pad * W * 2
                      + ni * PB * H_pad * 4 + (F_pad * H_pad + H_pad) * 4
                      + (0 if fuse_pa else PB * n_pad * 2))

    parts = pl.pallas_call(
        functools.partial(gcn_fused_kernel, agg_x_first=agg_x_first,
                          fuse_pa=fuse_pa, acc_cols=acc_cols),
        out_shape=jax.ShapeDtypeStruct((ni, PB, H_pad), jnp.float32),
        grid_spec=pltpu.PrefetchScalarGridSpec(
            num_scalar_prefetch=0,
            grid=(ni, nk),
            in_specs=in_specs,
            out_specs=pl.BlockSpec((1, PB, H_pad), lambda i, k: (i, 0, 0)),
            scratch_shapes=[pltpu.VMEM((T, W), jnp.float32)],
        ),
        compiler_params=pltpu.CompilerParams(
            dimension_semantics=("parallel", "arbitrary"),
            vmem_limit_bytes=48 * 1024 * 1024,
        ),
        cost_estimate=pl.CostEstimate(flops=flops, transcendentals=0,
                                      bytes_accessed=bytes_accessed),
    )(*args)

    # Finalize in plain jnp (few microseconds; avoids a second kernel launch):
    #   out = (sum_i parts[i])[:B, :H] @ W2 + b2.
    # The bias fold is exact because every mean-pool row sums to 1 (>=1 node per graph).
    pooled = jnp.sum(parts, axis=0)[:B, :H]
    return jnp.dot(pooled, w2.astype(jnp.float32)) + b2.reshape(1, -1).astype(jnp.float32)


# -----------------------------------------------------------------------------
# Plain-JAX glue: GCN-normalized adjacency (with self loops) and mean-pool matrix.
# -----------------------------------------------------------------------------
def build_gcn_norm_adj(edge_index, num_nodes, n_pad=None, out_dtype=jnp.float32):
    """D^-1/2 (A + I) D^-1/2, optionally emitted directly into a zero-padded
    (n_pad, n_pad) matrix of out_dtype (bf16 for the kernel stream) so the forward
    never makes a second materialized pad/cast copy."""
    src, dst = edge_index[0], edge_index[1]
    adj = jnp.zeros((num_nodes, num_nodes), jnp.float32)
    adj = adj.at[dst, src].add(1.0)                   # message j -> i
    adj = adj + jnp.eye(num_nodes, dtype=jnp.float32)
    deg = jnp.sum(adj, axis=1)
    dinv = jnp.where(deg > 0, jax.lax.rsqrt(deg), 0.0)
    a = (dinv[:, None] * adj * dinv[None, :]).astype(out_dtype)
    if n_pad is None or n_pad == num_nodes:
        return a
    return jnp.zeros((n_pad, n_pad), out_dtype).at[:num_nodes, :num_nodes].set(a)


def build_mean_pool(batch, num_graphs):
    onehot = (batch[None, :] == jnp.arange(num_graphs)[:, None]).astype(jnp.float32)
    counts = jnp.maximum(jnp.sum(onehot, axis=1, keepdims=True), 1.0)
    return onehot / counts


def glorot(key, shape):
    fan_in, fan_out = shape
    limit = jnp.sqrt(6.0 / (fan_in + fan_out))
    return jax.random.uniform(key, shape, jnp.float32, -limit, limit)


if __name__ == "__main__":
    num_nodes = 16
    num_features = 4
    hidden_channels = 32
    out_channels = 8
    num_graphs = 2

    key = jax.random.PRNGKey(0)
    kx, kw1, kw2 = jax.random.split(key, 3)

    x = jax.random.normal(kx, (num_nodes, num_features), jnp.float32)

    # deterministic edge_index: bidirectional ring within each graph
    half = num_nodes // num_graphs
    src_list, dst_list = [], []
    for g in range(num_graphs):
        base = g * half
        for i in range(half):
            a = base + i
            b = base + (i + 1) % half
            src_list += [a, b]
            dst_list += [b, a]
    edge_index = jnp.array([src_list, dst_list], dtype=jnp.int32)
    batch = jnp.repeat(jnp.arange(num_graphs, dtype=jnp.int32), half)

    # GCNConv parameters: glorot weights, zero biases (PyG defaults)
    w1 = glorot(kw1, (num_features, hidden_channels))
    b1 = jnp.zeros((1, hidden_channels), jnp.float32)
    w2 = glorot(kw2, (hidden_channels, out_channels))
    b2 = jnp.zeros((1, out_channels), jnp.float32)

    # Padded bf16 A_hat emitted directly by the builder (no extra pad/cast in forward).
    n_pad = padded_num_nodes(num_nodes)
    ahat_bf16 = build_gcn_norm_adj(edge_index, num_nodes, n_pad=n_pad,
                                   out_dtype=jnp.bfloat16)
    pool = build_mean_pool(batch, num_graphs)

    # Fused symmetric path (single A_hat read) and directed-graph fallback.
    out = jax.block_until_ready(
        gcn_encoder_forward(ahat_bf16, x, w1, b1, w2, b2, pool))
    out_nosym = jax.block_until_ready(
        gcn_encoder_forward(ahat_bf16, x, w1, b1, w2, b2, pool, assume_symmetric=False))

    # plain-JAX f32 reference of the original forward (eval-mode dropout = identity)
    ahat_f32 = build_gcn_norm_adj(edge_index, num_nodes, out_dtype=jnp.float32)
    h_ref = jnp.maximum(ahat_f32 @ (x @ w1) + b1, 0.0)
    z_ref = ahat_f32 @ (h_ref @ w2) + b2
    ref = pool @ z_ref

    assert out.shape == (num_graphs, out_channels)
    assert jnp.all(jnp.isfinite(out))
    assert jnp.allclose(out, ref, atol=5e-2, rtol=5e-2)
    assert jnp.allclose(out_nosym, ref, atol=5e-2, rtol=5e-2)
    print("KERNEL_OK")
</pallas_src>

<mosaic_0001>
module attributes {stable_mosaic.version = 11 : i64} {
  func.func @gcn_fused_kernel(%arg0: i32, %arg1: i32, %arg2: memref<512x512xbf16, #tpu.memory_space<vmem>>, %arg3: memref<512x256xbf16, #tpu.memory_space<vmem>>, %arg4: memref<128x128xf32, #tpu.memory_space<vmem>>, %arg5: memref<1x128xf32, #tpu.memory_space<vmem>>, %arg6: memref<1x128x128xf32, #tpu.memory_space<vmem>>, %arg7: memref<512x256xf32, #tpu.memory_space<vmem>>) attributes {dimension_semantics = [#tpu.dimension_semantics<parallel>, #tpu.dimension_semantics<arbitrary>], iteration_bounds = array<i64: 1, 1>, scalar_prefetch = 0 : i64, scratch_operands = 1 : i64, tpu.core_type = #tpu.core_type<tc>, window_params = [{transform_indices = @transform_0, window_bounds = array<i64: 512, 512>}, {transform_indices = @transform_1, window_bounds = array<i64: 512, 256>}, {pipeline_mode = #tpu.pipeline_mode<synchronous>, transform_indices = @transform_2, window_bounds = array<i64: 128, 128>}, {pipeline_mode = #tpu.pipeline_mode<synchronous>, transform_indices = @transform_3, window_bounds = array<i64: 1, 128>}, {transform_indices = @transform_4, window_bounds = array<i64: 1, 128, 128>}]} {
    %c0_i32 = arith.constant 0 : i32
    %0 = arith.cmpi eq, %arg1, %c0_i32 : i32
    %1 = arith.extui %0 : i1 to i32
    %c0_i32_0 = arith.constant 0 : i32
    %2 = arith.cmpi ne, %1, %c0_i32_0 : i32
    scf.if %2 {
      %cst_10 = arith.constant 0.000000e+00 : f32
      %12 = vector.broadcast %cst_10 : f32 to vector<512x256xf32>
      %c0_11 = arith.constant 0 : index
      %c0_12 = arith.constant 0 : index
      %13 = vector.load %arg7[%c0_11, %c0_12] : memref<512x256xf32, #tpu.memory_space<vmem>>, vector<512x256xf32>
      tpu.vector_store %arg7[%c0_11, %c0_12], %12 {strides = array<i32>} : memref<512x256xf32, #tpu.memory_space<vmem>>, vector<512x256xf32>,
    } else {
    }
    %c0 = arith.constant 0 : index
    %c0_1 = arith.constant 0 : index
    %3 = vector.load %arg7[%c0, %c0_1] : memref<512x256xf32, #tpu.memory_space<vmem>>, vector<512x256xf32>
    %c0_2 = arith.constant 0 : index
    %c0_3 = arith.constant 0 : index
    %4 = vector.load %arg2[%c0_2, %c0_3] : memref<512x512xbf16, #tpu.memory_space<vmem>>, vector<512x512xbf16>
    %c0_4 = arith.constant 0 : index
    %c0_5 = arith.constant 0 : index
    %5 = vector.load %arg3[%c0_4, %c0_5] : memref<512x256xbf16, #tpu.memory_space<vmem>>, vector<512x256xbf16>
    %cst = arith.constant dense<0.000000e+00> : vector<512x256xf32>
    %6 = tpu.matmul %4, %5, %cst {dimension_numbers = #tpu.dot_dimension_numbers<[1], [0], [0], [1], [0, 0, 1, 1], [], []>} : vector<512x512xbf16>, vector<512x256xbf16>, vector<512x256xf32> -> vector<512x256xf32>
    %7 = arith.addf %3, %6 : vector<512x256xf32>
    %c0_6 = arith.constant 0 : index
    %c0_7 = arith.constant 0 : index
    %8 = vector.load %arg7[%c0_6, %c0_7] : memref<512x256xf32, #tpu.memory_space<vmem>>, vector<512x256xf32>
    tpu.vector_store %arg7[%c0_6, %c0_7], %7 {strides = array<i32>} : memref<512x256xf32, #tpu.memory_space<vmem>>, vector<512x256xf32>,
    %c0_i32_8 = arith.constant 0 : i32
    %9 = arith.cmpi eq, %arg1, %c0_i32_8 : i32
    %10 = arith.extui %9 : i1 to i32
    %c0_i32_9 = arith.constant 0 : i32
    %11 = arith.cmpi ne, %10, %c0_i32_9 : i32
    scf.if %11 {
      %c0_10 = arith.constant 0 : index
      %c0_11 = arith.constant 0 : index
      %12 = vector.load %arg7[%c0_10, %c0_11] : memref<512x256xf32, #tpu.memory_space<vmem>>, vector<512x256xf32>
      %13 = vector.extract_strided_slice %12 {offsets = [0, 0], sizes = [512, 128], strides = [1, 1]} : vector<512x256xf32> to vector<512x128xf32>
      %c0_12 = arith.constant 0 : index
      %c0_13 = arith.constant 0 : index
      %14 = vector.load %arg5[%c0_12, %c0_13] : memref<1x128xf32, #tpu.memory_space<vmem>>, vector<1x128xf32>
      %15 = vector.broadcast %14 : vector<1x128xf32> to vector<512x128xf32>
      %16 = arith.addf %13, %15 : vector<512x128xf32>
      %cst_14 = arith.constant 0.000000e+00 : f32
      %17 = vector.broadcast %cst_14 : f32 to vector<512x128xf32>
      %18 = arith.maximumf %16, %17 : vector<512x128xf32>
      %19 = arith.truncf %18 : vector<512x128xf32> to vector<512x128xbf16>
      %20 = vector.extract_strided_slice %12 {offsets = [0, 128], sizes = [512, 128], strides = [1, 1]} : vector<512x256xf32> to vector<512x128xf32>
      %21 = tpu.transpose %20, [1, 0] : vector<512x128xf32> -> vector<128x512xf32>
      %22 = arith.truncf %21 : vector<128x512xf32> to vector<128x512xbf16>
      %cst_15 = arith.constant dense<0.000000e+00> : vector<128x128xf32>
      %23 = tpu.matmul %22, %19, %cst_15 {dimension_numbers = #tpu.dot_dimension_numbers<[1], [0], [0], [1], [0, 0, 1, 1], [], []>} : vector<128x512xbf16>, vector<512x128xbf16>, vector<128x128xf32> -> vector<128x128xf32>
      %c0_16 = arith.constant 0 : index
      %c0_17 = arith.constant 0 : index
      %c0_18 = arith.constant 0 : index
      %24 = vector.load %arg6[%c0_16, %c0_17, %c0_18] : memref<1x128x128xf32, #tpu.memory_space<vmem>>, vector<1x128x128xf32>
      %25 = vector.shape_cast %24 : vector<1x128x128xf32> to vector<128x128xf32>
      %26 = vector.shape_cast %23 : vector<128x128xf32> to vector<1x128x128xf32>
      tpu.vector_store %arg6[%c0_16, %c0_17, %c0_18], %26 {strides = array<i32>} : memref<1x128x128xf32, #tpu.memory_space<vmem>>, vector<1x128x128xf32>,
    } else {
    }
    return
  }
  func.func @transform_0(%arg0: i32, %arg1: i32) -> (i32, i32) {
    %c0_i32 = arith.constant 0 : i32
    return %arg0, %arg1 : i32, i32
  }
  func.func @transform_1(%arg0: i32, %arg1: i32) -> (i32, i32) {
    %c0_i32 = arith.constant 0 : i32
    %c0_i32_0 = arith.constant 0 : i32
    return %arg1, %c0_i32 : i32, i32
  }
  func.func @transform_2(%arg0: i32, %arg1: i32) -> (i32, i32) {
    %c0_i32 = arith.constant 0 : i32
    %c0_i32_0 = arith.constant 0 : i32
    %c0_i32_1 = arith.constant 0 : i32
    return %c0_i32, %c0_i32_0 : i32, i32
  }
  func.func @transform_3(%arg0: i32, %arg1: i32) -> (i32, i32) {
    %c0_i32 = arith.constant 0 : i32
    %c0_i32_0 = arith.constant 0 : i32
    %c0_i32_1 = arith.constant 0 : i32
    return %c0_i32, %c0_i32_0 : i32, i32
  }
  func.func @transform_4(%arg0: i32, %arg1: i32) -> (i32, i32, i32) {
    %c0_i32 = arith.constant 0 : i32
    %c0_i32_0 = arith.constant 0 : i32
    %c0_i32_1 = arith.constant 0 : i32
    return %arg0, %c0_i32, %c0_i32_0 : i32, i32, i32
  }
}

</mosaic_0001>

<llo_original>
// kernel: tpu_custom_call.1
$region0: #{tpu_custom_call.1}
  #allocation0 [shape = 'u32[]', space=smem, size = 0x4, offset = 0x4, fixed_abs, tag = 'smem constant byte address 0x4 - core index']
  #allocation1 [shape = 'u32[72,128]{1,0:T(1,128)}', space=vmem, size = 0x9000, scoped, tag = 'internal scratch']
  #allocation2 [shape = 'f32[512,256]{1,0:T(8,128)}', space=vmem, size = 0x80000, scoped, tag = 'scratch operand']
  %s0 = inlined_call_operand.hbm [shape: bf16[512,512], index: 0, kind: input, shape index: {}]
  %s1 = inlined_call_operand.hbm [shape: bf16[512,256], index: 1, kind: input, shape index: {}]
  %s2 = inlined_call_operand.hbm [shape: f32[128,128], index: 2, kind: input, shape index: {}]
  %s3 = inlined_call_operand.vmem [shape: f32[1,128], index: 3, kind: input, shape index: {}]
  %s4 = inlined_call_operand.hbm [shape: f32[1,128,128], index: 4, kind: output, shape index: {}]
  %s5 = sld [smem:[#allocation0]]
  $region46: #{tpu_custom_call.1} parent=0
    _
  %s7 = ssub.s32 1, %s5
  %s8 = scalar_select 0, %s7, %s5
  $region1: #{tpu_custom_call.1} parent=0
    #allocation3 [shape = 'u8[524288]{0}', space=vmem, size = 0x80000, scoped, tag = 'input window, operand 0, single buffered']
    #allocation4 [shape = 's32[1]{0}', space=sflag, size = 0x4, scoped, tag = 'scoped memory for tpu_custom_call.1']
    #allocation5 [shape = 's32[1]{0}', space=sflag, size = 0x4, scoped, tag = 'scoped memory for tpu_custom_call.1']
    #allocation6 [shape = 'u8[262144]{0}', space=vmem, size = 0x40000, scoped, tag = 'input window, operand 1, single buffered']
    #allocation7 [shape = 's32[1]{0}', space=sflag, size = 0x4, scoped, tag = 'scoped memory for tpu_custom_call.1']
    #allocation8 [shape = 'u8[65536]{0}', space=vmem, size = 0x10000, scoped, tag = 'input window, operand 2, single buffered']
    #allocation9 [shape = 'u8[65536]{0}', space=vmem, size = 0x10000, scoped, tag = 'output window, operand 0, single buffered']
    %9 = vsyncpa [#allocation4], 0
    %10 = vsyncpa [#allocation7], 0
    %11 = vsyncpa [#allocation5], 0
    // Predicated region
    $region2: #{tpu_custom_call.1} parent=1 // pred_check
      _
    $region3: #{tpu_custom_call.1} parent=1 // pred_check_branch
      %13 = sbr.rel (0) target = $region5
    $region4: #{tpu_custom_call.1} parent=1 // pred_region
      %15 = vsyncadd [#allocation4], 0
      %s16 = sshll.u32 %s0, 4
      %s17 = int_to_ptr.hbm [resolvable:$true] %s16
      %s18 = sshll.u32 [#allocation3], 4
      %s19 = int_to_ptr.vmem [resolvable:$true] %s18
      %24 = dma.hbm_to_vmem [thread:$0]  %s17, 16384, %s19, [#allocation4], 256, 256, 16
    $region5: #{tpu_custom_call.1} parent=1 // pred_fallthru
      _
    // Predicated region
    $region6: #{tpu_custom_call.1} parent=1 // pred_check
      _
    $region7: #{tpu_custom_call.1} parent=1 // pred_check_branch
      %26 = sbr.rel (0) target = $region9
    $region8: #{tpu_custom_call.1} parent=1 // pred_region
      %28 = vsyncadd [#allocation7], 0
      %s29 = sshll.u32 %s1, 4
      %s30 = int_to_ptr.hbm [resolvable:$true] %s29
      %s31 = sshll.u32 [#allocation6], 4
      %s32 = int_to_ptr.vmem [resolvable:$true] %s31
      %37 = dma.hbm_to_vmem [thread:$0]  %s30, 8192, %s32, [#allocation7], 128, 128, 8
    $region9: #{tpu_custom_call.1} parent=1 // pred_fallthru
      _
    // Predicated region
    $region10: #{tpu_custom_call.1} parent=1 // pred_check
      _
    $region11: #{tpu_custom_call.1} parent=1 // pred_check_branch
      %39 = sbr.rel (0) target = $region13
    $region12: #{tpu_custom_call.1} parent=1 // pred_region
      %41 = vsyncadd [#allocation7], 0
      %s42 = sshll.u32 %s2, 4
      %s43 = int_to_ptr.hbm [resolvable:$true] %s42
      %s44 = sshll.u32 [#allocation8], 4
      %s45 = int_to_ptr.vmem [resolvable:$true] %s44
      %50 = dma.hbm_to_vmem [thread:$0]  %s43, 2048, %s45, [#allocation7], 128, 128, 8
    $region13: #{tpu_custom_call.1} parent=1 // pred_fallthru
      _
    // Predicated region
    $region14: #{tpu_custom_call.1} parent=1 // pred_check
      _
    $region15: #{tpu_custom_call.1} parent=1 // pred_check_branch
      %52 = sbr.rel (0) target = $region17
    $region16: #{tpu_custom_call.1} parent=1 // pred_region
      _
    $region17: #{tpu_custom_call.1} parent=1 // pred_fallthru
      _
    // Predicated region
    $region18: #{tpu_custom_call.1} parent=1 // pred_check
      _
    $region19: #{tpu_custom_call.1} parent=1 // pred_check_branch
      %54 = sbr.rel (0) target = $region21
    $region20: #{tpu_custom_call.1} parent=1 // pred_region
      %56 = dma.done [#allocation4], 16384
    $region21: #{tpu_custom_call.1} parent=1 // pred_fallthru
      _
    // Predicated region
    $region22: #{tpu_custom_call.1} parent=1 // pred_check
      _
    $region23: #{tpu_custom_call.1} parent=1 // pred_check_branch
      %58 = sbr.rel (0) target = $region25
    $region24: #{tpu_custom_call.1} parent=1 // pred_region
      %60 = dma.done [#allocation7], 8192
    $region25: #{tpu_custom_call.1} parent=1 // pred_fallthru
      _
    // Predicated region
    $region26: #{tpu_custom_call.1} parent=1 // pred_check
      _
    $region27: #{tpu_custom_call.1} parent=1 // pred_check_branch
      %62 = sbr.rel (0) target = $region29
    $region28: #{tpu_custom_call.1} parent=1 // pred_region
      %64 = dma.done [#allocation7], 2048
    $region29: #{tpu_custom_call.1} parent=1 // pred_fallthru
      _
    %p65 = scmp.eq.s32.totalorder 0, 0
    // Predicated region
    $region30: #{tpu_custom_call.1} parent=1 // pred_check
      %p66 = pneg %p65
    $region31: #{tpu_custom_call.1} parent=1 // pred_check_branch
      %68 = sbr.rel (%p66) target = $region33
    $region32: #{tpu_custom_call.1} parent=1 // pred_region
      %69 = vst [vmem:[#allocation2] sm:$0xff] 0.0
      %70 = vst [vmem:[#allocation2 + $0x8] sm:$0xff] 0.0
      %71 = vst [vmem:[#allocation2 + $0x10] sm:$0xff] 0.0
      %72 = vst [vmem:[#allocation2 + $0x18] sm:$0xff] 0.0
      %73 = vst [vmem:[#allocation2 + $0x20] sm:$0xff] 0.0
      %74 = vst [vmem:[#allocation2 + $0x28] sm:$0xff] 0.0
      %75 = vst [vmem:[#allocation2 + $0x30] sm:$0xff] 0.0
      %76 = vst [vmem:[#allocation2 + $0x38] sm:$0xff] 0.0
      %77 = vst [vmem:[#allocation2 + $0x40] sm:$0xff] 0.0
      %78 = vst [vmem:[#allocation2 + $0x48] sm:$0xff] 0.0
      %79 = vst [vmem:[#allocation2 + $0x50] sm:$0xff] 0.0
      %80 = vst [vmem:[#allocation2 + $0x58] sm:$0xff] 0.0
      %81 = vst [vmem:[#allocation2 + $0x60] sm:$0xff] 0.0
      %82 = vst [vmem:[#allocation2 + $0x68] sm:$0xff] 0.0
      %83 = vst [vmem:[#allocation2 + $0x70] sm:$0xff] 0.0
      %84 = vst [vmem:[#allocation2 + $0x78] sm:$0xff] 0.0
      %85 = vst [vmem:[#allocation2 + $0x80] sm:$0xff] 0.0
      %86 = vst [vmem:[#allocation2 + $0x88] sm:$0xff] 0.0
      %87 = vst [vmem:[#allocation2 + $0x90] sm:$0xff] 0.0
      %88 = vst [vmem:[#allocation2 + $0x98] sm:$0xff] 0.0
      %89 = vst [vmem:[#allocation2 + $0xa0] sm:$0xff] 0.0
      %90 = vst [vmem:[#allocation2 + $0xa8] sm:$0xff] 0.0
      %91 = vst [vmem:[#allocation2 + $0xb0] sm:$0xff] 0.0
      %92 = vst [vmem:[#allocation2 + $0xb8] sm:$0xff] 0.0
      %93 = vst [vmem:[#allocation2 + $0xc0] sm:$0xff] 0.0
      %94 = vst [vmem:[#allocation2 + $0xc8] sm:$0xff] 0.0
      %95 = vst [vmem:[#allocation2 + $0xd0] sm:$0xff] 0.0
      %96 = vst [vmem:[#allocation2 + $0xd8] sm:$0xff] 0.0
      %97 = vst [vmem:[#allocation2 + $0xe0] sm:$0xff] 0.0
      %98 = vst [vmem:[#allocation2 + $0xe8] sm:$0xff] 0.0
      %99 = vst [vmem:[#allocation2 + $0xf0] sm:$0xff] 0.0
      %100 = vst [vmem:[#allocation2 + $0xf8] sm:$0xff] 0.0
      %101 = vst [vmem:[#allocation2 + $0x100] sm:$0xff] 0.0
      %102 = vst [vmem:[#allocation2 + $0x108] sm:$0xff] 0.0
      %103 = vst [vmem:[#allocation2 + $0x110] sm:$0xff] 0.0
      %104 = vst [vmem:[#allocation2 + $0x118] sm:$0xff] 0.0
      %105 = vst [vmem:[#allocation2 + $0x120] sm:$0xff] 0.0
      %106 = vst [vmem:[#allocation2 + $0x128] sm:$0xff] 0.0
      %107 = vst [vmem:[#allocation2 + $0x130] sm:$0xff] 0.0
      %108 = vst [vmem:[#allocation2 + $0x138] sm:$0xff] 0.0
      %109 = vst [vmem:[#allocation2 + $0x140] sm:$0xff] 0.0
      %110 = vst [vmem:[#allocation2 + $0x148] sm:$0xff] 0.0
      %111 = vst [vmem:[#allocation2 + $0x150] sm:$0xff] 0.0
      %112 = vst [vmem:[#allocation2 + $0x158] sm:$0xff] 0.0
      %113 = vst [vmem:[#allocation2 + $0x160] sm:$0xff] 0.0
      %114 = vst [vmem:[#allocation2 + $0x168] sm:$0xff] 0.0
      %115 = vst [vmem:[#allocation2 + $0x170] sm:$0xff] 0.0
      %116 = vst [vmem:[#allocation2 + $0x178] sm:$0xff] 0.0
      %117 = vst [vmem:[#allocation2 + $0x180] sm:$0xff] 0.0
      %118 = vst [vmem:[#allocation2 + $0x188] sm:$0xff] 0.0
      %119 = vst [vmem:[#allocation2 + $0x190] sm:$0xff] 0.0
      %120 = vst [vmem:[#allocation2 + $0x198] sm:$0xff] 0.0
      %121 = vst [vmem:[#allocation2 + $0x1a0] sm:$0xff] 0.0
      %122 = vst [vmem:[#allocation2 + $0x1a8] sm:$0xff] 0.0
      %123 = vst [vmem:[#allocation2 + $0x1b0] sm:$0xff] 0.0
      %124 = vst [vmem:[#allocation2 + $0x1b8] sm:$0xff] 0.0
      %125 = vst [vmem:[#allocation2 + $0x1c0] sm:$0xff] 0.0
      %126 = vst [vmem:[#allocation2 + $0x1c8] sm:$0xff] 0.0
      %127 = vst [vmem:[#allocation2 + $0x1d0] sm:$0xff] 0.0
      %128 = vst [vmem:[#allocation2 + $0x1d8] sm:$0xff] 0.0
      %129 = vst [vmem:[#allocation2 + $0x1e0] sm:$0xff] 0.0
      %130 = vst [vmem:[#allocation2 + $0x1e8] sm:$0xff] 0.0
      %131 = vst [vmem:[#allocation2 + $0x1f0] sm:$0xff] 0.0
      %132 = vst [vmem:[#allocation2 + $0x1f8] sm:$0xff] 0.0
      %133 = vst [vmem:[#allocation2 + $0x200] sm:$0xff] 0.0
      %134 = vst [vmem:[#allocation2 + $0x208] sm:$0xff] 0.0
      %135 = vst [vmem:[#allocation2 + $0x210] sm:$0xff] 0.0
      %136 = vst [vmem:[#allocation2 + $0x218] sm:$0xff] 0.0
      %137 = vst [vmem:[#allocation2 + $0x220] sm:$0xff] 0.0
      %138 = vst [vmem:[#allocation2 + $0x228] sm:$0xff] 0.0
      %139 = vst [vmem:[#allocation2 + $0x230] sm:$0xff] 0.0
      %140 = vst [vmem:[#allocation2 + $0x238] sm:$0xff] 0.0
      %141 = vst [vmem:[#allocation2 + $0x240] sm:$0xff] 0.0
      %142 = vst [vmem:[#allocation2 + $0x248] sm:$0xff] 0.0
      %143 = vst [vmem:[#allocation2 + $0x250] sm:$0xff] 0.0
      %144 = vst [vmem:[#allocation2 + $0x258] sm:$0xff] 0.0
      %145 = vst [vmem:[#allocation2 + $0x260] sm:$0xff] 0.0
      %146 = vst [vmem:[#allocation2 + $0x268] sm:$0xff] 0.0
      %147 = vst [vmem:[#allocation2 + $0x270] sm:$0xff] 0.0
      %148 = vst [vmem:[#allocation2 + $0x278] sm:$0xff] 0.0
      %149 = vst [vmem:[#allocation2 + $0x280] sm:$0xff] 0.0
      %150 = vst [vmem:[#allocation2 + $0x288] sm:$0xff] 0.0
      %151 = vst [vmem:[#allocation2 + $0x290] sm:$0xff] 0.0
      %152 = vst [vmem:[#allocation2 + $0x298] sm:$0xff] 0.0
      %153 = vst [vmem:[#allocation2 + $0x2a0] sm:$0xff] 0.0
      %154 = vst [vmem:[#allocation2 + $0x2a8] sm:$0xff] 0.0
      %155 = vst [vmem:[#allocation2 + $0x2b0] sm:$0xff] 0.0
      %156 = vst [vmem:[#allocation2 + $0x2b8] sm:$0xff] 0.0
      %157 = vst [vmem:[#allocation2 + $0x2c0] sm:$0xff] 0.0
      %158 = vst [vmem:[#allocation2 + $0x2c8] sm:$0xff] 0.0
      %159 = vst [vmem:[#allocation2 + $0x2d0] sm:$0xff] 0.0
      %160 = vst [vmem:[#allocation2 + $0x2d8] sm:$0xff] 0.0
      %161 = vst [vmem:[#allocation2 + $0x2e0] sm:$0xff] 0.0
      %162 = vst [vmem:[#allocation2 + $0x2e8] sm:$0xff] 0.0
      %163 = vst [vmem:[#allocation2 + $0x2f0] sm:$0xff] 0.0
      %164 = vst [vmem:[#allocation2 + $0x2f8] sm:$0xff] 0.0
      %165 = vst [vmem:[#allocation2 + $0x300] sm:$0xff] 0.0
      %166 = vst [vmem:[#allocation2 + $0x308] sm:$0xff] 0.0
      %167 = vst [vmem:[#allocation2 + $0x310] sm:$0xff] 0.0
      %168 = vst [vmem:[#allocation2 + $0x318] sm:$0xff] 0.0
      %169 = vst [vmem:[#allocation2 + $0x320] sm:$0xff] 0.0
      %170 = vst [vmem:[#allocation2 + $0x328] sm:$0xff] 0.0
      %171 = vst [vmem:[#allocation2 + $0x330] sm:$0xff] 0.0
      %172 = vst [vmem:[#allocation2 + $0x338] sm:$0xff] 0.0
      %173 = vst [vmem:[#allocation2 + $0x340] sm:$0xff] 0.0
      %174 = vst [vmem:[#allocation2 + $0x348] sm:$0xff] 0.0
      %175 = vst [vmem:[#allocation2 + $0x350] sm:$0xff] 0.0
      %176 = vst [vmem:[#allocation2 + $0x358] sm:$0xff] 0.0
      %177 = vst [vmem:[#allocation2 + $0x360] sm:$0xff] 0.0
      %178 = vst [vmem:[#allocation2 + $0x368] sm:$0xff] 0.0
      %179 = vst [vmem:[#allocation2 + $0x370] sm:$0xff] 0.0
      %180 = vst [vmem:[#allocation2 + $0x378] sm:$0xff] 0.0
      %181 = vst [vmem:[#allocation2 + $0x380] sm:$0xff] 0.0
      %182 = vst [vmem:[#allocation2 + $0x388] sm:$0xff] 0.0
      %183 = vst [vmem:[#allocation2 + $0x390] sm:$0xff] 0.0
      %184 = vst [vmem:[#allocation2 + $0x398] sm:$0xff] 0.0
      %185 = vst [vmem:[#allocation2 + $0x3a0] sm:$0xff] 0.0
      %186 = vst [vmem:[#allocation2 + $0x3a8] sm:$0xff] 0.0
      %187 = vst [vmem:[#allocation2 + $0x3b0] sm:$0xff] 0.0
      %188 = vst [vmem:[#allocation2 + $0x3b8] sm:$0xff] 0.0
      %189 = vst [vmem:[#allocation2 + $0x3c0] sm:$0xff] 0.0
      %190 = vst [vmem:[#allocation2 + $0x3c8] sm:$0xff] 0.0
      %191 = vst [vmem:[#allocation2 + $0x3d0] sm:$0xff] 0.0
      %192 = vst [vmem:[#allocation2 + $0x3d8] sm:$0xff] 0.0
      %193 = vst [vmem:[#allocation2 + $0x3e0] sm:$0xff] 0.0
      %194 = vst [vmem:[#allocation2 + $0x3e8] sm:$0xff] 0.0
      %195 = vst [vmem:[#allocation2 + $0x3f0] sm:$0xff] 0.0
      %196 = vst [vmem:[#allocation2 + $0x3f8] sm:$0xff] 0.0
    $region33: #{tpu_custom_call.1} parent=1 // pred_fallthru
      _
    %v197 = vld [vmem:[#allocation2] sm:$0xff]
    %v198 = vld [vmem:[#allocation2 + $0x8] sm:$0xff]
    %v199 = vld [vmem:[#allocation2 + $0x10] sm:$0xff]
    %v200 = vld [vmem:[#allocation2 + $0x18] sm:$0xff]
    %v201 = vld [vmem:[#allocation2 + $0x20] sm:$0xff]
    %v202 = vld [vmem:[#allocation2 + $0x28] sm:$0xff]
    %v203 = vld [vmem:[#allocation2 + $0x30] sm:$0xff]
    %v204 = vld [vmem:[#allocation2 + $0x38] sm:$0xff]
    %v205 = vld [vmem:[#allocation2 + $0x40] sm:$0xff]
    %v206 = vld [vmem:[#allocation2 + $0x48] sm:$0xff]
    %v207 = vld [vmem:[#allocation2 + $0x50] sm:$0xff]
    %v208 = vld [vmem:[#allocation2 + $0x58] sm:$0xff]
    %v209 = vld [vmem:[#allocation2 + $0x60] sm:$0xff]
    %v210 = vld [vmem:[#allocation2 + $0x68] sm:$0xff]
    %v211 = vld [vmem:[#allocation2 + $0x70] sm:$0xff]
    %v212 = vld [vmem:[#allocation2 + $0x78] sm:$0xff]
    %v213 = vld [vmem:[#allocation2 + $0x80] sm:$0xff]
    %v214 = vld [vmem:[#allocation2 + $0x88] sm:$0xff]
    %v215 = vld [vmem:[#allocation2 + $0x90] sm:$0xff]
    %v216 = vld [vmem:[#allocation2 + $0x98] sm:$0xff]
    %v217 = vld [vmem:[#allocation2 + $0xa0] sm:$0xff]
    %v218 = vld [vmem:[#allocation2 + $0xa8] sm:$0xff]
    %v219 = vld [vmem:[#allocation2 + $0xb0] sm:$0xff]
    %v220 = vld [vmem:[#allocation2 + $0xb8] sm:$0xff]
    %v221 = vld [vmem:[#allocation2 + $0xc0] sm:$0xff]
    %v222 = vld [vmem:[#allocation2 + $0xc8] sm:$0xff]
    %v223 = vld [vmem:[#allocation2 + $0xd0] sm:$0xff]
    %v224 = vld [vmem:[#allocation2 + $0xd8] sm:$0xff]
    %v225 = vld [vmem:[#allocation2 + $0xe0] sm:$0xff]
    %v226 = vld [vmem:[#allocation2 + $0xe8] sm:$0xff]
    %v227 = vld [vmem:[#allocation2 + $0xf0] sm:$0xff]
    %v228 = vld [vmem:[#allocation2 + $0xf8] sm:$0xff]
    %v229 = vld [vmem:[#allocation2 + $0x100] sm:$0xff]
    %v230 = vld [vmem:[#allocation2 + $0x108] sm:$0xff]
    %v231 = vld [vmem:[#allocation2 + $0x110] sm:$0xff]
    %v232 = vld [vmem:[#allocation2 + $0x118] sm:$0xff]
    %v233 = vld [vmem:[#allocation2 + $0x120] sm:$0xff]
    %v234 = vld [vmem:[#allocation2 + $0x128] sm:$0xff]
    %v235 = vld [vmem:[#allocation2 + $0x130] sm:$0xff]
    %v236 = vld [vmem:[#allocation2 + $0x138] sm:$0xff]
    %v237 = vld [vmem:[#allocation2 + $0x140] sm:$0xff]
    %v238 = vld [vmem:[#allocation2 + $0x148] sm:$0xff]
    %v239 = vld [vmem:[#allocation2 + $0x150] sm:$0xff]
    %v240 = vld [vmem:[#allocation2 + $0x158] sm:$0xff]
    %v241 = vld [vmem:[#allocation2 + $0x160] sm:$0xff]
    %v242 = vld [vmem:[#allocation2 + $0x168] sm:$0xff]
    %v243 = vld [vmem:[#allocation2 + $0x170] sm:$0xff]
    %v244 = vld [vmem:[#allocation2 + $0x178] sm:$0xff]
    %v245 = vld [vmem:[#allocation2 + $0x180] sm:$0xff]
    %v246 = vld [vmem:[#allocation2 + $0x188] sm:$0xff]
    %v247 = vld [vmem:[#allocation2 + $0x190] sm:$0xff]
    %v248 = vld [vmem:[#allocation2 + $0x198] sm:$0xff]
    %v249 = vld [vmem:[#allocation2 + $0x1a0] sm:$0xff]
    %v250 = vld [vmem:[#allocation2 + $0x1a8] sm:$0xff]
    %v251 = vld [vmem:[#allocation2 + $0x1b0] sm:$0xff]
    %v252 = vld [vmem:[#allocation2 + $0x1b8] sm:$0xff]
    %v253 = vld [vmem:[#allocation2 + $0x1c0] sm:$0xff]
    %v254 = vld [vmem:[#allocation2 + $0x1c8] sm:$0xff]
    %v255 = vld [vmem:[#allocation2 + $0x1d0] sm:$0xff]
    %v256 = vld [vmem:[#allocation2 + $0x1d8] sm:$0xff]
    %v257 = vld [vmem:[#allocation2 + $0x1e0] sm:$0xff]
    %v258 = vld [vmem:[#allocation2 + $0x1e8] sm:$0xff]
    %v259 = vld [vmem:[#allocation2 + $0x1f0] sm:$0xff]
    %v260 = vld [vmem:[#allocation2 + $0x1f8] sm:$0xff]
    %v261 = vld [vmem:[#allocation2 + $0x200] sm:$0xff]
    %v262 = vld [vmem:[#allocation2 + $0x208] sm:$0xff]
    %v263 = vld [vmem:[#allocation2 + $0x210] sm:$0xff]
    %v264 = vld [vmem:[#allocation2 + $0x218] sm:$0xff]
    %v265 = vld [vmem:[#allocation2 + $0x220] sm:$0xff]
    %v266 = vld [vmem:[#allocation2 + $0x228] sm:$0xff]
    %v267 = vld [vmem:[#allocation2 + $0x230] sm:$0xff]
    %v268 = vld [vmem:[#allocation2 + $0x238] sm:$0xff]
    %v269 = vld [vmem:[#allocation2 + $0x240] sm:$0xff]
    %v270 = vld [vmem:[#allocation2 + $0x248] sm:$0xff]
    %v271 = vld [vmem:[#allocation2 + $0x250] sm:$0xff]
    %v272 = vld [vmem:[#allocation2 + $0x258] sm:$0xff]
    %v273 = vld [vmem:[#allocation2 + $0x260] sm:$0xff]
    %v274 = vld [vmem:[#allocation2 + $0x268] sm:$0xff]
    %v275 = vld [vmem:[#allocation2 + $0x270] sm:$0xff]
    %v276 = vld [vmem:[#allocation2 + $0x278] sm:$0xff]
    %v277 = vld [vmem:[#allocation2 + $0x280] sm:$0xff]
    %v278 = vld [vmem:[#allocation2 + $0x288] sm:$0xff]
    %v279 = vld [vmem:[#allocation2 + $0x290] sm:$0xff]
    %v280 = vld [vmem:[#allocation2 + $0x298] sm:$0xff]
    %v281 = vld [vmem:[#allocation2 + $0x2a0] sm:$0xff]
    %v282 = vld [vmem:[#allocation2 + $0x2a8] sm:$0xff]
    %v283 = vld [vmem:[#allocation2 + $0x2b0] sm:$0xff]
    %v284 = vld [vmem:[#allocation2 + $0x2b8] sm:$0xff]
    %v285 = vld [vmem:[#allocation2 + $0x2c0] sm:$0xff]
    %v286 = vld [vmem:[#allocation2 + $0x2c8] sm:$0xff]
    %v287 = vld [vmem:[#allocation2 + $0x2d0] sm:$0xff]
    %v288 = vld [vmem:[#allocation2 + $0x2d8] sm:$0xff]
    %v289 = vld [vmem:[#allocation2 + $0x2e0] sm:$0xff]
    %v290 = vld [vmem:[#allocation2 + $0x2e8] sm:$0xff]
    %v291 = vld [vmem:[#allocation2 + $0x2f0] sm:$0xff]
    %v292 = vld [vmem:[#allocation2 + $0x2f8] sm:$0xff]
    %v293 = vld [vmem:[#allocation2 + $0x300] sm:$0xff]
    %v294 = vld [vmem:[#allocation2 + $0x308] sm:$0xff]
    %v295 = vld [vmem:[#allocation2 + $0x310] sm:$0xff]
    %v296 = vld [vmem:[#allocation2 + $0x318] sm:$0xff]
    %v297 = vld [vmem:[#allocation2 + $0x320] sm:$0xff]
    %v298 = vld [vmem:[#allocation2 + $0x328] sm:$0xff]
    %v299 = vld [vmem:[#allocation2 + $0x330] sm:$0xff]
    %v300 = vld [vmem:[#allocation2 + $0x338] sm:$0xff]
    %v301 = vld [vmem:[#allocation2 + $0x340] sm:$0xff]
    %v302 = vld [vmem:[#allocation2 + $0x348] sm:$0xff]
    %v303 = vld [vmem:[#allocation2 + $0x350] sm:$0xff]
    %v304 = vld [vmem:[#allocation2 + $0x358] sm:$0xff]
    %v305 = vld [vmem:[#allocation2 + $0x360] sm:$0xff]
    %v306 = vld [vmem:[#allocation2 + $0x368] sm:$0xff]
    %v307 = vld [vmem:[#allocation2 + $0x370] sm:$0xff]
    %v308 = vld [vmem:[#allocation2 + $0x378] sm:$0xff]
    %v309 = vld [vmem:[#allocation2 + $0x380] sm:$0xff]
    %v310 = vld [vmem:[#allocation2 + $0x388] sm:$0xff]
    %v311 = vld [vmem:[#allocation2 + $0x390] sm:$0xff]
    %v312 = vld [vmem:[#allocation2 + $0x398] sm:$0xff]
    %v313 = vld [vmem:[#allocation2 + $0x3a0] sm:$0xff]
    %v314 = vld [vmem:[#allocation2 + $0x3a8] sm:$0xff]
    %v315 = vld [vmem:[#allocation2 + $0x3b0] sm:$0xff]
    %v316 = vld [vmem:[#allocation2 + $0x3b8] sm:$0xff]
    %v317 = vld [vmem:[#allocation2 + $0x3c0] sm:$0xff]
    %v318 = vld [vmem:[#allocation2 + $0x3c8] sm:$0xff]
    %v319 = vld [vmem:[#allocation2 + $0x3d0] sm:$0xff]
    %v320 = vld [vmem:[#allocation2 + $0x3d8] sm:$0xff]
    %v321 = vld [vmem:[#allocation2 + $0x3e0] sm:$0xff]
    %v322 = vld [vmem:[#allocation2 + $0x3e8] sm:$0xff]
    %v323 = vld [vmem:[#allocation2 + $0x3f0] sm:$0xff]
    %v324 = vld [vmem:[#allocation2 + $0x3f8] sm:$0xff]
    %v325 = vld [vmem:[#allocation3] sm:$0xff]
    %v326 = vld [vmem:[#allocation3 + $0x8] sm:$0xff]
    %v327 = vld [vmem:[#allocation3 + $0x10] sm:$0xff]
    %v328 = vld [vmem:[#allocation3 + $0x18] sm:$0xff]
    %v329 = vld [vmem:[#allocation3 + $0x20] sm:$0xff]
    %v330 = vld [vmem:[#allocation3 + $0x28] sm:$0xff]
    %v331 = vld [vmem:[#allocation3 + $0x30] sm:$0xff]
    %v332 = vld [vmem:[#allocation3 + $0x38] sm:$0xff]
    %v333 = vld [vmem:[#allocation3 + $0x40] sm:$0xff]
    %v334 = vld [vmem:[#allocation3 + $0x48] sm:$0xff]
    %v335 = vld [vmem:[#allocation3 + $0x50] sm:$0xff]
    %v336 = vld [vmem:[#allocation3 + $0x58] sm:$0xff]
    %v337 = vld [vmem:[#allocation3 + $0x60] sm:$0xff]
    %v338 = vld [vmem:[#allocation3 + $0x68] sm:$0xff]
    %v339 = vld [vmem:[#allocation3 + $0x70] sm:$0xff]
    %v340 = vld [vmem:[#allocation3 + $0x78] sm:$0xff]
    %v341 = vld [vmem:[#allocation3 + $0x80] sm:$0xff]
    %v342 = vld [vmem:[#allocation3 + $0x88] sm:$0xff]
    %v343 = vld [vmem:[#allocation3 + $0x90] sm:$0xff]
    %v344 = vld [vmem:[#allocation3 + $0x98] sm:$0xff]
    %v345 = vld [vmem:[#allocation3 + $0xa0] sm:$0xff]
    %v346 = vld [vmem:[#allocation3 + $0xa8] sm:$0xff]
    %v347 = vld [vmem:[#allocation3 + $0xb0] sm:$0xff]
    %v348 = vld [vmem:[#allocation3 + $0xb8] sm:$0xff]
    %v349 = vld [vmem:[#allocation3 + $0xc0] sm:$0xff]
    %v350 = vld [vmem:[#allocation3 + $0xc8] sm:$0xff]
    %v351 = vld [vmem:[#allocation3 + $0xd0] sm:$0xff]
    %v352 = vld [vmem:[#allocation3 + $0xd8] sm:$0xff]
    %v353 = vld [vmem:[#allocation3 + $0xe0] sm:$0xff]
    %v354 = vld [vmem:[#allocation3 + $0xe8] sm:$0xff]
    %v355 = vld [vmem:[#allocation3 + $0xf0] sm:$0xff]
    %v356 = vld [vmem:[#allocation3 + $0xf8] sm:$0xff]
    %v357 = vld [vmem:[#allocation3 + $0x100] sm:$0xff]
    %v358 = vld [vmem:[#allocation3 + $0x108] sm:$0xff]
    %v359 = vld [vmem:[#allocation3 + $0x110] sm:$0xff]
    %v360 = vld [vmem:[#allocation3 + $0x118] sm:$0xff]
    %v361 = vld [vmem:[#allocation3 + $0x120] sm:$0xff]
    %v362 = vld [vmem:[#allocation3 + $0x128] sm:$0xff]
    %v363 = vld [vmem:[#allocation3 + $0x130] sm:$0xff]
    %v364 = vld [vmem:[#allocation3 + $0x138] sm:$0xff]
    %v365 = vld [vmem:[#allocation3 + $0x140] sm:$0xff]
    %v366 = vld [vmem:[#allocation3 + $0x148] sm:$0xff]
    %v367 = vld [vmem:[#allocation3 + $0x150] sm:$0xff]
    %v368 = vld [vmem:[#allocation3 + $0x158] sm:$0xff]
    %v369 = vld [vmem:[#allocation3 + $0x160] sm:$0xff]
    %v370 = vld [vmem:[#allocation3 + $0x168] sm:$0xff]
    %v371 = vld [vmem:[#allocation3 + $0x170] sm:$0xff]
    %v372 = vld [vmem:[#allocation3 + $0x178] sm:$0xff]
    %v373 = vld [vmem:[#allocation3 + $0x180] sm:$0xff]
    %v374 = vld [vmem:[#allocation3 + $0x188] sm:$0xff]
    %v375 = vld [vmem:[#allocation3 + $0x190] sm:$0xff]
    %v376 = vld [vmem:[#allocation3 + $0x198] sm:$0xff]
    %v377 = vld [vmem:[#allocation3 + $0x1a0] sm:$0xff]
    %v378 = vld [vmem:[#allocation3 + $0x1a8] sm:$0xff]
    %v379 = vld [vmem:[#allocation3 + $0x1b0] sm:$0xff]
    %v380 = vld [vmem:[#allocation3 + $0x1b8] sm:$0xff]
    %v381 = vld [vmem:[#allocation3 + $0x1c0] sm:$0xff]
    %v382 = vld [vmem:[#allocation3 + $0x1c8] sm:$0xff]
    %v383 = vld [vmem:[#allocation3 + $0x1d0] sm:$0xff]
    %v384 = vld [vmem:[#allocation3 + $0x1d8] sm:$0xff]
    %v385 = vld [vmem:[#allocation3 + $0x1e0] sm:$0xff]
    %v386 = vld [vmem:[#allocation3 + $0x1e8] sm:$0xff]
    %v387 = vld [vmem:[#allocation3 + $0x1f0] sm:$0xff]
    %v388 = vld [vmem:[#allocation3 + $0x1f8] sm:$0xff]
    %v389 = vld [vmem:[#allocation3 + $0x200] sm:$0xff]
    %v390 = vld [vmem:[#allocation3 + $0x208] sm:$0xff]
    %v391 = vld [vmem:[#allocation3 + $0x210] sm:$0xff]
    %v392 = vld [vmem:[#allocation3 + $0x218] sm:$0xff]
    %v393 = vld [vmem:[#allocation3 + $0x220] sm:$0xff]
    %v394 = vld [vmem:[#allocation3 + $0x228] sm:$0xff]
    %v395 = vld [vmem:[#allocation3 + $0x230] sm:$0xff]
    %v396 = vld [vmem:[#allocation3 + $0x238] sm:$0xff]
    %v397 = vld [vmem:[#allocation3 + $0x240] sm:$0xff]
    %v398 = vld [vmem:[#allocation3 + $0x248] sm:$0xff]
    %v399 = vld [vmem:[#allocation3 + $0x250] sm:$0xff]
    %v400 = vld [vmem:[#allocation3 + $0x258] sm:$0xff]
    %v401 = vld [vmem:[#allocation3 + $0x260] sm:$0xff]
    %v402 = vld [vmem:[#allocation3 + $0x268] sm:$0xff]
    %v403 = vld [vmem:[#allocation3 + $0x270] sm:$0xff]
    %v404 = vld [vmem:[#allocation3 + $0x278] sm:$0xff]
    %v405 = vld [vmem:[#allocation3 + $0x280] sm:$0xff]
    %v406 = vld [vmem:[#allocation3 + $0x288] sm:$0xff]
    %v407 = vld [vmem:[#allocation3 + $0x290] sm:$0xff]
    %v408 = vld [vmem:[#allocation3 + $0x298] sm:$0xff]
    %v409 = vld [vmem:[#allocation3 + $0x2a0] sm:$0xff]
    %v410 = vld [vmem:[#allocation3 + $0x2a8] sm:$0xff]
    %v411 = vld [vmem:[#allocation3 + $0x2b0] sm:$0xff]
    %v412 = vld [vmem:[#allocation3 + $0x2b8] sm:$0xff]
    %v413 = vld [vmem:[#allocation3 + $0x2c0] sm:$0xff]
    %v414 = vld [vmem:[#allocation3 + $0x2c8] sm:$0xff]
    %v415 = vld [vmem:[#allocation3 + $0x2d0] sm:$0xff]
    %v416 = vld [vmem:[#allocation3 + $0x2d8] sm:$0xff]
    %v417 = vld [vmem:[#allocation3 + $0x2e0] sm:$0xff]
    %v418 = vld [vmem:[#allocation3 + $0x2e8] sm:$0xff]
    %v419 = vld [vmem:[#allocation3 + $0x2f0] sm:$0xff]
    %v420 = vld [vmem:[#allocation3 + $0x2f8] sm:$0xff]
    %v421 = vld [vmem:[#allocation3 + $0x300] sm:$0xff]
    %v422 = vld [vmem:[#allocation3 + $0x308] sm:$0xff]
    %v423 = vld [vmem:[#allocation3 + $0x310] sm:$0xff]
    %v424 = vld [vmem:[#allocation3 + $0x318] sm:$0xff]
    %v425 = vld [vmem:[#allocation3 + $0x320] sm:$0xff]
    %v426 = vld [vmem:[#allocation3 + $0x328] sm:$0xff]
    %v427 = vld [vmem:[#allocation3 + $0x330] sm:$0xff]
    %v428 = vld [vmem:[#allocation3 + $0x338] sm:$0xff]
    %v429 = vld [vmem:[#allocation3 + $0x340] sm:$0xff]
    %v430 = vld [vmem:[#allocation3 + $0x348] sm:$0xff]
    %v431 = vld [vmem:[#allocation3 + $0x350] sm:$0xff]
    %v432 = vld [vmem:[#allocation3 + $0x358] sm:$0xff]
    %v433 = vld [vmem:[#allocation3 + $0x360] sm:$0xff]
    %v434 = vld [vmem:[#allocation3 + $0x368] sm:$0xff]
    %v435 = vld [vmem:[#allocation3 + $0x370] sm:$0xff]
    %v436 = vld [vmem:[#allocation3 + $0x378] sm:$0xff]
    %v437 = vld [vmem:[#allocation3 + $0x380] sm:$0xff]
    %v438 = vld [vmem:[#allocation3 + $0x388] sm:$0xff]
    %v439 = vld [vmem:[#allocation3 + $0x390] sm:$0xff]
    %v440 = vld [vmem:[#allocation3 + $0x398] sm:$0xff]
    %v441 = vld [vmem:[#allocation3 + $0x3a0] sm:$0xff]
    %v442 = vld [vmem:[#allocation3 + $0x3a8] sm:$0xff]
    %v443 = vld [vmem:[#allocation3 + $0x3b0] sm:$0xff]
    %v444 = vld [vmem:[#allocation3 + $0x3b8] sm:$0xff]
    %v445 = vld [vmem:[#allocation3 + $0x3c0] sm:$0xff]
    %v446 = vld [vmem:[#allocation3 + $0x3c8] sm:$0xff]
    %v447 = vld [vmem:[#allocation3 + $0x3d0] sm:$0xff]
    %v448 = vld [vmem:[#allocation3 + $0x3d8] sm:$0xff]
    %v449 = vld [vmem:[#allocation3 + $0x3e0] sm:$0xff]
    %v450 = vld [vmem:[#allocation3 + $0x3e8] sm:$0xff]
    %v451 = vld [vmem:[#allocation3 + $0x3f0] sm:$0xff]
    %v452 = vld [vmem:[#allocation3 + $0x3f8] sm:$0xff]
    %v453 = vld [vmem:[#allocation6] sm:$0xff]
    %v454 = vld [vmem:[#allocation6 + $0x8] sm:$0xff]
    %v455 = vld [vmem:[#allocation6 + $0x10] sm:$0xff]
    %v456 = vld [vmem:[#allocation6 + $0x18] sm:$0xff]
    %v457 = vld [vmem:[#allocation6 + $0x20] sm:$0xff]
    %v458 = vld [vmem:[#allocation6 + $0x28] sm:$0xff]
    %v459 = vld [vmem:[#allocation6 + $0x30] sm:$0xff]
    %v460 = vld [vmem:[#allocation6 + $0x38] sm:$0xff]
    %v461 = vld [vmem:[#allocation6 + $0x40] sm:$0xff]
    %v462 = vld [vmem:[#allocation6 + $0x48] sm:$0xff]
    %v463 = vld [vmem:[#allocation6 + $0x50] sm:$0xff]
    %v464 = vld [vmem:[#allocation6 + $0x58] sm:$0xff]
    %v465 = vld [vmem:[#allocation6 + $0x60] sm:$0xff]
    %v466 = vld [vmem:[#allocation6 + $0x68] sm:$0xff]
    %v467 = vld [vmem:[#allocation6 + $0x70] sm:$0xff]
    %v468 = vld [vmem:[#allocation6 + $0x78] sm:$0xff]
    %v469 = vld [vmem:[#allocation6 + $0x80] sm:$0xff]
    %v470 = vld [vmem:[#allocation6 + $0x88] sm:$0xff]
    %v471 = vld [vmem:[#allocation6 + $0x90] sm:$0xff]
    %v472 = vld [vmem:[#allocation6 + $0x98] sm:$0xff]
    %v473 = vld [vmem:[#allocation6 + $0xa0] sm:$0xff]
    %v474 = vld [vmem:[#allocation6 + $0xa8] sm:$0xff]
    %v475 = vld [vmem:[#allocation6 + $0xb0] sm:$0xff]
    %v476 = vld [vmem:[#allocation6 + $0xb8] sm:$0xff]
    %v477 = vld [vmem:[#allocation6 + $0xc0] sm:$0xff]
    %v478 = vld [vmem:[#allocation6 + $0xc8] sm:$0xff]
    %v479 = vld [vmem:[#allocation6 + $0xd0] sm:$0xff]
    %v480 = vld [vmem:[#allocation6 + $0xd8] sm:$0xff]
    %v481 = vld [vmem:[#allocation6 + $0xe0] sm:$0xff]
    %v482 = vld [vmem:[#allocation6 + $0xe8] sm:$0xff]
    %v483 = vld [vmem:[#allocation6 + $0xf0] sm:$0xff]
    %v484 = vld [vmem:[#allocation6 + $0xf8] sm:$0xff]
    %v485 = vld [vmem:[#allocation6 + $0x100] sm:$0xff]
    %v486 = vld [vmem:[#allocation6 + $0x108] sm:$0xff]
    %v487 = vld [vmem:[#allocation6 + $0x110] sm:$0xff]
    %v488 = vld [vmem:[#allocation6 + $0x118] sm:$0xff]
    %v489 = vld [vmem:[#allocation6 + $0x120] sm:$0xff]
    %v490 = vld [vmem:[#allocation6 + $0x128] sm:$0xff]
    %v491 = vld [vmem:[#allocation6 + $0x130] sm:$0xff]
    %v492 = vld [vmem:[#allocation6 + $0x138] sm:$0xff]
    %v493 = vld [vmem:[#allocation6 + $0x140] sm:$0xff]
    %v494 = vld [vmem:[#allocation6 + $0x148] sm:$0xff]
    %v495 = vld [vmem:[#allocation6 + $0x150] sm:$0xff]
    %v496 = vld [vmem:[#allocation6 + $0x158] sm:$0xff]
    %v497 = vld [vmem:[#allocation6 + $0x160] sm:$0xff]
    %v498 = vld [vmem:[#allocation6 + $0x168] sm:$0xff]
    %v499 = vld [vmem:[#allocation6 + $0x170] sm:$0xff]
    %v500 = vld [vmem:[#allocation6 + $0x178] sm:$0xff]
    %v501 = vld [vmem:[#allocation6 + $0x180] sm:$0xff]
    %v502 = vld [vmem:[#allocation6 + $0x188] sm:$0xff]
    %v503 = vld [vmem:[#allocation6 + $0x190] sm:$0xff]
    %v504 = vld [vmem:[#allocation6 + $0x198] sm:$0xff]
    %v505 = vld [vmem:[#allocation6 + $0x1a0] sm:$0xff]
    %v506 = vld [vmem:[#allocation6 + $0x1a8] sm:$0xff]
    %v507 = vld [vmem:[#allocation6 + $0x1b0] sm:$0xff]
    %v508 = vld [vmem:[#allocation6 + $0x1b8] sm:$0xff]
    %v509 = vld [vmem:[#allocation6 + $0x1c0] sm:$0xff]
    %v510 = vld [vmem:[#allocation6 + $0x1c8] sm:$0xff]
    %v511 = vld [vmem:[#allocation6 + $0x1d0] sm:$0xff]
    %v512 = vld [vmem:[#allocation6 + $0x1d8] sm:$0xff]
    %v513 = vld [vmem:[#allocation6 + $0x1e0] sm:$0xff]
    %v514 = vld [vmem:[#allocation6 + $0x1e8] sm:$0xff]
    %v515 = vld [vmem:[#allocation6 + $0x1f0] sm:$0xff]
    %v516 = vld [vmem:[#allocation6 + $0x1f8] sm:$0xff]
    %v645 = vunpack.c.l.b16 %v325
    %v646 = vunpack.c.h.b16 %v325
    %v647 = vunpack.c.l.b16 %v326
    %v648 = vunpack.c.h.b16 %v326
    %v649 = vunpack.c.l.b16 %v327
    %v650 = vunpack.c.h.b16 %v327
    %v651 = vunpack.c.l.b16 %v328
    %v652 = vunpack.c.h.b16 %v328
    %v653 = vunpack.c.l.b16 %v329
    %v654 = vunpack.c.h.b16 %v329
    %v655 = vunpack.c.l.b16 %v330
    %v656 = vunpack.c.h.b16 %v330
    %v657 = vunpack.c.l.b16 %v331
    %v658 = vunpack.c.h.b16 %v331
    %v659 = vunpack.c.l.b16 %v332
    %v660 = vunpack.c.h.b16 %v332
    %v661 = vunpack.c.l.b16 %v333
    %v662 = vunpack.c.h.b16 %v333
    %v663 = vunpack.c.l.b16 %v334
    %v664 = vunpack.c.h.b16 %v334
    %v665 = vunpack.c.l.b16 %v335
    %v666 = vunpack.c.h.b16 %v335
    %v667 = vunpack.c.l.b16 %v336
    %v668 = vunpack.c.h.b16 %v336
    %v669 = vunpack.c.l.b16 %v337
    %v670 = vunpack.c.h.b16 %v337
    %v671 = vunpack.c.l.b16 %v338
    %v672 = vunpack.c.h.b16 %v338
    %v673 = vunpack.c.l.b16 %v339
    %v674 = vunpack.c.h.b16 %v339
    %v675 = vunpack.c.l.b16 %v340
    %v676 = vunpack.c.h.b16 %v340
    %v677 = vunpack.c.l.b16 %v341
    %v678 = vunpack.c.h.b16 %v341
    %v679 = vunpack.c.l.b16 %v342
    %v680 = vunpack.c.h.b16 %v342
    %v681 = vunpack.c.l.b16 %v343
    %v682 = vunpack.c.h.b16 %v343
    %v683 = vunpack.c.l.b16 %v344
    %v684 = vunpack.c.h.b16 %v344
    %v685 = vunpack.c.l.b16 %v345
    %v686 = vunpack.c.h.b16 %v345
    %v687 = vunpack.c.l.b16 %v346
    %v688 = vunpack.c.h.b16 %v346
    %v689 = vunpack.c.l.b16 %v347
    %v690 = vunpack.c.h.b16 %v347
    %v691 = vunpack.c.l.b16 %v348
    %v692 = vunpack.c.h.b16 %v348
    %v693 = vunpack.c.l.b16 %v349
    %v694 = vunpack.c.h.b16 %v349
    %v695 = vunpack.c.l.b16 %v350
    %v696 = vunpack.c.h.b16 %v350
    %v697 = vunpack.c.l.b16 %v351
    %v698 = vunpack.c.h.b16 %v351
    %v699 = vunpack.c.l.b16 %v352
    %v700 = vunpack.c.h.b16 %v352
    %v701 = vunpack.c.l.b16 %v353
    %v702 = vunpack.c.h.b16 %v353
    %v703 = vunpack.c.l.b16 %v354
    %v704 = vunpack.c.h.b16 %v354
    %v705 = vunpack.c.l.b16 %v355
    %v706 = vunpack.c.h.b16 %v355
    %v707 = vunpack.c.l.b16 %v356
    %v708 = vunpack.c.h.b16 %v356
    %v709 = vunpack.c.l.b16 %v357
    %v710 = vunpack.c.h.b16 %v357
    %v711 = vunpack.c.l.b16 %v358
    %v712 = vunpack.c.h.b16 %v358
    %v713 = vunpack.c.l.b16 %v359
    %v714 = vunpack.c.h.b16 %v359
    %v715 = vunpack.c.l.b16 %v360
    %v716 = vunpack.c.h.b16 %v360
    %v717 = vunpack.c.l.b16 %v361
    %v718 = vunpack.c.h.b16 %v361
    %v719 = vunpack.c.l.b16 %v362
    %v720 = vunpack.c.h.b16 %v362
    %v721 = vunpack.c.l.b16 %v363
    %v722 = vunpack.c.h.b16 %v363
    %v723 = vunpack.c.l.b16 %v364
    %v724 = vunpack.c.h.b16 %v364
    %v725 = vunpack.c.l.b16 %v365
    %v726 = vunpack.c.h.b16 %v365
    %v727 = vunpack.c.l.b16 %v366
    %v728 = vunpack.c.h.b16 %v366
    %v729 = vunpack.c.l.b16 %v367
    %v730 = vunpack.c.h.b16 %v367
    %v731 = vunpack.c.l.b16 %v368
    %v732 = vunpack.c.h.b16 %v368
    %v733 = vunpack.c.l.b16 %v369
    %v734 = vunpack.c.h.b16 %v369
    %v735 = vunpack.c.l.b16 %v370
    %v736 = vunpack.c.h.b16 %v370
    %v737 = vunpack.c.l.b16 %v371
    %v738 = vunpack.c.h.b16 %v371
    %v739 = vunpack.c.l.b16 %v372
    %v740 = vunpack.c.h.b16 %v372
    %v741 = vunpack.c.l.b16 %v373
    %v742 = vunpack.c.h.b16 %v373
    %v743 = vunpack.c.l.b16 %v374
    %v744 = vunpack.c.h.b16 %v374
    %v745 = vunpack.c.l.b16 %v375
    %v746 = vunpack.c.h.b16 %v375
    %v747 = vunpack.c.l.b16 %v376
    %v748 = vunpack.c.h.b16 %v376
    %v749 = vunpack.c.l.b16 %v377
    %v750 = vunpack.c.h.b16 %v377
    %v751 = vunpack.c.l.b16 %v378
    %v752 = vunpack.c.h.b16 %v378
    %v753 = vunpack.c.l.b16 %v379
    %v754 = vunpack.c.h.b16 %v379
    %v755 = vunpack.c.l.b16 %v380
    %v756 = vunpack.c.h.b16 %v380
    %v757 = vunpack.c.l.b16 %v381
    %v758 = vunpack.c.h.b16 %v381
    %v759 = vunpack.c.l.b16 %v382
    %v760 = vunpack.c.h.b16 %v382
    %v761 = vunpack.c.l.b16 %v383
    %v762 = vunpack.c.h.b16 %v383
    %v763 = vunpack.c.l.b16 %v384
    %v764 = vunpack.c.h.b16 %v384
    %v765 = vunpack.c.l.b16 %v385
    %v766 = vunpack.c.h.b16 %v385
    %v767 = vunpack.c.l.b16 %v386
    %v768 = vunpack.c.h.b16 %v386
    %v769 = vunpack.c.l.b16 %v387
    %v770 = vunpack.c.h.b16 %v387
    %v771 = vunpack.c.l.b16 %v388
    %v772 = vunpack.c.h.b16 %v388
    %v773 = vunpack.c.l.b16 %v389
    %v774 = vunpack.c.h.b16 %v389
    %v775 = vunpack.c.l.b16 %v390
    %v776 = vunpack.c.h.b16 %v390
    %v777 = vunpack.c.l.b16 %v391
    %v778 = vunpack.c.h.b16 %v391
    %v779 = vunpack.c.l.b16 %v392
    %v780 = vunpack.c.h.b16 %v392
    %v781 = vunpack.c.l.b16 %v393
    %v782 = vunpack.c.h.b16 %v393
    %v783 = vunpack.c.l.b16 %v394
    %v784 = vunpack.c.h.b16 %v394
    %v785 = vunpack.c.l.b16 %v395
    %v786 = vunpack.c.h.b16 %v395
    %v787 = vunpack.c.l.b16 %v396
    %v788 = vunpack.c.h.b16 %v396
    %v789 = vunpack.c.l.b16 %v397
    %v790 = vunpack.c.h.b16 %v397
    %v791 = vunpack.c.l.b16 %v398
    %v792 = vunpack.c.h.b16 %v398
    %v793 = vunpack.c.l.b16 %v399
    %v794 = vunpack.c.h.b16 %v399
    %v795 = vunpack.c.l.b16 %v400
    %v796 = vunpack.c.h.b16 %v400
    %v797 = vunpack.c.l.b16 %v401
    %v798 = vunpack.c.h.b16 %v401
    %v799 = vunpack.c.l.b16 %v402
    %v800 = vunpack.c.h.b16 %v402
    %v801 = vunpack.c.l.b16 %v403
    %v802 = vunpack.c.h.b16 %v403
    %v803 = vunpack.c.l.b16 %v404
    %v804 = vunpack.c.h.b16 %v404
    %v805 = vunpack.c.l.b16 %v405
    %v806 = vunpack.c.h.b16 %v405
    %v807 = vunpack.c.l.b16 %v406
    %v808 = vunpack.c.h.b16 %v406
    %v809 = vunpack.c.l.b16 %v407
    %v810 = vunpack.c.h.b16 %v407
    %v811 = vunpack.c.l.b16 %v408
    %v812 = vunpack.c.h.b16 %v408
    %v813 = vunpack.c.l.b16 %v409
    %v814 = vunpack.c.h.b16 %v409
    %v815 = vunpack.c.l.b16 %v410
    %v816 = vunpack.c.h.b16 %v410
    %v817 = vunpack.c.l.b16 %v411
    %v818 = vunpack.c.h.b16 %v411
    %v819 = vunpack.c.l.b16 %v412
    %v820 = vunpack.c.h.b16 %v412
    %v821 = vunpack.c.l.b16 %v413
    %v822 = vunpack.c.h.b16 %v413
    %v823 = vunpack.c.l.b16 %v414
    %v824 = vunpack.c.h.b16 %v414
    %v825 = vunpack.c.l.b16 %v415
    %v826 = vunpack.c.h.b16 %v415
    %v827 = vunpack.c.l.b16 %v416
    %v828 = vunpack.c.h.b16 %v416
    %v829 = vunpack.c.l.b16 %v417
    %v830 = vunpack.c.h.b16 %v417
    %v831 = vunpack.c.l.b16 %v418
    %v832 = vunpack.c.h.b16 %v418
    %v833 = vunpack.c.l.b16 %v419
    %v834 = vunpack.c.h.b16 %v419
    %v835 = vunpack.c.l.b16 %v420
    %v836 = vunpack.c.h.b16 %v420
    %v837 = vunpack.c.l.b16 %v421
    %v838 = vunpack.c.h.b16 %v421
    %v839 = vunpack.c.l.b16 %v422
    %v840 = vunpack.c.h.b16 %v422
    %v841 = vunpack.c.l.b16 %v423
    %v842 = vunpack.c.h.b16 %v423
    %v843 = vunpack.c.l.b16 %v424
    %v844 = vunpack.c.h.b16 %v424
    %v845 = vunpack.c.l.b16 %v425
    %v846 = vunpack.c.h.b16 %v425
    %v847 = vunpack.c.l.b16 %v426
    %v848 = vunpack.c.h.b16 %v426
    %v849 = vunpack.c.l.b16 %v427
    %v850 = vunpack.c.h.b16 %v427
    %v851 = vunpack.c.l.b16 %v428
    %v852 = vunpack.c.h.b16 %v428
    %v853 = vunpack.c.l.b16 %v429
    %v854 = vunpack.c.h.b16 %v429
    %v855 = vunpack.c.l.b16 %v430
    %v856 = vunpack.c.h.b16 %v430
    %v857 = vunpack.c.l.b16 %v431
    %v858 = vunpack.c.h.b16 %v431
    %v859 = vunpack.c.l.b16 %v432
    %v860 = vunpack.c.h.b16 %v432
    %v861 = vunpack.c.l.b16 %v433
    %v862 = vunpack.c.h.b16 %v433
    %v863 = vunpack.c.l.b16 %v434
    %v864 = vunpack.c.h.b16 %v434
    %v865 = vunpack.c.l.b16 %v435
    %v866 = vunpack.c.h.b16 %v435
    %v867 = vunpack.c.l.b16 %v436
    %v868 = vunpack.c.h.b16 %v436
    %v869 = vunpack.c.l.b16 %v437
    %v870 = vunpack.c.h.b16 %v437
    %v871 = vunpack.c.l.b16 %v438
    %v872 = vunpack.c.h.b16 %v438
    %v873 = vunpack.c.l.b16 %v439
    %v874 = vunpack.c.h.b16 %v439
    %v875 = vunpack.c.l.b16 %v440
    %v876 = vunpack.c.h.b16 %v440
    %v877 = vunpack.c.l.b16 %v441
    %v878 = vunpack.c.h.b16 %v441
    %v879 = vunpack.c.l.b16 %v442
    %v880 = vunpack.c.h.b16 %v442
    %v881 = vunpack.c.l.b16 %v443
    %v882 = vunpack.c.h.b16 %v443
    %v883 = vunpack.c.l.b16 %v444
    %v884 = vunpack.c.h.b16 %v444
    %v885 = vunpack.c.l.b16 %v445
    %v886 = vunpack.c.h.b16 %v445
    %v887 = vunpack.c.l.b16 %v446
    %v888 = vunpack.c.h.b16 %v446
    %v889 = vunpack.c.l.b16 %v447
    %v890 = vunpack.c.h.b16 %v447
    %v891 = vunpack.c.l.b16 %v448
    %v892 = vunpack.c.h.b16 %v448
    %v893 = vunpack.c.l.b16 %v449
    %v894 = vunpack.c.h.b16 %v449
    %v895 = vunpack.c.l.b16 %v450
    %v896 = vunpack.c.h.b16 %v450
    %v897 = vunpack.c.l.b16 %v451
    %v898 = vunpack.c.h.b16 %v451
    %v899 = vunpack.c.l.b16 %v452
    %v900 = vunpack.c.h.b16 %v452
    %v901 = vpack.c.b16 %v649, %v645
    %v902 = vpack.c.b16 %v650, %v646
    %v903 = vpack.c.b16 %v651, %v647
    %v904 = vpack.c.b16 %v652, %v648
    %v905 = vpack.c.b16 %v657, %v653
    %v906 = vpack.c.b16 %v658, %v654
    %v907 = vpack.c.b16 %v659, %v655
    %v908 = vpack.c.b16 %v660, %v656
    %v909 = vpack.c.b16 %v665, %v661
    %v910 = vpack.c.b16 %v666, %v662
    %v911 = vpack.c.b16 %v667, %v663
    %v912 = vpack.c.b16 %v668, %v664
    %v913 = vpack.c.b16 %v673, %v669
    %v914 = vpack.c.b16 %v674, %v670
    %v915 = vpack.c.b16 %v675, %v671
    %v916 = vpack.c.b16 %v676, %v672
    %v917 = vpack.c.b16 %v681, %v677
    %v918 = vpack.c.b16 %v682, %v678
    %v919 = vpack.c.b16 %v683, %v679
    %v920 = vpack.c.b16 %v684, %v680
    %v921 = vpack.c.b16 %v689, %v685
    %v922 = vpack.c.b16 %v690, %v686
    %v923 = vpack.c.b16 %v691, %v687
    %v924 = vpack.c.b16 %v692, %v688
    %v925 = vpack.c.b16 %v697, %v693
    %v926 = vpack.c.b16 %v698, %v694
    %v927 = vpack.c.b16 %v699, %v695
    %v928 = vpack.c.b16 %v700, %v696
    %v929 = vpack.c.b16 %v705, %v701
    %v930 = vpack.c.b16 %v706, %v702
    %v931 = vpack.c.b16 %v707, %v703
    %v932 = vpack.c.b16 %v708, %v704
    %v933 = vpack.c.b16 %v713, %v709
    %v934 = vpack.c.b16 %v714, %v710
    %v935 = vpack.c.b16 %v715, %v711
    %v936 = vpack.c.b16 %v716, %v712
    %v937 = vpack.c.b16 %v721, %v717
    %v938 = vpack.c.b16 %v722, %v718
    %v939 = vpack.c.b16 %v723, %v719
    %v940 = vpack.c.b16 %v724, %v720
    %v941 = vpack.c.b16 %v729, %v725
    %v942 = vpack.c.b16 %v730, %v726
    %v943 = vpack.c.b16 %v731, %v727
    %v944 = vpack.c.b16 %v732, %v728
    %v945 = vpack.c.b16 %v737, %v733
    %v946 = vpack.c.b16 %v738, %v734
    %v947 = vpack.c.b16 %v739, %v735
    %v948 = vpack.c.b16 %v740, %v736
    %v949 = vpack.c.b16 %v745, %v741
    %v950 = vpack.c.b16 %v746, %v742
    %v951 = vpack.c.b16 %v747, %v743
    %v952 = vpack.c.b16 %v748, %v744
    %v953 = vpack.c.b16 %v753, %v749
    %v954 = vpack.c.b16 %v754, %v750
    %v955 = vpack.c.b16 %v755, %v751
    %v956 = vpack.c.b16 %v756, %v752
    %v957 = vpack.c.b16 %v761, %v757
    %v958 = vpack.c.b16 %v762, %v758
    %v959 = vpack.c.b16 %v763, %v759
    %v960 = vpack.c.b16 %v764, %v760
    %v961 = vpack.c.b16 %v769, %v765
    %v962 = vpack.c.b16 %v770, %v766
    %v963 = vpack.c.b16 %v771, %v767
    %v964 = vpack.c.b16 %v772, %v768
    %v965 = vpack.c.b16 %v777, %v773
    %v966 = vpack.c.b16 %v778, %v774
    %v967 = vpack.c.b16 %v779, %v775
    %v968 = vpack.c.b16 %v780, %v776
    %v969 = vpack.c.b16 %v785, %v781
    %v970 = vpack.c.b16 %v786, %v782
    %v971 = vpack.c.b16 %v787, %v783
    %v972 = vpack.c.b16 %v788, %v784
    %v973 = vpack.c.b16 %v793, %v789
    %v974 = vpack.c.b16 %v794, %v790
    %v975 = vpack.c.b16 %v795, %v791
    %v976 = vpack.c.b16 %v796, %v792
    %v977 = vpack.c.b16 %v801, %v797
    %v978 = vpack.c.b16 %v802, %v798
    %v979 = vpack.c.b16 %v803, %v799
    %v980 = vpack.c.b16 %v804, %v800
    %v981 = vpack.c.b16 %v809, %v805
    %v982 = vpack.c.b16 %v810, %v806
    %v983 = vpack.c.b16 %v811, %v807
    %v984 = vpack.c.b16 %v812, %v808
    %v985 = vpack.c.b16 %v817, %v813
    %v986 = vpack.c.b16 %v818, %v814
    %v987 = vpack.c.b16 %v819, %v815
    %v988 = vpack.c.b16 %v820, %v816
    %v989 = vpack.c.b16 %v825, %v821
    %v990 = vpack.c.b16 %v826, %v822
    %v991 = vpack.c.b16 %v827, %v823
    %v992 = vpack.c.b16 %v828, %v824
    %v993 = vpack.c.b16 %v833, %v829
    %v994 = vpack.c.b16 %v834, %v830
    %v995 = vpack.c.b16 %v835, %v831
    %v996 = vpack.c.b16 %v836, %v832
    %v997 = vpack.c.b16 %v841, %v837
    %v998 = vpack.c.b16 %v842, %v838
    %v999 = vpack.c.b16 %v843, %v839
    %v1000 = vpack.c.b16 %v844, %v840
    %v1001 = vpack.c.b16 %v849, %v845
    %v1002 = vpack.c.b16 %v850, %v846
    %v1003 = vpack.c.b16 %v851, %v847
    %v1004 = vpack.c.b16 %v852, %v848
    %v1005 = vpack.c.b16 %v857, %v853
    %v1006 = vpack.c.b16 %v858, %v854
    %v1007 = vpack.c.b16 %v859, %v855
    %v1008 = vpack.c.b16 %v860, %v856
    %v1009 = vpack.c.b16 %v865, %v861
    %v1010 = vpack.c.b16 %v866, %v862
    %v1011 = vpack.c.b16 %v867, %v863
    %v1012 = vpack.c.b16 %v868, %v864
    %v1013 = vpack.c.b16 %v873, %v869
    %v1014 = vpack.c.b16 %v874, %v870
    %v1015 = vpack.c.b16 %v875, %v871
    %v1016 = vpack.c.b16 %v876, %v872
    %v1017 = vpack.c.b16 %v881, %v877
    %v1018 = vpack.c.b16 %v882, %v878
    %v1019 = vpack.c.b16 %v883, %v879
    %v1020 = vpack.c.b16 %v884, %v880
    %v1021 = vpack.c.b16 %v889, %v885
    %v1022 = vpack.c.b16 %v890, %v886
    %v1023 = vpack.c.b16 %v891, %v887
    %v1024 = vpack.c.b16 %v892, %v888
    %v1025 = vpack.c.b16 %v897, %v893
    %v1026 = vpack.c.b16 %v898, %v894
    %v1027 = vpack.c.b16 %v899, %v895
    %v1028 = vpack.c.b16 %v900, %v896
    %v1221 = vunpack.c.l.b16 %v453
    %v1222 = vunpack.c.h.b16 %v453
    %v1223 = vunpack.c.l.b16 %v454
    %v1224 = vunpack.c.h.b16 %v454
    %v1225 = vunpack.c.l.b16 %v455
    %v1226 = vunpack.c.h.b16 %v455
    %v1227 = vunpack.c.l.b16 %v456
    %v1228 = vunpack.c.h.b16 %v456
    %v1229 = vunpack.c.l.b16 %v457
    %v1230 = vunpack.c.h.b16 %v457
    %v1231 = vunpack.c.l.b16 %v458
    %v1232 = vunpack.c.h.b16 %v458
    %v1233 = vunpack.c.l.b16 %v459
    %v1234 = vunpack.c.h.b16 %v459
    %v1235 = vunpack.c.l.b16 %v460
    %v1236 = vunpack.c.h.b16 %v460
    %v1237 = vunpack.c.l.b16 %v461
    %v1238 = vunpack.c.h.b16 %v461
    %v1239 = vunpack.c.l.b16 %v462
    %v1240 = vunpack.c.h.b16 %v462
    %v1241 = vunpack.c.l.b16 %v463
    %v1242 = vunpack.c.h.b16 %v463
    %v1243 = vunpack.c.l.b16 %v464
    %v1244 = vunpack.c.h.b16 %v464
    %v1245 = vunpack.c.l.b16 %v465
    %v1246 = vunpack.c.h.b16 %v465
    %v1247 = vunpack.c.l.b16 %v466
    %v1248 = vunpack.c.h.b16 %v466
    %v1249 = vunpack.c.l.b16 %v467
    %v1250 = vunpack.c.h.b16 %v467
    %v1251 = vunpack.c.l.b16 %v468
    %v1252 = vunpack.c.h.b16 %v468
    %v1253 = vunpack.c.l.b16 %v469
    %v1254 = vunpack.c.h.b16 %v469
    %v1255 = vunpack.c.l.b16 %v470
    %v1256 = vunpack.c.h.b16 %v470
    %v1257 = vunpack.c.l.b16 %v471
    %v1258 = vunpack.c.h.b16 %v471
    %v1259 = vunpack.c.l.b16 %v472
    %v1260 = vunpack.c.h.b16 %v472
    %v1261 = vunpack.c.l.b16 %v473
    %v1262 = vunpack.c.h.b16 %v473
    %v1263 = vunpack.c.l.b16 %v474
    %v1264 = vunpack.c.h.b16 %v474
    %v1265 = vunpack.c.l.b16 %v475
    %v1266 = vunpack.c.h.b16 %v475
    %v1267 = vunpack.c.l.b16 %v476
    %v1268 = vunpack.c.h.b16 %v476
    %v1269 = vunpack.c.l.b16 %v477
    %v1270 = vunpack.c.h.b16 %v477
    %v1271 = vunpack.c.l.b16 %v478
    %v1272 = vunpack.c.h.b16 %v478
    %v1273 = vunpack.c.l.b16 %v479
    %v1274 = vunpack.c.h.b16 %v479
    %v1275 = vunpack.c.l.b16 %v480
    %v1276 = vunpack.c.h.b16 %v480
    %v1277 = vunpack.c.l.b16 %v481
    %v1278 = vunpack.c.h.b16 %v481
    %v1279 = vunpack.c.l.b16 %v482
    %v1280 = vunpack.c.h.b16 %v482
    %v1281 = vunpack.c.l.b16 %v483
    %v1282 = vunpack.c.h.b16 %v483
    %v1283 = vunpack.c.l.b16 %v484
    %v1284 = vunpack.c.h.b16 %v484
    %v1285 = vunpack.c.l.b16 %v485
    %v1286 = vunpack.c.h.b16 %v485
    %v1287 = vunpack.c.l.b16 %v486
    %v1288 = vunpack.c.h.b16 %v486
    %v1289 = vunpack.c.l.b16 %v487
    %v1290 = vunpack.c.h.b16 %v487
    %v1291 = vunpack.c.l.b16 %v488
    %v1292 = vunpack.c.h.b16 %v488
    %v1293 = vunpack.c.l.b16 %v489
    %v1294 = vunpack.c.h.b16 %v489
    %v1295 = vunpack.c.l.b16 %v490
    %v1296 = vunpack.c.h.b16 %v490
    %v1297 = vunpack.c.l.b16 %v491
    %v1298 = vunpack.c.h.b16 %v491
    %v1299 = vunpack.c.l.b16 %v492
    %v1300 = vunpack.c.h.b16 %v492
    %v1301 = vunpack.c.l.b16 %v493
    %v1302 = vunpack.c.h.b16 %v493
    %v1303 = vunpack.c.l.b16 %v494
    %v1304 = vunpack.c.h.b16 %v494
    %v1305 = vunpack.c.l.b16 %v495
    %v1306 = vunpack.c.h.b16 %v495
    %v1307 = vunpack.c.l.b16 %v496
    %v1308 = vunpack.c.h.b16 %v496
    %v1309 = vunpack.c.l.b16 %v497
    %v1310 = vunpack.c.h.b16 %v497
    %v1311 = vunpack.c.l.b16 %v498
    %v1312 = vunpack.c.h.b16 %v498
    %v1313 = vunpack.c.l.b16 %v499
    %v1314 = vunpack.c.h.b16 %v499
    %v1315 = vunpack.c.l.b16 %v500
    %v1316 = vunpack.c.h.b16 %v500
    %v1317 = vunpack.c.l.b16 %v501
    %v1318 = vunpack.c.h.b16 %v501
    %v1319 = vunpack.c.l.b16 %v502
    %v1320 = vunpack.c.h.b16 %v502
    %v1321 = vunpack.c.l.b16 %v503
    %v1322 = vunpack.c.h.b16 %v503
    %v1323 = vunpack.c.l.b16 %v504
    %v1324 = vunpack.c.h.b16 %v504
    %v1325 = vunpack.c.l.b16 %v505
    %v1326 = vunpack.c.h.b16 %v505
    %v1327 = vunpack.c.l.b16 %v506
    %v1328 = vunpack.c.h.b16 %v506
    %v1329 = vunpack.c.l.b16 %v507
    %v1330 = vunpack.c.h.b16 %v507
    %v1331 = vunpack.c.l.b16 %v508
    %v1332 = vunpack.c.h.b16 %v508
    %v1333 = vunpack.c.l.b16 %v509
    %v1334 = vunpack.c.h.b16 %v509
    %v1335 = vunpack.c.l.b16 %v510
    %v1336 = vunpack.c.h.b16 %v510
    %v1337 = vunpack.c.l.b16 %v511
    %v1338 = vunpack.c.h.b16 %v511
    %v1339 = vunpack.c.l.b16 %v512
    %v1340 = vunpack.c.h.b16 %v512
    %v1341 = vunpack.c.l.b16 %v513
    %v1342 = vunpack.c.h.b16 %v513
    %v1343 = vunpack.c.l.b16 %v514
    %v1344 = vunpack.c.h.b16 %v514
    %v1345 = vunpack.c.l.b16 %v515
    %v1346 = vunpack.c.h.b16 %v515
    %v1347 = vunpack.c.l.b16 %v516
    %v1348 = vunpack.c.h.b16 %v516
    %v1349 = vpack.c.b16 %v1223, %v1221
    %v1350 = vpack.c.b16 %v1224, %v1222
    %v1351 = vpack.c.b16 %v1227, %v1225
    %v1352 = vpack.c.b16 %v1228, %v1226
    %v1353 = vpack.c.b16 %v1231, %v1229
    %v1354 = vpack.c.b16 %v1232, %v1230
    %v1355 = vpack.c.b16 %v1235, %v1233
    %v1356 = vpack.c.b16 %v1236, %v1234
    %v1357 = vpack.c.b16 %v1239, %v1237
    %v1358 = vpack.c.b16 %v1240, %v1238
    %v1359 = vpack.c.b16 %v1243, %v1241
    %v1360 = vpack.c.b16 %v1244, %v1242
    %v1361 = vpack.c.b16 %v1247, %v1245
    %v1362 = vpack.c.b16 %v1248, %v1246
    %v1363 = vpack.c.b16 %v1251, %v1249
    %v1364 = vpack.c.b16 %v1252, %v1250
    %v1365 = vpack.c.b16 %v1255, %v1253
    %v1366 = vpack.c.b16 %v1256, %v1254
    %v1367 = vpack.c.b16 %v1259, %v1257
    %v1368 = vpack.c.b16 %v1260, %v1258
    %v1369 = vpack.c.b16 %v1263, %v1261
    %v1370 = vpack.c.b16 %v1264, %v1262
    %v1371 = vpack.c.b16 %v1267, %v1265
    %v1372 = vpack.c.b16 %v1268, %v1266
    %v1373 = vpack.c.b16 %v1271, %v1269
    %v1374 = vpack.c.b16 %v1272, %v1270
    %v1375 = vpack.c.b16 %v1275, %v1273
    %v1376 = vpack.c.b16 %v1276, %v1274
    %v1377 = vpack.c.b16 %v1279, %v1277
    %v1378 = vpack.c.b16 %v1280, %v1278
    %v1379 = vpack.c.b16 %v1283, %v1281
    %v1380 = vpack.c.b16 %v1284, %v1282
    %v1381 = vpack.c.b16 %v1287, %v1285
    %v1382 = vpack.c.b16 %v1288, %v1286
    %v1383 = vpack.c.b16 %v1291, %v1289
    %v1384 = vpack.c.b16 %v1292, %v1290
    %v1385 = vpack.c.b16 %v1295, %v1293
    %v1386 = vpack.c.b16 %v1296, %v1294
    %v1387 = vpack.c.b16 %v1299, %v1297
    %v1388 = vpack.c.b16 %v1300, %v1298
    %v1389 = vpack.c.b16 %v1303, %v1301
    %v1390 = vpack.c.b16 %v1304, %v1302
    %v1391 = vpack.c.b16 %v1307, %v1305
    %v1392 = vpack.c.b16 %v1308, %v1306
    %v1393 = vpack.c.b16 %v1311, %v1309
    %v1394 = vpack.c.b16 %v1312, %v1310
    %v1395 = vpack.c.b16 %v1315, %v1313
    %v1396 = vpack.c.b16 %v1316, %v1314
    %v1397 = vpack.c.b16 %v1319, %v1317
    %v1398 = vpack.c.b16 %v1320, %v1318
    %v1399 = vpack.c.b16 %v1323, %v1321
    %v1400 = vpack.c.b16 %v1324, %v1322
    %v1401 = vpack.c.b16 %v1327, %v1325
    %v1402 = vpack.c.b16 %v1328, %v1326
    %v1403 = vpack.c.b16 %v1331, %v1329
    %v1404 = vpack.c.b16 %v1332, %v1330
    %v1405 = vpack.c.b16 %v1335, %v1333
    %v1406 = vpack.c.b16 %v1336, %v1334
    %v1407 = vpack.c.b16 %v1339, %v1337
    %v1408 = vpack.c.b16 %v1340, %v1338
    %v1409 = vpack.c.b16 %v1343, %v1341
    %v1410 = vpack.c.b16 %v1344, %v1342
    %v1411 = vpack.c.b16 %v1347, %v1345
    %v1412 = vpack.c.b16 %v1348, %v1346
    %1477 = vmatpush.bf16.msra.mxu0 %v1363
    %1478 = vmatpush.bf16.msra.mxu0 %v1361
    %1479 = vmatpush.bf16.msra.mxu0 %v1359
    %1480 = vmatpush.bf16.msra.mxu0 %v1357
    %1481 = vmatpush.bf16.msra.mxu0 %v1355
    %1482 = vmatpush.bf16.msra.mxu0 %v1353
    %1483 = vmatpush.bf16.msra.mxu0 %v1351
    %1484 = vmatpush.bf16.msra.mxu0 %v1349
    %1485 = vmatmul.bf16.gmra.mxu0 %v901
    %v1486 = vpop.f32.mrf.mxu0
    %v1487 = vadd.f32 0.0, %v1486
    %v1488 = vpop.f32.mrf.mxu0
    %v1489 = vadd.f32 0.0, %v1488
    %1490 = vmatmul.bf16.gmra.mxu0 %v905
    %v1491 = vpop.f32.mrf.mxu0
    %v1492 = vadd.f32 0.0, %v1491
    %v1493 = vpop.f32.mrf.mxu0
    %v1494 = vadd.f32 0.0, %v1493
    %1495 = vmatmul.bf16.gmra.mxu0 %v909
    %v1496 = vpop.f32.mrf.mxu0
    %v1497 = vadd.f32 0.0, %v1496
    %v1498 = vpop.f32.mrf.mxu0
    %v1499 = vadd.f32 0.0, %v1498
    %1500 = vmatmul.bf16.gmra.mxu0 %v913
    %v1501 = vpop.f32.mrf.mxu0
    %v1502 = vadd.f32 0.0, %v1501
    %v1503 = vpop.f32.mrf.mxu0
    %v1504 = vadd.f32 0.0, %v1503
    %1505 = vmatmul.bf16.gmra.mxu0 %v917
    %v1506 = vpop.f32.mrf.mxu0
    %v1507 = vadd.f32 0.0, %v1506
    %v1508 = vpop.f32.mrf.mxu0
    %v1509 = vadd.f32 0.0, %v1508
    %1510 = vmatmul.bf16.gmra.mxu0 %v921
    %v1511 = vpop.f32.mrf.mxu0
    %v1512 = vadd.f32 0.0, %v1511
    %v1513 = vpop.f32.mrf.mxu0
    %v1514 = vadd.f32 0.0, %v1513
    %1515 = vmatmul.bf16.gmra.mxu0 %v925
    %v1516 = vpop.f32.mrf.mxu0
    %v1517 = vadd.f32 0.0, %v1516
    %v1518 = vpop.f32.mrf.mxu0
    %v1519 = vadd.f32 0.0, %v1518
    %1520 = vmatmul.bf16.gmra.mxu0 %v929
    %v1521 = vpop.f32.mrf.mxu0
    %v1522 = vadd.f32 0.0, %v1521
    %v1523 = vpop.f32.mrf.mxu0
    %v1524 = vadd.f32 0.0, %v1523
    %1525 = vmatmul.bf16.gmra.mxu0 %v933
    %v1526 = vpop.f32.mrf.mxu0
    %v1527 = vadd.f32 0.0, %v1526
    %v1528 = vpop.f32.mrf.mxu0
    %v1529 = vadd.f32 0.0, %v1528
    %1530 = vmatmul.bf16.gmra.mxu0 %v937
    %v1531 = vpop.f32.mrf.mxu0
    %v1532 = vadd.f32 0.0, %v1531
    %v1533 = vpop.f32.mrf.mxu0
    %v1534 = vadd.f32 0.0, %v1533
    %1535 = vmatmul.bf16.gmra.mxu0 %v941
    %v1536 = vpop.f32.mrf.mxu0
    %v1537 = vadd.f32 0.0, %v1536
    %v1538 = vpop.f32.mrf.mxu0
    %v1539 = vadd.f32 0.0, %v1538
    %1540 = vmatmul.bf16.gmra.mxu0 %v945
    %v1541 = vpop.f32.mrf.mxu0
    %v1542 = vadd.f32 0.0, %v1541
    %v1543 = vpop.f32.mrf.mxu0
    %v1544 = vadd.f32 0.0, %v1543
    %1545 = vmatmul.bf16.gmra.mxu0 %v949
    %v1546 = vpop.f32.mrf.mxu0
    %v1547 = vadd.f32 0.0, %v1546
    %v1548 = vpop.f32.mrf.mxu0
    %v1549 = vadd.f32 0.0, %v1548
    %1550 = vmatmul.bf16.gmra.mxu0 %v953
    %v1551 = vpop.f32.mrf.mxu0
    %v1552 = vadd.f32 0.0, %v1551
    %v1553 = vpop.f32.mrf.mxu0
    %v1554 = vadd.f32 0.0, %v1553
    %1555 = vmatmul.bf16.gmra.mxu0 %v957
    %v1556 = vpop.f32.mrf.mxu0
    %v1557 = vadd.f32 0.0, %v1556
    %v1558 = vpop.f32.mrf.mxu0
    %v1559 = vadd.f32 0.0, %v1558
    %1560 = vmatmul.bf16.gmra.mxu0 %v961
    %v1561 = vpop.f32.mrf.mxu0
    %v1562 = vadd.f32 0.0, %v1561
    %v1563 = vpop.f32.mrf.mxu0
    %v1564 = vadd.f32 0.0, %v1563
    %1565 = vmatmul.bf16.gmra.mxu0 %v965
    %v1566 = vpop.f32.mrf.mxu0
    %v1567 = vadd.f32 0.0, %v1566
    %v1568 = vpop.f32.mrf.mxu0
    %v1569 = vadd.f32 0.0, %v1568
    %1570 = vmatmul.bf16.gmra.mxu0 %v969
    %v1571 = vpop.f32.mrf.mxu0
    %v1572 = vadd.f32 0.0, %v1571
    %v1573 = vpop.f32.mrf.mxu0
    %v1574 = vadd.f32 0.0, %v1573
    %1575 = vmatmul.bf16.gmra.mxu0 %v973
    %v1576 = vpop.f32.mrf.mxu0
    %v1577 = vadd.f32 0.0, %v1576
    %v1578 = vpop.f32.mrf.mxu0
    %v1579 = vadd.f32 0.0, %v1578
    %1580 = vmatmul.bf16.gmra.mxu0 %v977
    %v1581 = vpop.f32.mrf.mxu0
    %v1582 = vadd.f32 0.0, %v1581
    %v1583 = vpop.f32.mrf.mxu0
    %v1584 = vadd.f32 0.0, %v1583
    %1585 = vmatmul.bf16.gmra.mxu0 %v981
    %v1586 = vpop.f32.mrf.mxu0
    %v1587 = vadd.f32 0.0, %v1586
    %v1588 = vpop.f32.mrf.mxu0
    %v1589 = vadd.f32 0.0, %v1588
    %1590 = vmatmul.bf16.gmra.mxu0 %v985
    %v1591 = vpop.f32.mrf.mxu0
    %v1592 = vadd.f32 0.0, %v1591
    %v1593 = vpop.f32.mrf.mxu0
    %v1594 = vadd.f32 0.0, %v1593
    %1595 = vmatmul.bf16.gmra.mxu0 %v989
    %v1596 = vpop.f32.mrf.mxu0
    %v1597 = vadd.f32 0.0, %v1596
    %v1598 = vpop.f32.mrf.mxu0
    %v1599 = vadd.f32 0.0, %v1598
    %1600 = vmatmul.bf16.gmra.mxu0 %v993
    %v1601 = vpop.f32.mrf.mxu0
    %v1602 = vadd.f32 0.0, %v1601
    %v1603 = vpop.f32.mrf.mxu0
    %v1604 = vadd.f32 0.0, %v1603
    %1605 = vmatmul.bf16.gmra.mxu0 %v997
    %v1606 = vpop.f32.mrf.mxu0
    %v1607 = vadd.f32 0.0, %v1606
    %v1608 = vpop.f32.mrf.mxu0
    %v1609 = vadd.f32 0.0, %v1608
    %1610 = vmatmul.bf16.gmra.mxu0 %v1001
    %v1611 = vpop.f32.mrf.mxu0
    %v1612 = vadd.f32 0.0, %v1611
    %v1613 = vpop.f32.mrf.mxu0
    %v1614 = vadd.f32 0.0, %v1613
    %1615 = vmatmul.bf16.gmra.mxu0 %v1005
    %v1616 = vpop.f32.mrf.mxu0
    %v1617 = vadd.f32 0.0, %v1616
    %v1618 = vpop.f32.mrf.mxu0
    %v1619 = vadd.f32 0.0, %v1618
    %1620 = vmatmul.bf16.gmra.mxu0 %v1009
    %v1621 = vpop.f32.mrf.mxu0
    %v1622 = vadd.f32 0.0, %v1621
    %v1623 = vpop.f32.mrf.mxu0
    %v1624 = vadd.f32 0.0, %v1623
    %1625 = vmatmul.bf16.gmra.mxu0 %v1013
    %v1626 = vpop.f32.mrf.mxu0
    %v1627 = vadd.f32 0.0, %v1626
    %v1628 = vpop.f32.mrf.mxu0
    %v1629 = vadd.f32 0.0, %v1628
    %1630 = vmatmul.bf16.gmra.mxu0 %v1017
    %v1631 = vpop.f32.mrf.mxu0
    %v1632 = vadd.f32 0.0, %v1631
    %v1633 = vpop.f32.mrf.mxu0
    %v1634 = vadd.f32 0.0, %v1633
    %1635 = vmatmul.bf16.gmra.mxu0 %v1021
    %v1636 = vpop.f32.mrf.mxu0
    %v1637 = vadd.f32 0.0, %v1636
    %v1638 = vpop.f32.mrf.mxu0
    %v1639 = vadd.f32 0.0, %v1638
    %1640 = vmatmul.bf16.gmra.mxu0 %v1025
    %v1641 = vpop.f32.mrf.mxu0
    %v1642 = vadd.f32 0.0, %v1641
    %v1643 = vpop.f32.mrf.mxu0
    %v1644 = vadd.f32 0.0, %v1643
    %1645 = vdwg.mxu0
    %1646 = vmatpush.bf16.msra.mxu0 %v1379
    %1647 = vmatpush.bf16.msra.mxu0 %v1377
    %1648 = vmatpush.bf16.msra.mxu0 %v1375
    %1649 = vmatpush.bf16.msra.mxu0 %v1373
    %1650 = vmatpush.bf16.msra.mxu0 %v1371
    %1651 = vmatpush.bf16.msra.mxu0 %v1369
    %1652 = vmatpush.bf16.msra.mxu0 %v1367
    %1653 = vmatpush.bf16.msra.mxu0 %v1365
    %1654 = vmatmul.bf16.gmra.mxu0 %v902
    %v1655 = vpop.f32.mrf.mxu0
    %v1656 = vadd.f32 %v1487, %v1655
    %v1657 = vpop.f32.mrf.mxu0
    %v1658 = vadd.f32 %v1489, %v1657
    %1659 = vmatmul.bf16.gmra.mxu0 %v906
    %v1660 = vpop.f32.mrf.mxu0
    %v1661 = vadd.f32 %v1492, %v1660
    %v1662 = vpop.f32.mrf.mxu0
    %v1663 = vadd.f32 %v1494, %v1662
    %1664 = vmatmul.bf16.gmra.mxu0 %v910
    %v1665 = vpop.f32.mrf.mxu0
    %v1666 = vadd.f32 %v1497, %v1665
    %v1667 = vpop.f32.mrf.mxu0
    %v1668 = vadd.f32 %v1499, %v1667
    %1669 = vmatmul.bf16.gmra.mxu0 %v914
    %v1670 = vpop.f32.mrf.mxu0
    %v1671 = vadd.f32 %v1502, %v1670
    %v1672 = vpop.f32.mrf.mxu0
    %v1673 = vadd.f32 %v1504, %v1672
    %1674 = vmatmul.bf16.gmra.mxu0 %v918
    %v1675 = vpop.f32.mrf.mxu0
    %v1676 = vadd.f32 %v1507, %v1675
    %v1677 = vpop.f32.mrf.mxu0
    %v1678 = vadd.f32 %v1509, %v1677
    %1679 = vmatmul.bf16.gmra.mxu0 %v922
    %v1680 = vpop.f32.mrf.mxu0
    %v1681 = vadd.f32 %v1512, %v1680
    %v1682 = vpop.f32.mrf.mxu0
    %v1683 = vadd.f32 %v1514, %v1682
    %1684 = vmatmul.bf16.gmra.mxu0 %v926
    %v1685 = vpop.f32.mrf.mxu0
    %v1686 = vadd.f32 %v1517, %v1685
    %v1687 = vpop.f32.mrf.mxu0
    %v1688 = vadd.f32 %v1519, %v1687
    %1689 = vmatmul.bf16.gmra.mxu0 %v930
    %v1690 = vpop.f32.mrf.mxu0
    %v1691 = vadd.f32 %v1522, %v1690
    %v1692 = vpop.f32.mrf.mxu0
    %v1693 = vadd.f32 %v1524, %v1692
    %1694 = vmatmul.bf16.gmra.mxu0 %v934
    %v1695 = vpop.f32.mrf.mxu0
    %v1696 = vadd.f32 %v1527, %v1695
    %v1697 = vpop.f32.mrf.mxu0
    %v1698 = vadd.f32 %v1529, %v1697
    %1699 = vmatmul.bf16.gmra.mxu0 %v938
    %v1700 = vpop.f32.mrf.mxu0
    %v1701 = vadd.f32 %v1532, %v1700
    %v1702 = vpop.f32.mrf.mxu0
    %v1703 = vadd.f32 %v1534, %v1702
    %1704 = vmatmul.bf16.gmra.mxu0 %v942
    %v1705 = vpop.f32.mrf.mxu0
    %v1706 = vadd.f32 %v1537, %v1705
    %v1707 = vpop.f32.mrf.mxu0
    %v1708 = vadd.f32 %v1539, %v1707
    %1709 = vmatmul.bf16.gmra.mxu0 %v946
    %v1710 = vpop.f32.mrf.mxu0
    %v1711 = vadd.f32 %v1542, %v1710
    %v1712 = vpop.f32.mrf.mxu0
    %v1713 = vadd.f32 %v1544, %v1712
    %1714 = vmatmul.bf16.gmra.mxu0 %v950
    %v1715 = vpop.f32.mrf.mxu0
    %v1716 = vadd.f32 %v1547, %v1715
    %v1717 = vpop.f32.mrf.mxu0
    %v1718 = vadd.f32 %v1549, %v1717
    %1719 = vmatmul.bf16.gmra.mxu0 %v954
    %v1720 = vpop.f32.mrf.mxu0
    %v1721 = vadd.f32 %v1552, %v1720
    %v1722 = vpop.f32.mrf.mxu0
    %v1723 = vadd.f32 %v1554, %v1722
    %1724 = vmatmul.bf16.gmra.mxu0 %v958
    %v1725 = vpop.f32.mrf.mxu0
    %v1726 = vadd.f32 %v1557, %v1725
    %v1727 = vpop.f32.mrf.mxu0
    %v1728 = vadd.f32 %v1559, %v1727
    %1729 = vmatmul.bf16.gmra.mxu0 %v962
    %v1730 = vpop.f32.mrf.mxu0
    %v1731 = vadd.f32 %v1562, %v1730
    %v1732 = vpop.f32.mrf.mxu0
    %v1733 = vadd.f32 %v1564, %v1732
    %1734 = vmatmul.bf16.gmra.mxu0 %v966
    %v1735 = vpop.f32.mrf.mxu0
    %v1736 = vadd.f32 %v1567, %v1735
    %v1737 = vpop.f32.mrf.mxu0
    %v1738 = vadd.f32 %v1569, %v1737
    %1739 = vmatmul.bf16.gmra.mxu0 %v970
    %v1740 = vpop.f32.mrf.mxu0
    %v1741 = vadd.f32 %v1572, %v1740
    %v1742 = vpop.f32.mrf.mxu0
    %v1743 = vadd.f32 %v1574, %v1742
    %1744 = vmatmul.bf16.gmra.mxu0 %v974
    %v1745 = vpop.f32.mrf.mxu0
    %v1746 = vadd.f32 %v1577, %v1745
    %v1747 = vpop.f32.mrf.mxu0
    %v1748 = vadd.f32 %v1579, %v1747
    %1749 = vmatmul.bf16.gmra.mxu0 %v978
    %v1750 = vpop.f32.mrf.mxu0
    %v1751 = vadd.f32 %v1582, %v1750
    %v1752 = vpop.f32.mrf.mxu0
    %v1753 = vadd.f32 %v1584, %v1752
    %1754 = vmatmul.bf16.gmra.mxu0 %v982
    %v1755 = vpop.f32.mrf.mxu0
    %v1756 = vadd.f32 %v1587, %v1755
    %v1757 = vpop.f32.mrf.mxu0
    %v1758 = vadd.f32 %v1589, %v1757
    %1759 = vmatmul.bf16.gmra.mxu0 %v986
    %v1760 = vpop.f32.mrf.mxu0
    %v1761 = vadd.f32 %v1592, %v1760
    %v1762 = vpop.f32.mrf.mxu0
    %v1763 = vadd.f32 %v1594, %v1762
    %1764 = vmatmul.bf16.gmra.mxu0 %v990
    %v1765 = vpop.f32.mrf.mxu0
    %v1766 = vadd.f32 %v1597, %v1765
    %v1767 = vpop.f32.mrf.mxu0
    %v1768 = vadd.f32 %v1599, %v1767
    %1769 = vmatmul.bf16.gmra.mxu0 %v994
    %v1770 = vpop.f32.mrf.mxu0
    %v1771 = vadd.f32 %v1602, %v1770
    %v1772 = vpop.f32.mrf.mxu0
    %v1773 = vadd.f32 %v1604, %v1772
    %1774 = vmatmul.bf16.gmra.mxu0 %v998
    %v1775 = vpop.f32.mrf.mxu0
    %v1776 = vadd.f32 %v1607, %v1775
    %v1777 = vpop.f32.mrf.mxu0
    %v1778 = vadd.f32 %v1609, %v1777
    %1779 = vmatmul.bf16.gmra.mxu0 %v1002
    %v1780 = vpop.f32.mrf.mxu0
    %v1781 = vadd.f32 %v1612, %v1780
    %v1782 = vpop.f32.mrf.mxu0
    %v1783 = vadd.f32 %v1614, %v1782
    %1784 = vmatmul.bf16.gmra.mxu0 %v1006
    %v1785 = vpop.f32.mrf.mxu0
    %v1786 = vadd.f32 %v1617, %v1785
    %v1787 = vpop.f32.mrf.mxu0
    %v1788 = vadd.f32 %v1619, %v1787
    %1789 = vmatmul.bf16.gmra.mxu0 %v1010
    %v1790 = vpop.f32.mrf.mxu0
    %v1791 = vadd.f32 %v1622, %v1790
    %v1792 = vpop.f32.mrf.mxu0
    %v1793 = vadd.f32 %v1624, %v1792
    %1794 = vmatmul.bf16.gmra.mxu0 %v1014
    %v1795 = vpop.f32.mrf.mxu0
    %v1796 = vadd.f32 %v1627, %v1795
    %v1797 = vpop.f32.mrf.mxu0
    %v1798 = vadd.f32 %v1629, %v1797
    %1799 = vmatmul.bf16.gmra.mxu0 %v1018
    %v1800 = vpop.f32.mrf.mxu0
    %v1801 = vadd.f32 %v1632, %v1800
    %v1802 = vpop.f32.mrf.mxu0
    %v1803 = vadd.f32 %v1634, %v1802
    %1804 = vmatmul.bf16.gmra.mxu0 %v1022
    %v1805 = vpop.f32.mrf.mxu0
    %v1806 = vadd.f32 %v1637, %v1805
    %v1807 = vpop.f32.mrf.mxu0
    %v1808 = vadd.f32 %v1639, %v1807
    %1809 = vmatmul.bf16.gmra.mxu0 %v1026
    %v1810 = vpop.f32.mrf.mxu0
    %v1811 = vadd.f32 %v1642, %v1810
    %v1812 = vpop.f32.mrf.mxu0
    %v1813 = vadd.f32 %v1644, %v1812
    %1814 = vdwg.mxu0
    %1815 = vmatpush.bf16.msra.mxu0 %v1395
    %1816 = vmatpush.bf16.msra.mxu0 %v1393
    %1817 = vmatpush.bf16.msra.mxu0 %v1391
    %1818 = vmatpush.bf16.msra.mxu0 %v1389
    %1819 = vmatpush.bf16.msra.mxu0 %v1387
    %1820 = vmatpush.bf16.msra.mxu0 %v1385
    %1821 = vmatpush.bf16.msra.mxu0 %v1383
    %1822 = vmatpush.bf16.msra.mxu0 %v1381
    %1823 = vmatmul.bf16.gmra.mxu0 %v903
    %v1824 = vpop.f32.mrf.mxu0
    %v1825 = vadd.f32 %v1656, %v1824
    %v1826 = vpop.f32.mrf.mxu0
    %v1827 = vadd.f32 %v1658, %v1826
    %1828 = vmatmul.bf16.gmra.mxu0 %v907
    %v1829 = vpop.f32.mrf.mxu0
    %v1830 = vadd.f32 %v1661, %v1829
    %v1831 = vpop.f32.mrf.mxu0
    %v1832 = vadd.f32 %v1663, %v1831
    %1833 = vmatmul.bf16.gmra.mxu0 %v911
    %v1834 = vpop.f32.mrf.mxu0
    %v1835 = vadd.f32 %v1666, %v1834
    %v1836 = vpop.f32.mrf.mxu0
    %v1837 = vadd.f32 %v1668, %v1836
    %1838 = vmatmul.bf16.gmra.mxu0 %v915
    %v1839 = vpop.f32.mrf.mxu0
    %v1840 = vadd.f32 %v1671, %v1839
    %v1841 = vpop.f32.mrf.mxu0
    %v1842 = vadd.f32 %v1673, %v1841
    %1843 = vmatmul.bf16.gmra.mxu0 %v919
    %v1844 = vpop.f32.mrf.mxu0
    %v1845 = vadd.f32 %v1676, %v1844
    %v1846 = vpop.f32.mrf.mxu0
    %v1847 = vadd.f32 %v1678, %v1846
    %1848 = vmatmul.bf16.gmra.mxu0 %v923
    %v1849 = vpop.f32.mrf.mxu0
    %v1850 = vadd.f32 %v1681, %v1849
    %v1851 = vpop.f32.mrf.mxu0
    %v1852 = vadd.f32 %v1683, %v1851
    %1853 = vmatmul.bf16.gmra.mxu0 %v927
    %v1854 = vpop.f32.mrf.mxu0
    %v1855 = vadd.f32 %v1686, %v1854
    %v1856 = vpop.f32.mrf.mxu0
    %v1857 = vadd.f32 %v1688, %v1856
    %1858 = vmatmul.bf16.gmra.mxu0 %v931
    %v1859 = vpop.f32.mrf.mxu0
    %v1860 = vadd.f32 %v1691, %v1859
    %v1861 = vpop.f32.mrf.mxu0
    %v1862 = vadd.f32 %v1693, %v1861
    %1863 = vmatmul.bf16.gmra.mxu0 %v935
    %v1864 = vpop.f32.mrf.mxu0
    %v1865 = vadd.f32 %v1696, %v1864
    %v1866 = vpop.f32.mrf.mxu0
    %v1867 = vadd.f32 %v1698, %v1866
    %1868 = vmatmul.bf16.gmra.mxu0 %v939
    %v1869 = vpop.f32.mrf.mxu0
    %v1870 = vadd.f32 %v1701, %v1869
    %v1871 = vpop.f32.mrf.mxu0
    %v1872 = vadd.f32 %v1703, %v1871
    %1873 = vmatmul.bf16.gmra.mxu0 %v943
    %v1874 = vpop.f32.mrf.mxu0
    %v1875 = vadd.f32 %v1706, %v1874
    %v1876 = vpop.f32.mrf.mxu0
    %v1877 = vadd.f32 %v1708, %v1876
    %1878 = vmatmul.bf16.gmra.mxu0 %v947
    %v1879 = vpop.f32.mrf.mxu0
    %v1880 = vadd.f32 %v1711, %v1879
    %v1881 = vpop.f32.mrf.mxu0
    %v1882 = vadd.f32 %v1713, %v1881
    %1883 = vmatmul.bf16.gmra.mxu0 %v951
    %v1884 = vpop.f32.mrf.mxu0
    %v1885 = vadd.f32 %v1716, %v1884
    %v1886 = vpop.f32.mrf.mxu0
    %v1887 = vadd.f32 %v1718, %v1886
    %1888 = vmatmul.bf16.gmra.mxu0 %v955
    %v1889 = vpop.f32.mrf.mxu0
    %v1890 = vadd.f32 %v1721, %v1889
    %v1891 = vpop.f32.mrf.mxu0
    %v1892 = vadd.f32 %v1723, %v1891
    %1893 = vmatmul.bf16.gmra.mxu0 %v959
    %v1894 = vpop.f32.mrf.mxu0
    %v1895 = vadd.f32 %v1726, %v1894
    %v1896 = vpop.f32.mrf.mxu0
    %v1897 = vadd.f32 %v1728, %v1896
    %1898 = vmatmul.bf16.gmra.mxu0 %v963
    %v1899 = vpop.f32.mrf.mxu0
    %v1900 = vadd.f32 %v1731, %v1899
    %v1901 = vpop.f32.mrf.mxu0
    %v1902 = vadd.f32 %v1733, %v1901
    %1903 = vmatmul.bf16.gmra.mxu0 %v967
    %v1904 = vpop.f32.mrf.mxu0
    %v1905 = vadd.f32 %v1736, %v1904
    %v1906 = vpop.f32.mrf.mxu0
    %v1907 = vadd.f32 %v1738, %v1906
    %1908 = vmatmul.bf16.gmra.mxu0 %v971
    %v1909 = vpop.f32.mrf.mxu0
    %v1910 = vadd.f32 %v1741, %v1909
    %v1911 = vpop.f32.mrf.mxu0
    %v1912 = vadd.f32 %v1743, %v1911
    %1913 = vmatmul.bf16.gmra.mxu0 %v975
    %v1914 = vpop.f32.mrf.mxu0
    %v1915 = vadd.f32 %v1746, %v1914
    %v1916 = vpop.f32.mrf.mxu0
    %v1917 = vadd.f32 %v1748, %v1916
    %1918 = vmatmul.bf16.gmra.mxu0 %v979
    %v1919 = vpop.f32.mrf.mxu0
    %v1920 = vadd.f32 %v1751, %v1919
    %v1921 = vpop.f32.mrf.mxu0
    %v1922 = vadd.f32 %v1753, %v1921
    %1923 = vmatmul.bf16.gmra.mxu0 %v983
    %v1924 = vpop.f32.mrf.mxu0
    %v1925 = vadd.f32 %v1756, %v1924
    %v1926 = vpop.f32.mrf.mxu0
    %v1927 = vadd.f32 %v1758, %v1926
    %1928 = vmatmul.bf16.gmra.mxu0 %v987
    %v1929 = vpop.f32.mrf.mxu0
    %v1930 = vadd.f32 %v1761, %v1929
    %v1931 = vpop.f32.mrf.mxu0
    %v1932 = vadd.f32 %v1763, %v1931
    %1933 = vmatmul.bf16.gmra.mxu0 %v991
    %v1934 = vpop.f32.mrf.mxu0
    %v1935 = vadd.f32 %v1766, %v1934
    %v1936 = vpop.f32.mrf.mxu0
    %v1937 = vadd.f32 %v1768, %v1936
    %1938 = vmatmul.bf16.gmra.mxu0 %v995
    %v1939 = vpop.f32.mrf.mxu0
    %v1940 = vadd.f32 %v1771, %v1939
    %v1941 = vpop.f32.mrf.mxu0
    %v1942 = vadd.f32 %v1773, %v1941
    %1943 = vmatmul.bf16.gmra.mxu0 %v999
    %v1944 = vpop.f32.mrf.mxu0
    %v1945 = vadd.f32 %v1776, %v1944
    %v1946 = vpop.f32.mrf.mxu0
    %v1947 = vadd.f32 %v1778, %v1946
    %1948 = vmatmul.bf16.gmra.mxu0 %v1003
    %v1949 = vpop.f32.mrf.mxu0
    %v1950 = vadd.f32 %v1781, %v1949
    %v1951 = vpop.f32.mrf.mxu0
    %v1952 = vadd.f32 %v1783, %v1951
    %1953 = vmatmul.bf16.gmra.mxu0 %v1007
    %v1954 = vpop.f32.mrf.mxu0
    %v1955 = vadd.f32 %v1786, %v1954
    %v1956 = vpop.f32.mrf.mxu0
    %v1957 = vadd.f32 %v1788, %v1956
    %1958 = vmatmul.bf16.gmra.mxu0 %v1011
    %v1959 = vpop.f32.mrf.mxu0
    %v1960 = vadd.f32 %v1791, %v1959
    %v1961 = vpop.f32.mrf.mxu0
    %v1962 = vadd.f32 %v1793, %v1961
    %1963 = vmatmul.bf16.gmra.mxu0 %v1015
    %v1964 = vpop.f32.mrf.mxu0
    %v1965 = vadd.f32 %v1796, %v1964
    %v1966 = vpop.f32.mrf.mxu0
    %v1967 = vadd.f32 %v1798, %v1966
    %1968 = vmatmul.bf16.gmra.mxu0 %v1019
    %v1969 = vpop.f32.mrf.mxu0
    %v1970 = vadd.f32 %v1801, %v1969
    %v1971 = vpop.f32.mrf.mxu0
    %v1972 = vadd.f32 %v1803, %v1971
    %1973 = vmatmul.bf16.gmra.mxu0 %v1023
    %v1974 = vpop.f32.mrf.mxu0
    %v1975 = vadd.f32 %v1806, %v1974
    %v1976 = vpop.f32.mrf.mxu0
    %v1977 = vadd.f32 %v1808, %v1976
    %1978 = vmatmul.bf16.gmra.mxu0 %v1027
    %v1979 = vpop.f32.mrf.mxu0
    %v1980 = vadd.f32 %v1811, %v1979
    %v1981 = vpop.f32.mrf.mxu0
    %v1982 = vadd.f32 %v1813, %v1981
    %1983 = vdwg.mxu0
    %1984 = vmatpush.bf16.msra.mxu0 %v1411
    %1985 = vmatpush.bf16.msra.mxu0 %v1409
    %1986 = vmatpush.bf16.msra.mxu0 %v1407
    %1987 = vmatpush.bf16.msra.mxu0 %v1405
    %1988 = vmatpush.bf16.msra.mxu0 %v1403
    %1989 = vmatpush.bf16.msra.mxu0 %v1401
    %1990 = vmatpush.bf16.msra.mxu0 %v1399
    %1991 = vmatpush.bf16.msra.mxu0 %v1397
    %1992 = vmatmul.bf16.gmra.mxu0 %v904
    %v1993 = vpop.f32.mrf.mxu0
    %v1994 = vadd.f32 %v1825, %v1993
    %v1995 = vpop.f32.mrf.mxu0
    %v1996 = vadd.f32 %v1827, %v1995
    %1997 = vmatmul.bf16.gmra.mxu0 %v908
    %v1998 = vpop.f32.mrf.mxu0
    %v1999 = vadd.f32 %v1830, %v1998
    %v2000 = vpop.f32.mrf.mxu0
    %v2001 = vadd.f32 %v1832, %v2000
    %2002 = vmatmul.bf16.gmra.mxu0 %v912
    %v2003 = vpop.f32.mrf.mxu0
    %v2004 = vadd.f32 %v1835, %v2003
    %v2005 = vpop.f32.mrf.mxu0
    %v2006 = vadd.f32 %v1837, %v2005
    %2007 = vmatmul.bf16.gmra.mxu0 %v916
    %v2008 = vpop.f32.mrf.mxu0
    %v2009 = vadd.f32 %v1840, %v2008
    %v2010 = vpop.f32.mrf.mxu0
    %v2011 = vadd.f32 %v1842, %v2010
    %2012 = vmatmul.bf16.gmra.mxu0 %v920
    %v2013 = vpop.f32.mrf.mxu0
    %v2014 = vadd.f32 %v1845, %v2013
    %v2015 = vpop.f32.mrf.mxu0
    %v2016 = vadd.f32 %v1847, %v2015
    %2017 = vmatmul.bf16.gmra.mxu0 %v924
    %v2018 = vpop.f32.mrf.mxu0
    %v2019 = vadd.f32 %v1850, %v2018
    %v2020 = vpop.f32.mrf.mxu0
    %v2021 = vadd.f32 %v1852, %v2020
    %2022 = vmatmul.bf16.gmra.mxu0 %v928
    %v2023 = vpop.f32.mrf.mxu0
    %v2024 = vadd.f32 %v1855, %v2023
    %v2025 = vpop.f32.mrf.mxu0
    %v2026 = vadd.f32 %v1857, %v2025
    %2027 = vmatmul.bf16.gmra.mxu0 %v932
    %v2028 = vpop.f32.mrf.mxu0
    %v2029 = vadd.f32 %v1860, %v2028
    %v2030 = vpop.f32.mrf.mxu0
    %v2031 = vadd.f32 %v1862, %v2030
    %2032 = vmatmul.bf16.gmra.mxu0 %v936
    %v2033 = vpop.f32.mrf.mxu0
    %v2034 = vadd.f32 %v1865, %v2033
    %v2035 = vpop.f32.mrf.mxu0
    %v2036 = vadd.f32 %v1867, %v2035
    %2037 = vmatmul.bf16.gmra.mxu0 %v940
    %v2038 = vpop.f32.mrf.mxu0
    %v2039 = vadd.f32 %v1870, %v2038
    %v2040 = vpop.f32.mrf.mxu0
    %v2041 = vadd.f32 %v1872, %v2040
    %2042 = vmatmul.bf16.gmra.mxu0 %v944
    %v2043 = vpop.f32.mrf.mxu0
    %v2044 = vadd.f32 %v1875, %v2043
    %v2045 = vpop.f32.mrf.mxu0
    %v2046 = vadd.f32 %v1877, %v2045
    %2047 = vmatmul.bf16.gmra.mxu0 %v948
    %v2048 = vpop.f32.mrf.mxu0
    %v2049 = vadd.f32 %v1880, %v2048
    %v2050 = vpop.f32.mrf.mxu0
    %v2051 = vadd.f32 %v1882, %v2050
    %2052 = vmatmul.bf16.gmra.mxu0 %v952
    %v2053 = vpop.f32.mrf.mxu0
    %v2054 = vadd.f32 %v1885, %v2053
    %v2055 = vpop.f32.mrf.mxu0
    %v2056 = vadd.f32 %v1887, %v2055
    %2057 = vmatmul.bf16.gmra.mxu0 %v956
    %v2058 = vpop.f32.mrf.mxu0
    %v2059 = vadd.f32 %v1890, %v2058
    %v2060 = vpop.f32.mrf.mxu0
    %v2061 = vadd.f32 %v1892, %v2060
    %2062 = vmatmul.bf16.gmra.mxu0 %v960
    %v2063 = vpop.f32.mrf.mxu0
    %v2064 = vadd.f32 %v1895, %v2063
    %v2065 = vpop.f32.mrf.mxu0
    %v2066 = vadd.f32 %v1897, %v2065
    %2067 = vmatmul.bf16.gmra.mxu0 %v964
    %v2068 = vpop.f32.mrf.mxu0
    %v2069 = vadd.f32 %v1900, %v2068
    %v2070 = vpop.f32.mrf.mxu0
    %v2071 = vadd.f32 %v1902, %v2070
    %2072 = vmatmul.bf16.gmra.mxu0 %v968
    %v2073 = vpop.f32.mrf.mxu0
    %v2074 = vadd.f32 %v1905, %v2073
    %v2075 = vpop.f32.mrf.mxu0
    %v2076 = vadd.f32 %v1907, %v2075
    %2077 = vmatmul.bf16.gmra.mxu0 %v972
    %v2078 = vpop.f32.mrf.mxu0
    %v2079 = vadd.f32 %v1910, %v2078
    %v2080 = vpop.f32.mrf.mxu0
    %v2081 = vadd.f32 %v1912, %v2080
    %2082 = vmatmul.bf16.gmra.mxu0 %v976
    %v2083 = vpop.f32.mrf.mxu0
    %v2084 = vadd.f32 %v1915, %v2083
    %v2085 = vpop.f32.mrf.mxu0
    %v2086 = vadd.f32 %v1917, %v2085
    %2087 = vmatmul.bf16.gmra.mxu0 %v980
    %v2088 = vpop.f32.mrf.mxu0
    %v2089 = vadd.f32 %v1920, %v2088
    %v2090 = vpop.f32.mrf.mxu0
    %v2091 = vadd.f32 %v1922, %v2090
    %2092 = vmatmul.bf16.gmra.mxu0 %v984
    %v2093 = vpop.f32.mrf.mxu0
    %v2094 = vadd.f32 %v1925, %v2093
    %v2095 = vpop.f32.mrf.mxu0
    %v2096 = vadd.f32 %v1927, %v2095
    %2097 = vmatmul.bf16.gmra.mxu0 %v988
    %v2098 = vpop.f32.mrf.mxu0
    %v2099 = vadd.f32 %v1930, %v2098
    %v2100 = vpop.f32.mrf.mxu0
    %v2101 = vadd.f32 %v1932, %v2100
    %2102 = vmatmul.bf16.gmra.mxu0 %v992
    %v2103 = vpop.f32.mrf.mxu0
    %v2104 = vadd.f32 %v1935, %v2103
    %v2105 = vpop.f32.mrf.mxu0
    %v2106 = vadd.f32 %v1937, %v2105
    %2107 = vmatmul.bf16.gmra.mxu0 %v996
    %v2108 = vpop.f32.mrf.mxu0
    %v2109 = vadd.f32 %v1940, %v2108
    %v2110 = vpop.f32.mrf.mxu0
    %v2111 = vadd.f32 %v1942, %v2110
    %2112 = vmatmul.bf16.gmra.mxu0 %v1000
    %v2113 = vpop.f32.mrf.mxu0
    %v2114 = vadd.f32 %v1945, %v2113
    %v2115 = vpop.f32.mrf.mxu0
    %v2116 = vadd.f32 %v1947, %v2115
    %2117 = vmatmul.bf16.gmra.mxu0 %v1004
    %v2118 = vpop.f32.mrf.mxu0
    %v2119 = vadd.f32 %v1950, %v2118
    %v2120 = vpop.f32.mrf.mxu0
    %v2121 = vadd.f32 %v1952, %v2120
    %2122 = vmatmul.bf16.gmra.mxu0 %v1008
    %v2123 = vpop.f32.mrf.mxu0
    %v2124 = vadd.f32 %v1955, %v2123
    %v2125 = vpop.f32.mrf.mxu0
    %v2126 = vadd.f32 %v1957, %v2125
    %2127 = vmatmul.bf16.gmra.mxu0 %v1012
    %v2128 = vpop.f32.mrf.mxu0
    %v2129 = vadd.f32 %v1960, %v2128
    %v2130 = vpop.f32.mrf.mxu0
    %v2131 = vadd.f32 %v1962, %v2130
    %2132 = vmatmul.bf16.gmra.mxu0 %v1016
    %v2133 = vpop.f32.mrf.mxu0
    %v2134 = vadd.f32 %v1965, %v2133
    %v2135 = vpop.f32.mrf.mxu0
    %v2136 = vadd.f32 %v1967, %v2135
    %2137 = vmatmul.bf16.gmra.mxu0 %v1020
    %v2138 = vpop.f32.mrf.mxu0
    %v2139 = vadd.f32 %v1970, %v2138
    %v2140 = vpop.f32.mrf.mxu0
    %v2141 = vadd.f32 %v1972, %v2140
    %2142 = vmatmul.bf16.gmra.mxu0 %v1024
    %v2143 = vpop.f32.mrf.mxu0
    %v2144 = vadd.f32 %v1975, %v2143
    %v2145 = vpop.f32.mrf.mxu0
    %v2146 = vadd.f32 %v1977, %v2145
    %2147 = vmatmul.bf16.gmra.mxu0 %v1028
    %v2148 = vpop.f32.mrf.mxu0
    %v2149 = vadd.f32 %v1980, %v2148
    %v2150 = vpop.f32.mrf.mxu0
    %v2151 = vadd.f32 %v1982, %v2150
    %2152 = vdwg.mxu0
    %2153 = vmatpush.bf16.msra.mxu0 %v1364
    %2154 = vmatpush.bf16.msra.mxu0 %v1362
    %2155 = vmatpush.bf16.msra.mxu0 %v1360
    %2156 = vmatpush.bf16.msra.mxu0 %v1358
    %2157 = vmatpush.bf16.msra.mxu0 %v1356
    %2158 = vmatpush.bf16.msra.mxu0 %v1354
    %2159 = vmatpush.bf16.msra.mxu0 %v1352
    %2160 = vmatpush.bf16.msra.mxu0 %v1350
    %2161 = vmatmul.bf16.gmra.mxu0 %v901
    %v2162 = vpop.f32.mrf.mxu0
    %v2163 = vadd.f32 0.0, %v2162
    %v2164 = vpop.f32.mrf.mxu0
    %v2165 = vadd.f32 0.0, %v2164
    %2166 = vmatmul.bf16.gmra.mxu0 %v905
    %v2167 = vpop.f32.mrf.mxu0
    %v2168 = vadd.f32 0.0, %v2167
    %v2169 = vpop.f32.mrf.mxu0
    %v2170 = vadd.f32 0.0, %v2169
    %2171 = vmatmul.bf16.gmra.mxu0 %v909
    %v2172 = vpop.f32.mrf.mxu0
    %v2173 = vadd.f32 0.0, %v2172
    %v2174 = vpop.f32.mrf.mxu0
    %v2175 = vadd.f32 0.0, %v2174
    %2176 = vmatmul.bf16.gmra.mxu0 %v913
    %v2177 = vpop.f32.mrf.mxu0
    %v2178 = vadd.f32 0.0, %v2177
    %v2179 = vpop.f32.mrf.mxu0
    %v2180 = vadd.f32 0.0, %v2179
    %2181 = vmatmul.bf16.gmra.mxu0 %v917
    %v2182 = vpop.f32.mrf.mxu0
    %v2183 = vadd.f32 0.0, %v2182
    %v2184 = vpop.f32.mrf.mxu0
    %v2185 = vadd.f32 0.0, %v2184
    %2186 = vmatmul.bf16.gmra.mxu0 %v921
    %v2187 = vpop.f32.mrf.mxu0
    %v2188 = vadd.f32 0.0, %v2187
    %v2189 = vpop.f32.mrf.mxu0
    %v2190 = vadd.f32 0.0, %v2189
    %2191 = vmatmul.bf16.gmra.mxu0 %v925
    %v2192 = vpop.f32.mrf.mxu0
    %v2193 = vadd.f32 0.0, %v2192
    %v2194 = vpop.f32.mrf.mxu0
    %v2195 = vadd.f32 0.0, %v2194
    %2196 = vmatmul.bf16.gmra.mxu0 %v929
    %v2197 = vpop.f32.mrf.mxu0
    %v2198 = vadd.f32 0.0, %v2197
    %v2199 = vpop.f32.mrf.mxu0
    %v2200 = vadd.f32 0.0, %v2199
    %2201 = vmatmul.bf16.gmra.mxu0 %v933
    %v2202 = vpop.f32.mrf.mxu0
    %v2203 = vadd.f32 0.0, %v2202
    %v2204 = vpop.f32.mrf.mxu0
    %v2205 = vadd.f32 0.0, %v2204
    %2206 = vmatmul.bf16.gmra.mxu0 %v937
    %v2207 = vpop.f32.mrf.mxu0
    %v2208 = vadd.f32 0.0, %v2207
    %v2209 = vpop.f32.mrf.mxu0
    %v2210 = vadd.f32 0.0, %v2209
    %2211 = vmatmul.bf16.gmra.mxu0 %v941
    %v2212 = vpop.f32.mrf.mxu0
    %v2213 = vadd.f32 0.0, %v2212
    %v2214 = vpop.f32.mrf.mxu0
    %v2215 = vadd.f32 0.0, %v2214
    %2216 = vmatmul.bf16.gmra.mxu0 %v945
    %v2217 = vpop.f32.mrf.mxu0
    %v2218 = vadd.f32 0.0, %v2217
    %v2219 = vpop.f32.mrf.mxu0
    %v2220 = vadd.f32 0.0, %v2219
    %2221 = vmatmul.bf16.gmra.mxu0 %v949
    %v2222 = vpop.f32.mrf.mxu0
    %v2223 = vadd.f32 0.0, %v2222
    %v2224 = vpop.f32.mrf.mxu0
    %v2225 = vadd.f32 0.0, %v2224
    %2226 = vmatmul.bf16.gmra.mxu0 %v953
    %v2227 = vpop.f32.mrf.mxu0
    %v2228 = vadd.f32 0.0, %v2227
    %v2229 = vpop.f32.mrf.mxu0
    %v2230 = vadd.f32 0.0, %v2229
    %2231 = vmatmul.bf16.gmra.mxu0 %v957
    %v2232 = vpop.f32.mrf.mxu0
    %v2233 = vadd.f32 0.0, %v2232
    %v2234 = vpop.f32.mrf.mxu0
    %v2235 = vadd.f32 0.0, %v2234
    %2236 = vmatmul.bf16.gmra.mxu0 %v961
    %v2237 = vpop.f32.mrf.mxu0
    %v2238 = vadd.f32 0.0, %v2237
    %v2239 = vpop.f32.mrf.mxu0
    %v2240 = vadd.f32 0.0, %v2239
    %2241 = vmatmul.bf16.gmra.mxu0 %v965
    %v2242 = vpop.f32.mrf.mxu0
    %v2243 = vadd.f32 0.0, %v2242
    %v2244 = vpop.f32.mrf.mxu0
    %v2245 = vadd.f32 0.0, %v2244
    %2246 = vmatmul.bf16.gmra.mxu0 %v969
    %v2247 = vpop.f32.mrf.mxu0
    %v2248 = vadd.f32 0.0, %v2247
    %v2249 = vpop.f32.mrf.mxu0
    %v2250 = vadd.f32 0.0, %v2249
    %2251 = vmatmul.bf16.gmra.mxu0 %v973
    %v2252 = vpop.f32.mrf.mxu0
    %v2253 = vadd.f32 0.0, %v2252
    %v2254 = vpop.f32.mrf.mxu0
    %v2255 = vadd.f32 0.0, %v2254
    %2256 = vmatmul.bf16.gmra.mxu0 %v977
    %v2257 = vpop.f32.mrf.mxu0
    %v2258 = vadd.f32 0.0, %v2257
    %v2259 = vpop.f32.mrf.mxu0
    %v2260 = vadd.f32 0.0, %v2259
    %2261 = vmatmul.bf16.gmra.mxu0 %v981
    %v2262 = vpop.f32.mrf.mxu0
    %v2263 = vadd.f32 0.0, %v2262
    %v2264 = vpop.f32.mrf.mxu0
    %v2265 = vadd.f32 0.0, %v2264
    %2266 = vmatmul.bf16.gmra.mxu0 %v985
    %v2267 = vpop.f32.mrf.mxu0
    %v2268 = vadd.f32 0.0, %v2267
    %v2269 = vpop.f32.mrf.mxu0
    %v2270 = vadd.f32 0.0, %v2269
    %2271 = vmatmul.bf16.gmra.mxu0 %v989
    %v2272 = vpop.f32.mrf.mxu0
    %v2273 = vadd.f32 0.0, %v2272
    %v2274 = vpop.f32.mrf.mxu0
    %v2275 = vadd.f32 0.0, %v2274
    %2276 = vmatmul.bf16.gmra.mxu0 %v993
    %v2277 = vpop.f32.mrf.mxu0
    %v2278 = vadd.f32 0.0, %v2277
    %v2279 = vpop.f32.mrf.mxu0
    %v2280 = vadd.f32 0.0, %v2279
    %2281 = vmatmul.bf16.gmra.mxu0 %v997
    %v2282 = vpop.f32.mrf.mxu0
    %v2283 = vadd.f32 0.0, %v2282
    %v2284 = vpop.f32.mrf.mxu0
    %v2285 = vadd.f32 0.0, %v2284
    %2286 = vmatmul.bf16.gmra.mxu0 %v1001
    %v2287 = vpop.f32.mrf.mxu0
    %v2288 = vadd.f32 0.0, %v2287
    %v2289 = vpop.f32.mrf.mxu0
    %v2290 = vadd.f32 0.0, %v2289
    %2291 = vmatmul.bf16.gmra.mxu0 %v1005
    %v2292 = vpop.f32.mrf.mxu0
    %v2293 = vadd.f32 0.0, %v2292
    %v2294 = vpop.f32.mrf.mxu0
    %v2295 = vadd.f32 0.0, %v2294
    %2296 = vmatmul.bf16.gmra.mxu0 %v1009
    %v2297 = vpop.f32.mrf.mxu0
    %v2298 = vadd.f32 0.0, %v2297
    %v2299 = vpop.f32.mrf.mxu0
    %v2300 = vadd.f32 0.0, %v2299
    %2301 = vmatmul.bf16.gmra.mxu0 %v1013
    %v2302 = vpop.f32.mrf.mxu0
    %v2303 = vadd.f32 0.0, %v2302
    %v2304 = vpop.f32.mrf.mxu0
    %v2305 = vadd.f32 0.0, %v2304
    %2306 = vmatmul.bf16.gmra.mxu0 %v1017
    %v2307 = vpop.f32.mrf.mxu0
    %v2308 = vadd.f32 0.0, %v2307
    %v2309 = vpop.f32.mrf.mxu0
    %v2310 = vadd.f32 0.0, %v2309
    %2311 = vmatmul.bf16.gmra.mxu0 %v1021
    %v2312 = vpop.f32.mrf.mxu0
    %v2313 = vadd.f32 0.0, %v2312
    %v2314 = vpop.f32.mrf.mxu0
    %v2315 = vadd.f32 0.0, %v2314
    %2316 = vmatmul.bf16.gmra.mxu0 %v1025
    %v2317 = vpop.f32.mrf.mxu0
    %v2318 = vadd.f32 0.0, %v2317
    %v2319 = vpop.f32.mrf.mxu0
    %v2320 = vadd.f32 0.0, %v2319
    %2321 = vdwg.mxu0
    %2322 = vmatpush.bf16.msra.mxu0 %v1380
    %2323 = vmatpush.bf16.msra.mxu0 %v1378
    %2324 = vmatpush.bf16.msra.mxu0 %v1376
    %2325 = vmatpush.bf16.msra.mxu0 %v1374
    %2326 = vmatpush.bf16.msra.mxu0 %v1372
    %2327 = vmatpush.bf16.msra.mxu0 %v1370
    %2328 = vmatpush.bf16.msra.mxu0 %v1368
    %2329 = vmatpush.bf16.msra.mxu0 %v1366
    %2330 = vmatmul.bf16.gmra.mxu0 %v902
    %v2331 = vpop.f32.mrf.mxu0
    %v2332 = vadd.f32 %v2163, %v2331
    %v2333 = vpop.f32.mrf.mxu0
    %v2334 = vadd.f32 %v2165, %v2333
    %2335 = vmatmul.bf16.gmra.mxu0 %v906
    %v2336 = vpop.f32.mrf.mxu0
    %v2337 = vadd.f32 %v2168, %v2336
    %v2338 = vpop.f32.mrf.mxu0
    %v2339 = vadd.f32 %v2170, %v2338
    %2340 = vmatmul.bf16.gmra.mxu0 %v910
    %v2341 = vpop.f32.mrf.mxu0
    %v2342 = vadd.f32 %v2173, %v2341
    %v2343 = vpop.f32.mrf.mxu0
    %v2344 = vadd.f32 %v2175, %v2343
    %2345 = vmatmul.bf16.gmra.mxu0 %v914
    %v2346 = vpop.f32.mrf.mxu0
    %v2347 = vadd.f32 %v2178, %v2346
    %v2348 = vpop.f32.mrf.mxu0
    %v2349 = vadd.f32 %v2180, %v2348
    %2350 = vmatmul.bf16.gmra.mxu0 %v918
    %v2351 = vpop.f32.mrf.mxu0
    %v2352 = vadd.f32 %v2183, %v2351
    %v2353 = vpop.f32.mrf.mxu0
    %v2354 = vadd.f32 %v2185, %v2353
    %2355 = vmatmul.bf16.gmra.mxu0 %v922
    %v2356 = vpop.f32.mrf.mxu0
    %v2357 = vadd.f32 %v2188, %v2356
    %v2358 = vpop.f32.mrf.mxu0
    %v2359 = vadd.f32 %v2190, %v2358
    %2360 = vmatmul.bf16.gmra.mxu0 %v926
    %v2361 = vpop.f32.mrf.mxu0
    %v2362 = vadd.f32 %v2193, %v2361
    %v2363 = vpop.f32.mrf.mxu0
    %v2364 = vadd.f32 %v2195, %v2363
    %2365 = vmatmul.bf16.gmra.mxu0 %v930
    %v2366 = vpop.f32.mrf.mxu0
    %v2367 = vadd.f32 %v2198, %v2366
    %v2368 = vpop.f32.mrf.mxu0
    %v2369 = vadd.f32 %v2200, %v2368
    %2370 = vmatmul.bf16.gmra.mxu0 %v934
    %v2371 = vpop.f32.mrf.mxu0
    %v2372 = vadd.f32 %v2203, %v2371
    %v2373 = vpop.f32.mrf.mxu0
    %v2374 = vadd.f32 %v2205, %v2373
    %2375 = vmatmul.bf16.gmra.mxu0 %v938
    %v2376 = vpop.f32.mrf.mxu0
    %v2377 = vadd.f32 %v2208, %v2376
    %v2378 = vpop.f32.mrf.mxu0
    %v2379 = vadd.f32 %v2210, %v2378
    %2380 = vmatmul.bf16.gmra.mxu0 %v942
    %v2381 = vpop.f32.mrf.mxu0
    %v2382 = vadd.f32 %v2213, %v2381
    %v2383 = vpop.f32.mrf.mxu0
    %v2384 = vadd.f32 %v2215, %v2383
    %2385 = vmatmul.bf16.gmra.mxu0 %v946
    %v2386 = vpop.f32.mrf.mxu0
    %v2387 = vadd.f32 %v2218, %v2386
    %v2388 = vpop.f32.mrf.mxu0
    %v2389 = vadd.f32 %v2220, %v2388
    %2390 = vmatmul.bf16.gmra.mxu0 %v950
    %v2391 = vpop.f32.mrf.mxu0
    %v2392 = vadd.f32 %v2223, %v2391
    %v2393 = vpop.f32.mrf.mxu0
    %v2394 = vadd.f32 %v2225, %v2393
    %2395 = vmatmul.bf16.gmra.mxu0 %v954
    %v2396 = vpop.f32.mrf.mxu0
    %v2397 = vadd.f32 %v2228, %v2396
    %v2398 = vpop.f32.mrf.mxu0
    %v2399 = vadd.f32 %v2230, %v2398
    %2400 = vmatmul.bf16.gmra.mxu0 %v958
    %v2401 = vpop.f32.mrf.mxu0
    %v2402 = vadd.f32 %v2233, %v2401
    %v2403 = vpop.f32.mrf.mxu0
    %v2404 = vadd.f32 %v2235, %v2403
    %2405 = vmatmul.bf16.gmra.mxu0 %v962
    %v2406 = vpop.f32.mrf.mxu0
    %v2407 = vadd.f32 %v2238, %v2406
    %v2408 = vpop.f32.mrf.mxu0
    %v2409 = vadd.f32 %v2240, %v2408
    %2410 = vmatmul.bf16.gmra.mxu0 %v966
    %v2411 = vpop.f32.mrf.mxu0
    %v2412 = vadd.f32 %v2243, %v2411
    %v2413 = vpop.f32.mrf.mxu0
    %v2414 = vadd.f32 %v2245, %v2413
    %2415 = vmatmul.bf16.gmra.mxu0 %v970
    %v2416 = vpop.f32.mrf.mxu0
    %v2417 = vadd.f32 %v2248, %v2416
    %v2418 = vpop.f32.mrf.mxu0
    %v2419 = vadd.f32 %v2250, %v2418
    %2420 = vmatmul.bf16.gmra.mxu0 %v974
    %v2421 = vpop.f32.mrf.mxu0
    %v2422 = vadd.f32 %v2253, %v2421
    %v2423 = vpop.f32.mrf.mxu0
    %v2424 = vadd.f32 %v2255, %v2423
    %2425 = vmatmul.bf16.gmra.mxu0 %v978
    %v2426 = vpop.f32.mrf.mxu0
    %v2427 = vadd.f32 %v2258, %v2426
    %v2428 = vpop.f32.mrf.mxu0
    %v2429 = vadd.f32 %v2260, %v2428
    %2430 = vmatmul.bf16.gmra.mxu0 %v982
    %v2431 = vpop.f32.mrf.mxu0
    %v2432 = vadd.f32 %v2263, %v2431
    %v2433 = vpop.f32.mrf.mxu0
    %v2434 = vadd.f32 %v2265, %v2433
    %2435 = vmatmul.bf16.gmra.mxu0 %v986
    %v2436 = vpop.f32.mrf.mxu0
    %v2437 = vadd.f32 %v2268, %v2436
    %v2438 = vpop.f32.mrf.mxu0
    %v2439 = vadd.f32 %v2270, %v2438
    %2440 = vmatmul.bf16.gmra.mxu0 %v990
    %v2441 = vpop.f32.mrf.mxu0
    %v2442 = vadd.f32 %v2273, %v2441
    %v2443 = vpop.f32.mrf.mxu0
    %v2444 = vadd.f32 %v2275, %v2443
    %2445 = vmatmul.bf16.gmra.mxu0 %v994
    %v2446 = vpop.f32.mrf.mxu0
    %v2447 = vadd.f32 %v2278, %v2446
    %v2448 = vpop.f32.mrf.mxu0
    %v2449 = vadd.f32 %v2280, %v2448
    %2450 = vmatmul.bf16.gmra.mxu0 %v998
    %v2451 = vpop.f32.mrf.mxu0
    %v2452 = vadd.f32 %v2283, %v2451
    %v2453 = vpop.f32.mrf.mxu0
    %v2454 = vadd.f32 %v2285, %v2453
    %2455 = vmatmul.bf16.gmra.mxu0 %v1002
    %v2456 = vpop.f32.mrf.mxu0
    %v2457 = vadd.f32 %v2288, %v2456
    %v2458 = vpop.f32.mrf.mxu0
    %v2459 = vadd.f32 %v2290, %v2458
    %2460 = vmatmul.bf16.gmra.mxu0 %v1006
    %v2461 = vpop.f32.mrf.mxu0
    %v2462 = vadd.f32 %v2293, %v2461
    %v2463 = vpop.f32.mrf.mxu0
    %v2464 = vadd.f32 %v2295, %v2463
    %2465 = vmatmul.bf16.gmra.mxu0 %v1010
    %v2466 = vpop.f32.mrf.mxu0
    %v2467 = vadd.f32 %v2298, %v2466
    %v2468 = vpop.f32.mrf.mxu0
    %v2469 = vadd.f32 %v2300, %v2468
    %2470 = vmatmul.bf16.gmra.mxu0 %v1014
    %v2471 = vpop.f32.mrf.mxu0
    %v2472 = vadd.f32 %v2303, %v2471
    %v2473 = vpop.f32.mrf.mxu0
    %v2474 = vadd.f32 %v2305, %v2473
    %2475 = vmatmul.bf16.gmra.mxu0 %v1018
    %v2476 = vpop.f32.mrf.mxu0
    %v2477 = vadd.f32 %v2308, %v2476
    %v2478 = vpop.f32.mrf.mxu0
    %v2479 = vadd.f32 %v2310, %v2478
    %2480 = vmatmul.bf16.gmra.mxu0 %v1022
    %v2481 = vpop.f32.mrf.mxu0
    %v2482 = vadd.f32 %v2313, %v2481
    %v2483 = vpop.f32.mrf.mxu0
    %v2484 = vadd.f32 %v2315, %v2483
    %2485 = vmatmul.bf16.gmra.mxu0 %v1026
    %v2486 = vpop.f32.mrf.mxu0
    %v2487 = vadd.f32 %v2318, %v2486
    %v2488 = vpop.f32.mrf.mxu0
    %v2489 = vadd.f32 %v2320, %v2488
    %2490 = vdwg.mxu0
    %2491 = vmatpush.bf16.msra.mxu0 %v1396
    %2492 = vmatpush.bf16.msra.mxu0 %v1394
    %2493 = vmatpush.bf16.msra.mxu0 %v1392
    %2494 = vmatpush.bf16.msra.mxu0 %v1390
    %2495 = vmatpush.bf16.msra.mxu0 %v1388
    %2496 = vmatpush.bf16.msra.mxu0 %v1386
    %2497 = vmatpush.bf16.msra.mxu0 %v1384
    %2498 = vmatpush.bf16.msra.mxu0 %v1382
    %2499 = vmatmul.bf16.gmra.mxu0 %v903
    %v2500 = vpop.f32.mrf.mxu0
    %v2501 = vadd.f32 %v2332, %v2500
    %v2502 = vpop.f32.mrf.mxu0
    %v2503 = vadd.f32 %v2334, %v2502
    %2504 = vmatmul.bf16.gmra.mxu0 %v907
    %v2505 = vpop.f32.mrf.mxu0
    %v2506 = vadd.f32 %v2337, %v2505
    %v2507 = vpop.f32.mrf.mxu0
    %v2508 = vadd.f32 %v2339, %v2507
    %2509 = vmatmul.bf16.gmra.mxu0 %v911
    %v2510 = vpop.f32.mrf.mxu0
    %v2511 = vadd.f32 %v2342, %v2510
    %v2512 = vpop.f32.mrf.mxu0
    %v2513 = vadd.f32 %v2344, %v2512
    %2514 = vmatmul.bf16.gmra.mxu0 %v915
    %v2515 = vpop.f32.mrf.mxu0
    %v2516 = vadd.f32 %v2347, %v2515
    %v2517 = vpop.f32.mrf.mxu0
    %v2518 = vadd.f32 %v2349, %v2517
    %2519 = vmatmul.bf16.gmra.mxu0 %v919
    %v2520 = vpop.f32.mrf.mxu0
    %v2521 = vadd.f32 %v2352, %v2520
    %v2522 = vpop.f32.mrf.mxu0
    %v2523 = vadd.f32 %v2354, %v2522
    %2524 = vmatmul.bf16.gmra.mxu0 %v923
    %v2525 = vpop.f32.mrf.mxu0
    %v2526 = vadd.f32 %v2357, %v2525
    %v2527 = vpop.f32.mrf.mxu0
    %v2528 = vadd.f32 %v2359, %v2527
    %2529 = vmatmul.bf16.gmra.mxu0 %v927
    %v2530 = vpop.f32.mrf.mxu0
    %v2531 = vadd.f32 %v2362, %v2530
    %v2532 = vpop.f32.mrf.mxu0
    %v2533 = vadd.f32 %v2364, %v2532
    %2534 = vmatmul.bf16.gmra.mxu0 %v931
    %v2535 = vpop.f32.mrf.mxu0
    %v2536 = vadd.f32 %v2367, %v2535
    %v2537 = vpop.f32.mrf.mxu0
    %v2538 = vadd.f32 %v2369, %v2537
    %2539 = vmatmul.bf16.gmra.mxu0 %v935
    %v2540 = vpop.f32.mrf.mxu0
    %v2541 = vadd.f32 %v2372, %v2540
    %v2542 = vpop.f32.mrf.mxu0
    %v2543 = vadd.f32 %v2374, %v2542
    %2544 = vmatmul.bf16.gmra.mxu0 %v939
    %v2545 = vpop.f32.mrf.mxu0
    %v2546 = vadd.f32 %v2377, %v2545
    %v2547 = vpop.f32.mrf.mxu0
    %v2548 = vadd.f32 %v2379, %v2547
    %2549 = vmatmul.bf16.gmra.mxu0 %v943
    %v2550 = vpop.f32.mrf.mxu0
    %v2551 = vadd.f32 %v2382, %v2550
    %v2552 = vpop.f32.mrf.mxu0
    %v2553 = vadd.f32 %v2384, %v2552
    %2554 = vmatmul.bf16.gmra.mxu0 %v947
    %v2555 = vpop.f32.mrf.mxu0
    %v2556 = vadd.f32 %v2387, %v2555
    %v2557 = vpop.f32.mrf.mxu0
    %v2558 = vadd.f32 %v2389, %v2557
    %2559 = vmatmul.bf16.gmra.mxu0 %v951
    %v2560 = vpop.f32.mrf.mxu0
    %v2561 = vadd.f32 %v2392, %v2560
    %v2562 = vpop.f32.mrf.mxu0
    %v2563 = vadd.f32 %v2394, %v2562
    %2564 = vmatmul.bf16.gmra.mxu0 %v955
    %v2565 = vpop.f32.mrf.mxu0
    %v2566 = vadd.f32 %v2397, %v2565
    %v2567 = vpop.f32.mrf.mxu0
    %v2568 = vadd.f32 %v2399, %v2567
    %2569 = vmatmul.bf16.gmra.mxu0 %v959
    %v2570 = vpop.f32.mrf.mxu0
    %v2571 = vadd.f32 %v2402, %v2570
    %v2572 = vpop.f32.mrf.mxu0
    %v2573 = vadd.f32 %v2404, %v2572
    %2574 = vmatmul.bf16.gmra.mxu0 %v963
    %v2575 = vpop.f32.mrf.mxu0
    %v2576 = vadd.f32 %v2407, %v2575
    %v2577 = vpop.f32.mrf.mxu0
    %v2578 = vadd.f32 %v2409, %v2577
    %2579 = vmatmul.bf16.gmra.mxu0 %v967
    %v2580 = vpop.f32.mrf.mxu0
    %v2581 = vadd.f32 %v2412, %v2580
    %v2582 = vpop.f32.mrf.mxu0
    %v2583 = vadd.f32 %v2414, %v2582
    %2584 = vmatmul.bf16.gmra.mxu0 %v971
    %v2585 = vpop.f32.mrf.mxu0
    %v2586 = vadd.f32 %v2417, %v2585
    %v2587 = vpop.f32.mrf.mxu0
    %v2588 = vadd.f32 %v2419, %v2587
    %2589 = vmatmul.bf16.gmra.mxu0 %v975
    %v2590 = vpop.f32.mrf.mxu0
    %v2591 = vadd.f32 %v2422, %v2590
    %v2592 = vpop.f32.mrf.mxu0
    %v2593 = vadd.f32 %v2424, %v2592
    %2594 = vmatmul.bf16.gmra.mxu0 %v979
    %v2595 = vpop.f32.mrf.mxu0
    %v2596 = vadd.f32 %v2427, %v2595
    %v2597 = vpop.f32.mrf.mxu0
    %v2598 = vadd.f32 %v2429, %v2597
    %2599 = vmatmul.bf16.gmra.mxu0 %v983
    %v2600 = vpop.f32.mrf.mxu0
    %v2601 = vadd.f32 %v2432, %v2600
    %v2602 = vpop.f32.mrf.mxu0
    %v2603 = vadd.f32 %v2434, %v2602
    %2604 = vmatmul.bf16.gmra.mxu0 %v987
    %v2605 = vpop.f32.mrf.mxu0
    %v2606 = vadd.f32 %v2437, %v2605
    %v2607 = vpop.f32.mrf.mxu0
    %v2608 = vadd.f32 %v2439, %v2607
    %2609 = vmatmul.bf16.gmra.mxu0 %v991
    %v2610 = vpop.f32.mrf.mxu0
    %v2611 = vadd.f32 %v2442, %v2610
    %v2612 = vpop.f32.mrf.mxu0
    %v2613 = vadd.f32 %v2444, %v2612
    %2614 = vmatmul.bf16.gmra.mxu0 %v995
    %v2615 = vpop.f32.mrf.mxu0
    %v2616 = vadd.f32 %v2447, %v2615
    %v2617 = vpop.f32.mrf.mxu0
    %v2618 = vadd.f32 %v2449, %v2617
    %2619 = vmatmul.bf16.gmra.mxu0 %v999
    %v2620 = vpop.f32.mrf.mxu0
    %v2621 = vadd.f32 %v2452, %v2620
    %v2622 = vpop.f32.mrf.mxu0
    %v2623 = vadd.f32 %v2454, %v2622
    %2624 = vmatmul.bf16.gmra.mxu0 %v1003
    %v2625 = vpop.f32.mrf.mxu0
    %v2626 = vadd.f32 %v2457, %v2625
    %v2627 = vpop.f32.mrf.mxu0
    %v2628 = vadd.f32 %v2459, %v2627
    %2629 = vmatmul.bf16.gmra.mxu0 %v1007
    %v2630 = vpop.f32.mrf.mxu0
    %v2631 = vadd.f32 %v2462, %v2630
    %v2632 = vpop.f32.mrf.mxu0
    %v2633 = vadd.f32 %v2464, %v2632
    %2634 = vmatmul.bf16.gmra.mxu0 %v1011
    %v2635 = vpop.f32.mrf.mxu0
    %v2636 = vadd.f32 %v2467, %v2635
    %v2637 = vpop.f32.mrf.mxu0
    %v2638 = vadd.f32 %v2469, %v2637
    %2639 = vmatmul.bf16.gmra.mxu0 %v1015
    %v2640 = vpop.f32.mrf.mxu0
    %v2641 = vadd.f32 %v2472, %v2640
    %v2642 = vpop.f32.mrf.mxu0
    %v2643 = vadd.f32 %v2474, %v2642
    %2644 = vmatmul.bf16.gmra.mxu0 %v1019
    %v2645 = vpop.f32.mrf.mxu0
    %v2646 = vadd.f32 %v2477, %v2645
    %v2647 = vpop.f32.mrf.mxu0
    %v2648 = vadd.f32 %v2479, %v2647
    %2649 = vmatmul.bf16.gmra.mxu0 %v1023
    %v2650 = vpop.f32.mrf.mxu0
    %v2651 = vadd.f32 %v2482, %v2650
    %v2652 = vpop.f32.mrf.mxu0
    %v2653 = vadd.f32 %v2484, %v2652
    %2654 = vmatmul.bf16.gmra.mxu0 %v1027
    %v2655 = vpop.f32.mrf.mxu0
    %v2656 = vadd.f32 %v2487, %v2655
    %v2657 = vpop.f32.mrf.mxu0
    %v2658 = vadd.f32 %v2489, %v2657
    %2659 = vdwg.mxu0
    %2660 = vmatpush.bf16.msra.mxu0 %v1412
    %2661 = vmatpush.bf16.msra.mxu0 %v1410
    %2662 = vmatpush.bf16.msra.mxu0 %v1408
    %2663 = vmatpush.bf16.msra.mxu0 %v1406
    %2664 = vmatpush.bf16.msra.mxu0 %v1404
    %2665 = vmatpush.bf16.msra.mxu0 %v1402
    %2666 = vmatpush.bf16.msra.mxu0 %v1400
    %2667 = vmatpush.bf16.msra.mxu0 %v1398
    %2668 = vmatmul.bf16.gmra.mxu0 %v904
    %v2669 = vpop.f32.mrf.mxu0
    %v2670 = vadd.f32 %v2501, %v2669
    %v2671 = vpop.f32.mrf.mxu0
    %v2672 = vadd.f32 %v2503, %v2671
    %2673 = vmatmul.bf16.gmra.mxu0 %v908
    %v2674 = vpop.f32.mrf.mxu0
    %v2675 = vadd.f32 %v2506, %v2674
    %v2676 = vpop.f32.mrf.mxu0
    %v2677 = vadd.f32 %v2508, %v2676
    %2678 = vmatmul.bf16.gmra.mxu0 %v912
    %v2679 = vpop.f32.mrf.mxu0
    %v2680 = vadd.f32 %v2511, %v2679
    %v2681 = vpop.f32.mrf.mxu0
    %v2682 = vadd.f32 %v2513, %v2681
    %2683 = vmatmul.bf16.gmra.mxu0 %v916
    %v2684 = vpop.f32.mrf.mxu0
    %v2685 = vadd.f32 %v2516, %v2684
    %v2686 = vpop.f32.mrf.mxu0
    %v2687 = vadd.f32 %v2518, %v2686
    %2688 = vmatmul.bf16.gmra.mxu0 %v920
    %v2689 = vpop.f32.mrf.mxu0
    %v2690 = vadd.f32 %v2521, %v2689
    %v2691 = vpop.f32.mrf.mxu0
    %v2692 = vadd.f32 %v2523, %v2691
    %2693 = vmatmul.bf16.gmra.mxu0 %v924
    %v2694 = vpop.f32.mrf.mxu0
    %v2695 = vadd.f32 %v2526, %v2694
    %v2696 = vpop.f32.mrf.mxu0
    %v2697 = vadd.f32 %v2528, %v2696
    %2698 = vmatmul.bf16.gmra.mxu0 %v928
    %v2699 = vpop.f32.mrf.mxu0
    %v2700 = vadd.f32 %v2531, %v2699
    %v2701 = vpop.f32.mrf.mxu0
    %v2702 = vadd.f32 %v2533, %v2701
    %2703 = vmatmul.bf16.gmra.mxu0 %v932
    %v2704 = vpop.f32.mrf.mxu0
    %v2705 = vadd.f32 %v2536, %v2704
    %v2706 = vpop.f32.mrf.mxu0
    %v2707 = vadd.f32 %v2538, %v2706
    %2708 = vmatmul.bf16.gmra.mxu0 %v936
    %v2709 = vpop.f32.mrf.mxu0
    %v2710 = vadd.f32 %v2541, %v2709
    %v2711 = vpop.f32.mrf.mxu0
    %v2712 = vadd.f32 %v2543, %v2711
    %2713 = vmatmul.bf16.gmra.mxu0 %v940
    %v2714 = vpop.f32.mrf.mxu0
    %v2715 = vadd.f32 %v2546, %v2714
    %v2716 = vpop.f32.mrf.mxu0
    %v2717 = vadd.f32 %v2548, %v2716
    %2718 = vmatmul.bf16.gmra.mxu0 %v944
    %v2719 = vpop.f32.mrf.mxu0
    %v2720 = vadd.f32 %v2551, %v2719
    %v2721 = vpop.f32.mrf.mxu0
    %v2722 = vadd.f32 %v2553, %v2721
    %2723 = vmatmul.bf16.gmra.mxu0 %v948
    %v2724 = vpop.f32.mrf.mxu0
    %v2725 = vadd.f32 %v2556, %v2724
    %v2726 = vpop.f32.mrf.mxu0
    %v2727 = vadd.f32 %v2558, %v2726
    %2728 = vmatmul.bf16.gmra.mxu0 %v952
    %v2729 = vpop.f32.mrf.mxu0
    %v2730 = vadd.f32 %v2561, %v2729
    %v2731 = vpop.f32.mrf.mxu0
    %v2732 = vadd.f32 %v2563, %v2731
    %2733 = vmatmul.bf16.gmra.mxu0 %v956
    %v2734 = vpop.f32.mrf.mxu0
    %v2735 = vadd.f32 %v2566, %v2734
    %v2736 = vpop.f32.mrf.mxu0
    %v2737 = vadd.f32 %v2568, %v2736
    %2738 = vmatmul.bf16.gmra.mxu0 %v960
    %v2739 = vpop.f32.mrf.mxu0
    %v2740 = vadd.f32 %v2571, %v2739
    %v2741 = vpop.f32.mrf.mxu0
    %v2742 = vadd.f32 %v2573, %v2741
    %2743 = vmatmul.bf16.gmra.mxu0 %v964
    %v2744 = vpop.f32.mrf.mxu0
    %v2745 = vadd.f32 %v2576, %v2744
    %v2746 = vpop.f32.mrf.mxu0
    %v2747 = vadd.f32 %v2578, %v2746
    %2748 = vmatmul.bf16.gmra.mxu0 %v968
    %v2749 = vpop.f32.mrf.mxu0
    %v2750 = vadd.f32 %v2581, %v2749
    %v2751 = vpop.f32.mrf.mxu0
    %v2752 = vadd.f32 %v2583, %v2751
    %2753 = vmatmul.bf16.gmra.mxu0 %v972
    %v2754 = vpop.f32.mrf.mxu0
    %v2755 = vadd.f32 %v2586, %v2754
    %v2756 = vpop.f32.mrf.mxu0
    %v2757 = vadd.f32 %v2588, %v2756
    %2758 = vmatmul.bf16.gmra.mxu0 %v976
    %v2759 = vpop.f32.mrf.mxu0
    %v2760 = vadd.f32 %v2591, %v2759
    %v2761 = vpop.f32.mrf.mxu0
    %v2762 = vadd.f32 %v2593, %v2761
    %2763 = vmatmul.bf16.gmra.mxu0 %v980
    %v2764 = vpop.f32.mrf.mxu0
    %v2765 = vadd.f32 %v2596, %v2764
    %v2766 = vpop.f32.mrf.mxu0
    %v2767 = vadd.f32 %v2598, %v2766
    %2768 = vmatmul.bf16.gmra.mxu0 %v984
    %v2769 = vpop.f32.mrf.mxu0
    %v2770 = vadd.f32 %v2601, %v2769
    %v2771 = vpop.f32.mrf.mxu0
    %v2772 = vadd.f32 %v2603, %v2771
    %2773 = vmatmul.bf16.gmra.mxu0 %v988
    %v2774 = vpop.f32.mrf.mxu0
    %v2775 = vadd.f32 %v2606, %v2774
    %v2776 = vpop.f32.mrf.mxu0
    %v2777 = vadd.f32 %v2608, %v2776
    %2778 = vmatmul.bf16.gmra.mxu0 %v992
    %v2779 = vpop.f32.mrf.mxu0
    %v2780 = vadd.f32 %v2611, %v2779
    %v2781 = vpop.f32.mrf.mxu0
    %v2782 = vadd.f32 %v2613, %v2781
    %2783 = vmatmul.bf16.gmra.mxu0 %v996
    %v2784 = vpop.f32.mrf.mxu0
    %v2785 = vadd.f32 %v2616, %v2784
    %v2786 = vpop.f32.mrf.mxu0
    %v2787 = vadd.f32 %v2618, %v2786
    %2788 = vmatmul.bf16.gmra.mxu0 %v1000
    %v2789 = vpop.f32.mrf.mxu0
    %v2790 = vadd.f32 %v2621, %v2789
    %v2791 = vpop.f32.mrf.mxu0
    %v2792 = vadd.f32 %v2623, %v2791
    %2793 = vmatmul.bf16.gmra.mxu0 %v1004
    %v2794 = vpop.f32.mrf.mxu0
    %v2795 = vadd.f32 %v2626, %v2794
    %v2796 = vpop.f32.mrf.mxu0
    %v2797 = vadd.f32 %v2628, %v2796
    %2798 = vmatmul.bf16.gmra.mxu0 %v1008
    %v2799 = vpop.f32.mrf.mxu0
    %v2800 = vadd.f32 %v2631, %v2799
    %v2801 = vpop.f32.mrf.mxu0
    %v2802 = vadd.f32 %v2633, %v2801
    %2803 = vmatmul.bf16.gmra.mxu0 %v1012
    %v2804 = vpop.f32.mrf.mxu0
    %v2805 = vadd.f32 %v2636, %v2804
    %v2806 = vpop.f32.mrf.mxu0
    %v2807 = vadd.f32 %v2638, %v2806
    %2808 = vmatmul.bf16.gmra.mxu0 %v1016
    %v2809 = vpop.f32.mrf.mxu0
    %v2810 = vadd.f32 %v2641, %v2809
    %v2811 = vpop.f32.mrf.mxu0
    %v2812 = vadd.f32 %v2643, %v2811
    %2813 = vmatmul.bf16.gmra.mxu0 %v1020
    %v2814 = vpop.f32.mrf.mxu0
    %v2815 = vadd.f32 %v2646, %v2814
    %v2816 = vpop.f32.mrf.mxu0
    %v2817 = vadd.f32 %v2648, %v2816
    %2818 = vmatmul.bf16.gmra.mxu0 %v1024
    %v2819 = vpop.f32.mrf.mxu0
    %v2820 = vadd.f32 %v2651, %v2819
    %v2821 = vpop.f32.mrf.mxu0
    %v2822 = vadd.f32 %v2653, %v2821
    %2823 = vmatmul.bf16.gmra.mxu0 %v1028
    %v2824 = vpop.f32.mrf.mxu0
    %v2825 = vadd.f32 %v2656, %v2824
    %v2826 = vpop.f32.mrf.mxu0
    %v2827 = vadd.f32 %v2658, %v2826
    %2828 = vdwg.mxu0
    %v2829 = vadd.f32 %v197, %v1994
    %v2830 = vadd.f32 %v198, %v2670
    %v2831 = vadd.f32 %v199, %v1996
    %v2832 = vadd.f32 %v200, %v2672
    %v2833 = vadd.f32 %v201, %v1999
    %v2834 = vadd.f32 %v202, %v2675
    %v2835 = vadd.f32 %v203, %v2001
    %v2836 = vadd.f32 %v204, %v2677
    %v2837 = vadd.f32 %v205, %v2004
    %v2838 = vadd.f32 %v206, %v2680
    %v2839 = vadd.f32 %v207, %v2006
    %v2840 = vadd.f32 %v208, %v2682
    %v2841 = vadd.f32 %v209, %v2009
    %v2842 = vadd.f32 %v210, %v2685
    %v2843 = vadd.f32 %v211, %v2011
    %v2844 = vadd.f32 %v212, %v2687
    %v2845 = vadd.f32 %v213, %v2014
    %v2846 = vadd.f32 %v214, %v2690
    %v2847 = vadd.f32 %v215, %v2016
    %v2848 = vadd.f32 %v216, %v2692
    %v2849 = vadd.f32 %v217, %v2019
    %v2850 = vadd.f32 %v218, %v2695
    %v2851 = vadd.f32 %v219, %v2021
    %v2852 = vadd.f32 %v220, %v2697
    %v2853 = vadd.f32 %v221, %v2024
    %v2854 = vadd.f32 %v222, %v2700
    %v2855 = vadd.f32 %v223, %v2026
    %v2856 = vadd.f32 %v224, %v2702
    %v2857 = vadd.f32 %v225, %v2029
    %v2858 = vadd.f32 %v226, %v2705
    %v2859 = vadd.f32 %v227, %v2031
    %v2860 = vadd.f32 %v228, %v2707
    %v2861 = vadd.f32 %v229, %v2034
    %v2862 = vadd.f32 %v230, %v2710
    %v2863 = vadd.f32 %v231, %v2036
    %v2864 = vadd.f32 %v232, %v2712
    %v2865 = vadd.f32 %v233, %v2039
    %v2866 = vadd.f32 %v234, %v2715
    %v2867 = vadd.f32 %v235, %v2041
    %v2868 = vadd.f32 %v236, %v2717
    %v2869 = vadd.f32 %v237, %v2044
    %v2870 = vadd.f32 %v238, %v2720
    %v2871 = vadd.f32 %v239, %v2046
    %v2872 = vadd.f32 %v240, %v2722
    %v2873 = vadd.f32 %v241, %v2049
    %v2874 = vadd.f32 %v242, %v2725
    %v2875 = vadd.f32 %v243, %v2051
    %v2876 = vadd.f32 %v244, %v2727
    %v2877 = vadd.f32 %v245, %v2054
    %v2878 = vadd.f32 %v246, %v2730
    %v2879 = vadd.f32 %v247, %v2056
    %v2880 = vadd.f32 %v248, %v2732
    %v2881 = vadd.f32 %v249, %v2059
    %v2882 = vadd.f32 %v250, %v2735
    %v2883 = vadd.f32 %v251, %v2061
    %v2884 = vadd.f32 %v252, %v2737
    %v2885 = vadd.f32 %v253, %v2064
    %v2886 = vadd.f32 %v254, %v2740
    %v2887 = vadd.f32 %v255, %v2066
    %v2888 = vadd.f32 %v256, %v2742
    %v2889 = vadd.f32 %v257, %v2069
    %v2890 = vadd.f32 %v258, %v2745
    %v2891 = vadd.f32 %v259, %v2071
    %v2892 = vadd.f32 %v260, %v2747
    %v2893 = vadd.f32 %v261, %v2074
    %v2894 = vadd.f32 %v262, %v2750
    %v2895 = vadd.f32 %v263, %v2076
    %v2896 = vadd.f32 %v264, %v2752
    %v2897 = vadd.f32 %v265, %v2079
    %v2898 = vadd.f32 %v266, %v2755
    %v2899 = vadd.f32 %v267, %v2081
    %v2900 = vadd.f32 %v268, %v2757
    %v2901 = vadd.f32 %v269, %v2084
    %v2902 = vadd.f32 %v270, %v2760
    %v2903 = vadd.f32 %v271, %v2086
    %v2904 = vadd.f32 %v272, %v2762
    %v2905 = vadd.f32 %v273, %v2089
    %v2906 = vadd.f32 %v274, %v2765
    %v2907 = vadd.f32 %v275, %v2091
    %v2908 = vadd.f32 %v276, %v2767
    %v2909 = vadd.f32 %v277, %v2094
    %v2910 = vadd.f32 %v278, %v2770
    %v2911 = vadd.f32 %v279, %v2096
    %v2912 = vadd.f32 %v280, %v2772
    %v2913 = vadd.f32 %v281, %v2099
    %v2914 = vadd.f32 %v282, %v2775
    %v2915 = vadd.f32 %v283, %v2101
    %v2916 = vadd.f32 %v284, %v2777
    %v2917 = vadd.f32 %v285, %v2104
    %v2918 = vadd.f32 %v286, %v2780
    %v2919 = vadd.f32 %v287, %v2106
    %v2920 = vadd.f32 %v288, %v2782
    %v2921 = vadd.f32 %v289, %v2109
    %v2922 = vadd.f32 %v290, %v2785
    %v2923 = vadd.f32 %v291, %v2111
    %v2924 = vadd.f32 %v292, %v2787
    %v2925 = vadd.f32 %v293, %v2114
    %v2926 = vadd.f32 %v294, %v2790
    %v2927 = vadd.f32 %v295, %v2116
    %v2928 = vadd.f32 %v296, %v2792
    %v2929 = vadd.f32 %v297, %v2119
    %v2930 = vadd.f32 %v298, %v2795
    %v2931 = vadd.f32 %v299, %v2121
    %v2932 = vadd.f32 %v300, %v2797
    %v2933 = vadd.f32 %v301, %v2124
    %v2934 = vadd.f32 %v302, %v2800
    %v2935 = vadd.f32 %v303, %v2126
    %v2936 = vadd.f32 %v304, %v2802
    %v2937 = vadd.f32 %v305, %v2129
    %v2938 = vadd.f32 %v306, %v2805
    %v2939 = vadd.f32 %v307, %v2131
    %v2940 = vadd.f32 %v308, %v2807
    %v2941 = vadd.f32 %v309, %v2134
    %v2942 = vadd.f32 %v310, %v2810
    %v2943 = vadd.f32 %v311, %v2136
    %v2944 = vadd.f32 %v312, %v2812
    %v2945 = vadd.f32 %v313, %v2139
    %v2946 = vadd.f32 %v314, %v2815
    %v2947 = vadd.f32 %v315, %v2141
    %v2948 = vadd.f32 %v316, %v2817
    %v2949 = vadd.f32 %v317, %v2144
    %v2950 = vadd.f32 %v318, %v2820
    %v2951 = vadd.f32 %v319, %v2146
    %v2952 = vadd.f32 %v320, %v2822
    %v2953 = vadd.f32 %v321, %v2149
    %v2954 = vadd.f32 %v322, %v2825
    %v2955 = vadd.f32 %v323, %v2151
    %v2956 = vadd.f32 %v324, %v2827
    %2957 = vst [vmem:[#allocation2] sm:$0xff] %v2829
    %2958 = vst [vmem:[#allocation2 + $0x8] sm:$0xff] %v2830
    %2959 = vst [vmem:[#allocation2 + $0x10] sm:$0xff] %v2831
    %2960 = vst [vmem:[#allocation2 + $0x18] sm:$0xff] %v2832
    %2961 = vst [vmem:[#allocation2 + $0x20] sm:$0xff] %v2833
    %2962 = vst [vmem:[#allocation2 + $0x28] sm:$0xff] %v2834
    %2963 = vst [vmem:[#allocation2 + $0x30] sm:$0xff] %v2835
    %2964 = vst [vmem:[#allocation2 + $0x38] sm:$0xff] %v2836
    %2965 = vst [vmem:[#allocation2 + $0x40] sm:$0xff] %v2837
    %2966 = vst [vmem:[#allocation2 + $0x48] sm:$0xff] %v2838
    %2967 = vst [vmem:[#allocation2 + $0x50] sm:$0xff] %v2839
    %2968 = vst [vmem:[#allocation2 + $0x58] sm:$0xff] %v2840
    %2969 = vst [vmem:[#allocation2 + $0x60] sm:$0xff] %v2841
    %2970 = vst [vmem:[#allocation2 + $0x68] sm:$0xff] %v2842
    %2971 = vst [vmem:[#allocation2 + $0x70] sm:$0xff] %v2843
    %2972 = vst [vmem:[#allocation2 + $0x78] sm:$0xff] %v2844
    %2973 = vst [vmem:[#allocation2 + $0x80] sm:$0xff] %v2845
    %2974 = vst [vmem:[#allocation2 + $0x88] sm:$0xff] %v2846
    %2975 = vst [vmem:[#allocation2 + $0x90] sm:$0xff] %v2847
    %2976 = vst [vmem:[#allocation2 + $0x98] sm:$0xff] %v2848
    %2977 = vst [vmem:[#allocation2 + $0xa0] sm:$0xff] %v2849
    %2978 = vst [vmem:[#allocation2 + $0xa8] sm:$0xff] %v2850
    %2979 = vst [vmem:[#allocation2 + $0xb0] sm:$0xff] %v2851
    %2980 = vst [vmem:[#allocation2 + $0xb8] sm:$0xff] %v2852
    %2981 = vst [vmem:[#allocation2 + $0xc0] sm:$0xff] %v2853
    %2982 = vst [vmem:[#allocation2 + $0xc8] sm:$0xff] %v2854
    %2983 = vst [vmem:[#allocation2 + $0xd0] sm:$0xff] %v2855
    %2984 = vst [vmem:[#allocation2 + $0xd8] sm:$0xff] %v2856
    %2985 = vst [vmem:[#allocation2 + $0xe0] sm:$0xff] %v2857
    %2986 = vst [vmem:[#allocation2 + $0xe8] sm:$0xff] %v2858
    %2987 = vst [vmem:[#allocation2 + $0xf0] sm:$0xff] %v2859
    %2988 = vst [vmem:[#allocation2 + $0xf8] sm:$0xff] %v2860
    %2989 = vst [vmem:[#allocation2 + $0x100] sm:$0xff] %v2861
    %2990 = vst [vmem:[#allocation2 + $0x108] sm:$0xff] %v2862
    %2991 = vst [vmem:[#allocation2 + $0x110] sm:$0xff] %v2863
    %2992 = vst [vmem:[#allocation2 + $0x118] sm:$0xff] %v2864
    %2993 = vst [vmem:[#allocation2 + $0x120] sm:$0xff] %v2865
    %2994 = vst [vmem:[#allocation2 + $0x128] sm:$0xff] %v2866
    %2995 = vst [vmem:[#allocation2 + $0x130] sm:$0xff] %v2867
    %2996 = vst [vmem:[#allocation2 + $0x138] sm:$0xff] %v2868
    %2997 = vst [vmem:[#allocation2 + $0x140] sm:$0xff] %v2869
    %2998 = vst [vmem:[#allocation2 + $0x148] sm:$0xff] %v2870
    %2999 = vst [vmem:[#allocation2 + $0x150] sm:$0xff] %v2871
    %3000 = vst [vmem:[#allocation2 + $0x158] sm:$0xff] %v2872
    %3001 = vst [vmem:[#allocation2 + $0x160] sm:$0xff] %v2873
    %3002 = vst [vmem:[#allocation2 + $0x168] sm:$0xff] %v2874
    %3003 = vst [vmem:[#allocation2 + $0x170] sm:$0xff] %v2875
    %3004 = vst [vmem:[#allocation2 + $0x178] sm:$0xff] %v2876
    %3005 = vst [vmem:[#allocation2 + $0x180] sm:$0xff] %v2877
    %3006 = vst [vmem:[#allocation2 + $0x188] sm:$0xff] %v2878
    %3007 = vst [vmem:[#allocation2 + $0x190] sm:$0xff] %v2879
    %3008 = vst [vmem:[#allocation2 + $0x198] sm:$0xff] %v2880
    %3009 = vst [vmem:[#allocation2 + $0x1a0] sm:$0xff] %v2881
    %3010 = vst [vmem:[#allocation2 + $0x1a8] sm:$0xff] %v2882
    %3011 = vst [vmem:[#allocation2 + $0x1b0] sm:$0xff] %v2883
    %3012 = vst [vmem:[#allocation2 + $0x1b8] sm:$0xff] %v2884
    %3013 = vst [vmem:[#allocation2 + $0x1c0] sm:$0xff] %v2885
    %3014 = vst [vmem:[#allocation2 + $0x1c8] sm:$0xff] %v2886
    %3015 = vst [vmem:[#allocation2 + $0x1d0] sm:$0xff] %v2887
    %3016 = vst [vmem:[#allocation2 + $0x1d8] sm:$0xff] %v2888
    %3017 = vst [vmem:[#allocation2 + $0x1e0] sm:$0xff] %v2889
    %3018 = vst [vmem:[#allocation2 + $0x1e8] sm:$0xff] %v2890
    %3019 = vst [vmem:[#allocation2 + $0x1f0] sm:$0xff] %v2891
    %3020 = vst [vmem:[#allocation2 + $0x1f8] sm:$0xff] %v2892
    %3021 = vst [vmem:[#allocation2 + $0x200] sm:$0xff] %v2893
    %3022 = vst [vmem:[#allocation2 + $0x208] sm:$0xff] %v2894
    %3023 = vst [vmem:[#allocation2 + $0x210] sm:$0xff] %v2895
    %3024 = vst [vmem:[#allocation2 + $0x218] sm:$0xff] %v2896
    %3025 = vst [vmem:[#allocation2 + $0x220] sm:$0xff] %v2897
    %3026 = vst [vmem:[#allocation2 + $0x228] sm:$0xff] %v2898
    %3027 = vst [vmem:[#allocation2 + $0x230] sm:$0xff] %v2899
    %3028 = vst [vmem:[#allocation2 + $0x238] sm:$0xff] %v2900
    %3029 = vst [vmem:[#allocation2 + $0x240] sm:$0xff] %v2901
    %3030 = vst [vmem:[#allocation2 + $0x248] sm:$0xff] %v2902
    %3031 = vst [vmem:[#allocation2 + $0x250] sm:$0xff] %v2903
    %3032 = vst [vmem:[#allocation2 + $0x258] sm:$0xff] %v2904
    %3033 = vst [vmem:[#allocation2 + $0x260] sm:$0xff] %v2905
    %3034 = vst [vmem:[#allocation2 + $0x268] sm:$0xff] %v2906
    %3035 = vst [vmem:[#allocation2 + $0x270] sm:$0xff] %v2907
    %3036 = vst [vmem:[#allocation2 + $0x278] sm:$0xff] %v2908
    %3037 = vst [vmem:[#allocation2 + $0x280] sm:$0xff] %v2909
    %3038 = vst [vmem:[#allocation2 + $0x288] sm:$0xff] %v2910
    %3039 = vst [vmem:[#allocation2 + $0x290] sm:$0xff] %v2911
    %3040 = vst [vmem:[#allocation2 + $0x298] sm:$0xff] %v2912
    %3041 = vst [vmem:[#allocation2 + $0x2a0] sm:$0xff] %v2913
    %3042 = vst [vmem:[#allocation2 + $0x2a8] sm:$0xff] %v2914
    %3043 = vst [vmem:[#allocation2 + $0x2b0] sm:$0xff] %v2915
    %3044 = vst [vmem:[#allocation2 + $0x2b8] sm:$0xff] %v2916
    %3045 = vst [vmem:[#allocation2 + $0x2c0] sm:$0xff] %v2917
    %3046 = vst [vmem:[#allocation2 + $0x2c8] sm:$0xff] %v2918
    %3047 = vst [vmem:[#allocation2 + $0x2d0] sm:$0xff] %v2919
    %3048 = vst [vmem:[#allocation2 + $0x2d8] sm:$0xff] %v2920
    %3049 = vst [vmem:[#allocation2 + $0x2e0] sm:$0xff] %v2921
    %3050 = vst [vmem:[#allocation2 + $0x2e8] sm:$0xff] %v2922
    %3051 = vst [vmem:[#allocation2 + $0x2f0] sm:$0xff] %v2923
    %3052 = vst [vmem:[#allocation2 + $0x2f8] sm:$0xff] %v2924
    %3053 = vst [vmem:[#allocation2 + $0x300] sm:$0xff] %v2925
    %3054 = vst [vmem:[#allocation2 + $0x308] sm:$0xff] %v2926
    %3055 = vst [vmem:[#allocation2 + $0x310] sm:$0xff] %v2927
    %3056 = vst [vmem:[#allocation2 + $0x318] sm:$0xff] %v2928
    %3057 = vst [vmem:[#allocation2 + $0x320] sm:$0xff] %v2929
    %3058 = vst [vmem:[#allocation2 + $0x328] sm:$0xff] %v2930
    %3059 = vst [vmem:[#allocation2 + $0x330] sm:$0xff] %v2931
    %3060 = vst [vmem:[#allocation2 + $0x338] sm:$0xff] %v2932
    %3061 = vst [vmem:[#allocation2 + $0x340] sm:$0xff] %v2933
    %3062 = vst [vmem:[#allocation2 + $0x348] sm:$0xff] %v2934
    %3063 = vst [vmem:[#allocation2 + $0x350] sm:$0xff] %v2935
    %3064 = vst [vmem:[#allocation2 + $0x358] sm:$0xff] %v2936
    %3065 = vst [vmem:[#allocation2 + $0x360] sm:$0xff] %v2937
    %3066 = vst [vmem:[#allocation2 + $0x368] sm:$0xff] %v2938
    %3067 = vst [vmem:[#allocation2 + $0x370] sm:$0xff] %v2939
    %3068 = vst [vmem:[#allocation2 + $0x378] sm:$0xff] %v2940
    %3069 = vst [vmem:[#allocation2 + $0x380] sm:$0xff] %v2941
    %3070 = vst [vmem:[#allocation2 + $0x388] sm:$0xff] %v2942
    %3071 = vst [vmem:[#allocation2 + $0x390] sm:$0xff] %v2943
    %3072 = vst [vmem:[#allocation2 + $0x398] sm:$0xff] %v2944
    %3073 = vst [vmem:[#allocation2 + $0x3a0] sm:$0xff] %v2945
    %3074 = vst [vmem:[#allocation2 + $0x3a8] sm:$0xff] %v2946
    %3075 = vst [vmem:[#allocation2 + $0x3b0] sm:$0xff] %v2947
    %3076 = vst [vmem:[#allocation2 + $0x3b8] sm:$0xff] %v2948
    %3077 = vst [vmem:[#allocation2 + $0x3c0] sm:$0xff] %v2949
    %3078 = vst [vmem:[#allocation2 + $0x3c8] sm:$0xff] %v2950
    %3079 = vst [vmem:[#allocation2 + $0x3d0] sm:$0xff] %v2951
    %3080 = vst [vmem:[#allocation2 + $0x3d8] sm:$0xff] %v2952
    %3081 = vst [vmem:[#allocation2 + $0x3e0] sm:$0xff] %v2953
    %3082 = vst [vmem:[#allocation2 + $0x3e8] sm:$0xff] %v2954
    %3083 = vst [vmem:[#allocation2 + $0x3f0] sm:$0xff] %v2955
    %3084 = vst [vmem:[#allocation2 + $0x3f8] sm:$0xff] %v2956
    // Predicated region
    $region34: #{tpu_custom_call.1} parent=1 // pred_check
      %p3085 = pneg %p65
    $region35: #{tpu_custom_call.1} parent=1 // pred_check_branch
      %3087 = sbr.rel (%p3085) target = $region37
    $region36: #{tpu_custom_call.1} parent=1 // pred_region
      %v3088 = vld [vmem:[#allocation2] sm:$0xff]
      %v3089 = vld [vmem:[#allocation2 + $0x8] sm:$0xff]
      %v3090 = vld [vmem:[#allocation2 + $0x10] sm:$0xff]
      %v3091 = vld [vmem:[#allocation2 + $0x18] sm:$0xff]
      %v3092 = vld [vmem:[#allocation2 + $0x20] sm:$0xff]
      %v3093 = vld [vmem:[#allocation2 + $0x28] sm:$0xff]
      %v3094 = vld [vmem:[#allocation2 + $0x30] sm:$0xff]
      %v3095 = vld [vmem:[#allocation2 + $0x38] sm:$0xff]
      %v3096 = vld [vmem:[#allocation2 + $0x40] sm:$0xff]
      %v3097 = vld [vmem:[#allocation2 + $0x48] sm:$0xff]
      %v3098 = vld [vmem:[#allocation2 + $0x50] sm:$0xff]
      %v3099 = vld [vmem:[#allocation2 + $0x58] sm:$0xff]
      %v3100 = vld [vmem:[#allocation2 + $0x60] sm:$0xff]
      %v3101 = vld [vmem:[#allocation2 + $0x68] sm:$0xff]
      %v3102 = vld [vmem:[#allocation2 + $0x70] sm:$0xff]
      %v3103 = vld [vmem:[#allocation2 + $0x78] sm:$0xff]
      %v3104 = vld [vmem:[#allocation2 + $0x80] sm:$0xff]
      %v3105 = vld [vmem:[#allocation2 + $0x88] sm:$0xff]
      %v3106 = vld [vmem:[#allocation2 + $0x90] sm:$0xff]
      %v3107 = vld [vmem:[#allocation2 + $0x98] sm:$0xff]
      %v3108 = vld [vmem:[#allocation2 + $0xa0] sm:$0xff]
      %v3109 = vld [vmem:[#allocation2 + $0xa8] sm:$0xff]
      %v3110 = vld [vmem:[#allocation2 + $0xb0] sm:$0xff]
      %v3111 = vld [vmem:[#allocation2 + $0xb8] sm:$0xff]
      %v3112 = vld [vmem:[#allocation2 + $0xc0] sm:$0xff]
      %v3113 = vld [vmem:[#allocation2 + $0xc8] sm:$0xff]
      %v3114 = vld [vmem:[#allocation2 + $0xd0] sm:$0xff]
      %v3115 = vld [vmem:[#allocation2 + $0xd8] sm:$0xff]
      %v3116 = vld [vmem:[#allocation2 + $0xe0] sm:$0xff]
      %v3117 = vld [vmem:[#allocation2 + $0xe8] sm:$0xff]
      %v3118 = vld [vmem:[#allocation2 + $0xf0] sm:$0xff]
      %v3119 = vld [vmem:[#allocation2 + $0xf8] sm:$0xff]
      %v3120 = vld [vmem:[#allocation2 + $0x100] sm:$0xff]
      %v3121 = vld [vmem:[#allocation2 + $0x108] sm:$0xff]
      %v3122 = vld [vmem:[#allocation2 + $0x110] sm:$0xff]
      %v3123 = vld [vmem:[#allocation2 + $0x118] sm:$0xff]
      %v3124 = vld [vmem:[#allocation2 + $0x120] sm:$0xff]
      %v3125 = vld [vmem:[#allocation2 + $0x128] sm:$0xff]
      %v3126 = vld [vmem:[#allocation2 + $0x130] sm:$0xff]
      %v3127 = vld [vmem:[#allocation2 + $0x138] sm:$0xff]
      %v3128 = vld [vmem:[#allocation2 + $0x140] sm:$0xff]
      %v3129 = vld [vmem:[#allocation2 + $0x148] sm:$0xff]
      %v3130 = vld [vmem:[#allocation2 + $0x150] sm:$0xff]
      %v3131 = vld [vmem:[#allocation2 + $0x158] sm:$0xff]
      %v3132 = vld [vmem:[#allocation2 + $0x160] sm:$0xff]
      %v3133 = vld [vmem:[#allocation2 + $0x168] sm:$0xff]
      %v3134 = vld [vmem:[#allocation2 + $0x170] sm:$0xff]
      %v3135 = vld [vmem:[#allocation2 + $0x178] sm:$0xff]
      %v3136 = vld [vmem:[#allocation2 + $0x180] sm:$0xff]
      %v3137 = vld [vmem:[#allocation2 + $0x188] sm:$0xff]
      %v3138 = vld [vmem:[#allocation2 + $0x190] sm:$0xff]
      %v3139 = vld [vmem:[#allocation2 + $0x198] sm:$0xff]
      %v3140 = vld [vmem:[#allocation2 + $0x1a0] sm:$0xff]
      %v3141 = vld [vmem:[#allocation2 + $0x1a8] sm:$0xff]
      %v3142 = vld [vmem:[#allocation2 + $0x1b0] sm:$0xff]
      %v3143 = vld [vmem:[#allocation2 + $0x1b8] sm:$0xff]
      %v3144 = vld [vmem:[#allocation2 + $0x1c0] sm:$0xff]
      %v3145 = vld [vmem:[#allocation2 + $0x1c8] sm:$0xff]
      %v3146 = vld [vmem:[#allocation2 + $0x1d0] sm:$0xff]
      %v3147 = vld [vmem:[#allocation2 + $0x1d8] sm:$0xff]
      %v3148 = vld [vmem:[#allocation2 + $0x1e0] sm:$0xff]
      %v3149 = vld [vmem:[#allocation2 + $0x1e8] sm:$0xff]
      %v3150 = vld [vmem:[#allocation2 + $0x1f0] sm:$0xff]
      %v3151 = vld [vmem:[#allocation2 + $0x1f8] sm:$0xff]
      %v3152 = vld [vmem:[#allocation2 + $0x200] sm:$0xff]
      %v3153 = vld [vmem:[#allocation2 + $0x208] sm:$0xff]
      %v3154 = vld [vmem:[#allocation2 + $0x210] sm:$0xff]
      %v3155 = vld [vmem:[#allocation2 + $0x218] sm:$0xff]
      %v3156 = vld [vmem:[#allocation2 + $0x220] sm:$0xff]
      %v3157 = vld [vmem:[#allocation2 + $0x228] sm:$0xff]
      %v3158 = vld [vmem:[#allocation2 + $0x230] sm:$0xff]
      %v3159 = vld [vmem:[#allocation2 + $0x238] sm:$0xff]
      %v3160 = vld [vmem:[#allocation2 + $0x240] sm:$0xff]
      %v3161 = vld [vmem:[#allocation2 + $0x248] sm:$0xff]
      %v3162 = vld [vmem:[#allocation2 + $0x250] sm:$0xff]
      %v3163 = vld [vmem:[#allocation2 + $0x258] sm:$0xff]
      %v3164 = vld [vmem:[#allocation2 + $0x260] sm:$0xff]
      %v3165 = vld [vmem:[#allocation2 + $0x268] sm:$0xff]
      %v3166 = vld [vmem:[#allocation2 + $0x270] sm:$0xff]
      %v3167 = vld [vmem:[#allocation2 + $0x278] sm:$0xff]
      %v3168 = vld [vmem:[#allocation2 + $0x280] sm:$0xff]
      %v3169 = vld [vmem:[#allocation2 + $0x288] sm:$0xff]
      %v3170 = vld [vmem:[#allocation2 + $0x290] sm:$0xff]
      %v3171 = vld [vmem:[#allocation2 + $0x298] sm:$0xff]
      %v3172 = vld [vmem:[#allocation2 + $0x2a0] sm:$0xff]
      %v3173 = vld [vmem:[#allocation2 + $0x2a8] sm:$0xff]
      %v3174 = vld [vmem:[#allocation2 + $0x2b0] sm:$0xff]
      %v3175 = vld [vmem:[#allocation2 + $0x2b8] sm:$0xff]
      %v3176 = vld [vmem:[#allocation2 + $0x2c0] sm:$0xff]
      %v3177 = vld [vmem:[#allocation2 + $0x2c8] sm:$0xff]
      %v3178 = vld [vmem:[#allocation2 + $0x2d0] sm:$0xff]
      %v3179 = vld [vmem:[#allocation2 + $0x2d8] sm:$0xff]
      %v3180 = vld [vmem:[#allocation2 + $0x2e0] sm:$0xff]
      %v3181 = vld [vmem:[#allocation2 + $0x2e8] sm:$0xff]
      %v3182 = vld [vmem:[#allocation2 + $0x2f0] sm:$0xff]
      %v3183 = vld [vmem:[#allocation2 + $0x2f8] sm:$0xff]
      %v3184 = vld [vmem:[#allocation2 + $0x300] sm:$0xff]
      %v3185 = vld [vmem:[#allocation2 + $0x308] sm:$0xff]
      %v3186 = vld [vmem:[#allocation2 + $0x310] sm:$0xff]
      %v3187 = vld [vmem:[#allocation2 + $0x318] sm:$0xff]
      %v3188 = vld [vmem:[#allocation2 + $0x320] sm:$0xff]
      %v3189 = vld [vmem:[#allocation2 + $0x328] sm:$0xff]
      %v3190 = vld [vmem:[#allocation2 + $0x330] sm:$0xff]
      %v3191 = vld [vmem:[#allocation2 + $0x338] sm:$0xff]
      %v3192 = vld [vmem:[#allocation2 + $0x340] sm:$0xff]
      %v3193 = vld [vmem:[#allocation2 + $0x348] sm:$0xff]
      %v3194 = vld [vmem:[#allocation2 + $0x350] sm:$0xff]
      %v3195 = vld [vmem:[#allocation2 + $0x358] sm:$0xff]
      %v3196 = vld [vmem:[#allocation2 + $0x360] sm:$0xff]
      %v3197 = vld [vmem:[#allocation2 + $0x368] sm:$0xff]
      %v3198 = vld [vmem:[#allocation2 + $0x370] sm:$0xff]
      %v3199 = vld [vmem:[#allocation2 + $0x378] sm:$0xff]
      %v3200 = vld [vmem:[#allocation2 + $0x380] sm:$0xff]
      %v3201 = vld [vmem:[#allocation2 + $0x388] sm:$0xff]
      %v3202 = vld [vmem:[#allocation2 + $0x390] sm:$0xff]
      %v3203 = vld [vmem:[#allocation2 + $0x398] sm:$0xff]
      %v3204 = vld [vmem:[#allocation2 + $0x3a0] sm:$0xff]
      %v3205 = vld [vmem:[#allocation2 + $0x3a8] sm:$0xff]
      %v3206 = vld [vmem:[#allocation2 + $0x3b0] sm:$0xff]
      %v3207 = vld [vmem:[#allocation2 + $0x3b8] sm:$0xff]
      %v3208 = vld [vmem:[#allocation2 + $0x3c0] sm:$0xff]
      %v3209 = vld [vmem:[#allocation2 + $0x3c8] sm:$0xff]
      %v3210 = vld [vmem:[#allocation2 + $0x3d0] sm:$0xff]
      %v3211 = vld [vmem:[#allocation2 + $0x3d8] sm:$0xff]
      %v3212 = vld [vmem:[#allocation2 + $0x3e0] sm:$0xff]
      %v3213 = vld [vmem:[#allocation2 + $0x3e8] sm:$0xff]
      %v3214 = vld [vmem:[#allocation2 + $0x3f0] sm:$0xff]
      %v3215 = vld [vmem:[#allocation2 + $0x3f8] sm:$0xff]
      %v3216 = vld [vmem:[%s3] sm:$0x1]
      %v3218 = vperm.slane %v3216, 0
      %v3220 = vadd.f32 %v3088, %v3218
      %v3221 = vadd.f32 %v3090, %v3218
      %v3222 = vadd.f32 %v3092, %v3218
      %v3223 = vadd.f32 %v3094, %v3218
      %v3224 = vadd.f32 %v3096, %v3218
      %v3225 = vadd.f32 %v3098, %v3218
      %v3226 = vadd.f32 %v3100, %v3218
      %v3227 = vadd.f32 %v3102, %v3218
      %v3228 = vadd.f32 %v3104, %v3218
      %v3229 = vadd.f32 %v3106, %v3218
      %v3230 = vadd.f32 %v3108, %v3218
      %v3231 = vadd.f32 %v3110, %v3218
      %v3232 = vadd.f32 %v3112, %v3218
      %v3233 = vadd.f32 %v3114, %v3218
      %v3234 = vadd.f32 %v3116, %v3218
      %v3235 = vadd.f32 %v3118, %v3218
      %v3236 = vadd.f32 %v3120, %v3218
      %v3237 = vadd.f32 %v3122, %v3218
      %v3238 = vadd.f32 %v3124, %v3218
      %v3239 = vadd.f32 %v3126, %v3218
      %v3240 = vadd.f32 %v3128, %v3218
      %v3241 = vadd.f32 %v3130, %v3218
      %v3242 = vadd.f32 %v3132, %v3218
      %v3243 = vadd.f32 %v3134, %v3218
      %v3244 = vadd.f32 %v3136, %v3218
      %v3245 = vadd.f32 %v3138, %v3218
      %v3246 = vadd.f32 %v3140, %v3218
      %v3247 = vadd.f32 %v3142, %v3218
      %v3248 = vadd.f32 %v3144, %v3218
      %v3249 = vadd.f32 %v3146, %v3218
      %v3250 = vadd.f32 %v3148, %v3218
      %v3251 = vadd.f32 %v3150, %v3218
      %v3252 = vadd.f32 %v3152, %v3218
      %v3253 = vadd.f32 %v3154, %v3218
      %v3254 = vadd.f32 %v3156, %v3218
      %v3255 = vadd.f32 %v3158, %v3218
      %v3256 = vadd.f32 %v3160, %v3218
      %v3257 = vadd.f32 %v3162, %v3218
      %v3258 = vadd.f32 %v3164, %v3218
      %v3259 = vadd.f32 %v3166, %v3218
      %v3260 = vadd.f32 %v3168, %v3218
      %v3261 = vadd.f32 %v3170, %v3218
      %v3262 = vadd.f32 %v3172, %v3218
      %v3263 = vadd.f32 %v3174, %v3218
      %v3264 = vadd.f32 %v3176, %v3218
      %v3265 = vadd.f32 %v3178, %v3218
      %v3266 = vadd.f32 %v3180, %v3218
      %v3267 = vadd.f32 %v3182, %v3218
      %v3268 = vadd.f32 %v3184, %v3218
      %v3269 = vadd.f32 %v3186, %v3218
      %v3270 = vadd.f32 %v3188, %v3218
      %v3271 = vadd.f32 %v3190, %v3218
      %v3272 = vadd.f32 %v3192, %v3218
      %v3273 = vadd.f32 %v3194, %v3218
      %v3274 = vadd.f32 %v3196, %v3218
      %v3275 = vadd.f32 %v3198, %v3218
      %v3276 = vadd.f32 %v3200, %v3218
      %v3277 = vadd.f32 %v3202, %v3218
      %v3278 = vadd.f32 %v3204, %v3218
      %v3279 = vadd.f32 %v3206, %v3218
      %v3280 = vadd.f32 %v3208, %v3218
      %v3281 = vadd.f32 %v3210, %v3218
      %v3282 = vadd.f32 %v3212, %v3218
      %v3283 = vadd.f32 %v3214, %v3218
      %v3284 = vmax.f32 %v3220, 0.0
      %v3285 = vmax.f32 %v3221, 0.0
      %v3286 = vmax.f32 %v3222, 0.0
      %v3287 = vmax.f32 %v3223, 0.0
      %v3288 = vmax.f32 %v3224, 0.0
      %v3289 = vmax.f32 %v3225, 0.0
      %v3290 = vmax.f32 %v3226, 0.0
      %v3291 = vmax.f32 %v3227, 0.0
      %v3292 = vmax.f32 %v3228, 0.0
      %v3293 = vmax.f32 %v3229, 0.0
      %v3294 = vmax.f32 %v3230, 0.0
      %v3295 = vmax.f32 %v3231, 0.0
      %v3296 = vmax.f32 %v3232, 0.0
      %v3297 = vmax.f32 %v3233, 0.0
      %v3298 = vmax.f32 %v3234, 0.0
      %v3299 = vmax.f32 %v3235, 0.0
      %v3300 = vmax.f32 %v3236, 0.0
      %v3301 = vmax.f32 %v3237, 0.0
      %v3302 = vmax.f32 %v3238, 0.0
      %v3303 = vmax.f32 %v3239, 0.0
      %v3304 = vmax.f32 %v3240, 0.0
      %v3305 = vmax.f32 %v3241, 0.0
      %v3306 = vmax.f32 %v3242, 0.0
      %v3307 = vmax.f32 %v3243, 0.0
      %v3308 = vmax.f32 %v3244, 0.0
      %v3309 = vmax.f32 %v3245, 0.0
      %v3310 = vmax.f32 %v3246, 0.0
      %v3311 = vmax.f32 %v3247, 0.0
      %v3312 = vmax.f32 %v3248, 0.0
      %v3313 = vmax.f32 %v3249, 0.0
      %v3314 = vmax.f32 %v3250, 0.0
      %v3315 = vmax.f32 %v3251, 0.0
      %v3316 = vmax.f32 %v3252, 0.0
      %v3317 = vmax.f32 %v3253, 0.0
      %v3318 = vmax.f32 %v3254, 0.0
      %v3319 = vmax.f32 %v3255, 0.0
      %v3320 = vmax.f32 %v3256, 0.0
      %v3321 = vmax.f32 %v3257, 0.0
      %v3322 = vmax.f32 %v3258, 0.0
      %v3323 = vmax.f32 %v3259, 0.0
      %v3324 = vmax.f32 %v3260, 0.0
      %v3325 = vmax.f32 %v3261, 0.0
      %v3326 = vmax.f32 %v3262, 0.0
      %v3327 = vmax.f32 %v3263, 0.0
      %v3328 = vmax.f32 %v3264, 0.0
      %v3329 = vmax.f32 %v3265, 0.0
      %v3330 = vmax.f32 %v3266, 0.0
      %v3331 = vmax.f32 %v3267, 0.0
      %v3332 = vmax.f32 %v3268, 0.0
      %v3333 = vmax.f32 %v3269, 0.0
      %v3334 = vmax.f32 %v3270, 0.0
      %v3335 = vmax.f32 %v3271, 0.0
      %v3336 = vmax.f32 %v3272, 0.0
      %v3337 = vmax.f32 %v3273, 0.0
      %v3338 = vmax.f32 %v3274, 0.0
      %v3339 = vmax.f32 %v3275, 0.0
      %v3340 = vmax.f32 %v3276, 0.0
      %v3341 = vmax.f32 %v3277, 0.0
      %v3342 = vmax.f32 %v3278, 0.0
      %v3343 = vmax.f32 %v3279, 0.0
      %v3344 = vmax.f32 %v3280, 0.0
      %v3345 = vmax.f32 %v3281, 0.0
      %v3346 = vmax.f32 %v3282, 0.0
      %v3347 = vmax.f32 %v3283, 0.0
      %v3348 = vpack.c.bf16 %v3285, %v3284
      %v3349 = vpack.c.bf16 %v3287, %v3286
      %v3350 = vpack.c.bf16 %v3289, %v3288
      %v3351 = vpack.c.bf16 %v3291, %v3290
      %v3352 = vpack.c.bf16 %v3293, %v3292
      %v3353 = vpack.c.bf16 %v3295, %v3294
      %v3354 = vpack.c.bf16 %v3297, %v3296
      %v3355 = vpack.c.bf16 %v3299, %v3298
      %v3356 = vpack.c.bf16 %v3301, %v3300
      %v3357 = vpack.c.bf16 %v3303, %v3302
      %v3358 = vpack.c.bf16 %v3305, %v3304
      %v3359 = vpack.c.bf16 %v3307, %v3306
      %v3360 = vpack.c.bf16 %v3309, %v3308
      %v3361 = vpack.c.bf16 %v3311, %v3310
      %v3362 = vpack.c.bf16 %v3313, %v3312
      %v3363 = vpack.c.bf16 %v3315, %v3314
      %v3364 = vpack.c.bf16 %v3317, %v3316
      %v3365 = vpack.c.bf16 %v3319, %v3318
      %v3366 = vpack.c.bf16 %v3321, %v3320
      %v3367 = vpack.c.bf16 %v3323, %v3322
      %v3368 = vpack.c.bf16 %v3325, %v3324
      %v3369 = vpack.c.bf16 %v3327, %v3326
      %v3370 = vpack.c.bf16 %v3329, %v3328
      %v3371 = vpack.c.bf16 %v3331, %v3330
      %v3372 = vpack.c.bf16 %v3333, %v3332
      %v3373 = vpack.c.bf16 %v3335, %v3334
      %v3374 = vpack.c.bf16 %v3337, %v3336
      %v3375 = vpack.c.bf16 %v3339, %v3338
      %v3376 = vpack.c.bf16 %v3341, %v3340
      %v3377 = vpack.c.bf16 %v3343, %v3342
      %v3378 = vpack.c.bf16 %v3345, %v3344
      %v3379 = vpack.c.bf16 %v3347, %v3346
      %3380 = vxpose.xlu0.b32.start [1/16] %v3089, 128
      %3381 = vxpose.xlu0.b32.cont [2/16] %v3091, 128
      %3382 = vxpose.xlu0.b32.cont [3/16] %v3093, 128
      %3383 = vxpose.xlu0.b32.cont [4/16] %v3095, 128
      %3384 = vxpose.xlu0.b32.cont [5/16] %v3097, 128
      %3385 = vxpose.xlu0.b32.cont [6/16] %v3099, 128
      %3386 = vxpose.xlu0.b32.cont [7/16] %v3101, 128
      %3387 = vxpose.xlu0.b32.cont [8/16] %v3103, 128
      %3388 = vxpose.xlu0.b32.cont [9/16] %v3105, 128
      %3389 = vxpose.xlu0.b32.cont [10/16] %v3107, 128
      %3390 = vxpose.xlu0.b32.cont [11/16] %v3109, 128
      %3391 = vxpose.xlu0.b32.cont [12/16] %v3111, 128
      %3392 = vxpose.xlu0.b32.cont [13/16] %v3113, 128
      %3393 = vxpose.xlu0.b32.cont [14/16] %v3115, 128
      %3394 = vxpose.xlu0.b32.cont [15/16] %v3117, 128
      %3395 = vxpose.xlu0.b32.end [16/16] %v3119, 128
      %v3396 = vpop.trf.xlu0
      %v3397 = vpop.trf.xlu0
      %v3398 = vpop.trf.xlu0
      %v3399 = vpop.trf.xlu0
      %v3400 = vpop.trf.xlu0
      %v3401 = vpop.trf.xlu0
      %v3402 = vpop.trf.xlu0
      %v3403 = vpop.trf.xlu0
      %v3404 = vpop.trf.xlu0
      %v3405 = vpop.trf.xlu0
      %v3406 = vpop.trf.xlu0
      %v3407 = vpop.trf.xlu0
      %v3408 = vpop.trf.xlu0
      %v3409 = vpop.trf.xlu0
      %v3410 = vpop.trf.xlu0
      %v3411 = vpop.trf.xlu0
      %3412 = vxpose.xlu0.b32.start [1/16] %v3121, 128
      %3413 = vxpose.xlu0.b32.cont [2/16] %v3123, 128
      %3414 = vxpose.xlu0.b32.cont [3/16] %v3125, 128
      %3415 = vxpose.xlu0.b32.cont [4/16] %v3127, 128
      %3416 = vxpose.xlu0.b32.cont [5/16] %v3129, 128
      %3417 = vxpose.xlu0.b32.cont [6/16] %v3131, 128
      %3418 = vxpose.xlu0.b32.cont [7/16] %v3133, 128
      %3419 = vxpose.xlu0.b32.cont [8/16] %v3135, 128
      %3420 = vxpose.xlu0.b32.cont [9/16] %v3137, 128
      %3421 = vxpose.xlu0.b32.cont [10/16] %v3139, 128
      %3422 = vxpose.xlu0.b32.cont [11/16] %v3141, 128
      %3423 = vxpose.xlu0.b32.cont [12/16] %v3143, 128
      %3424 = vxpose.xlu0.b32.cont [13/16] %v3145, 128
      %3425 = vxpose.xlu0.b32.cont [14/16] %v3147, 128
      %3426 = vxpose.xlu0.b32.cont [15/16] %v3149, 128
      %3427 = vxpose.xlu0.b32.end [16/16] %v3151, 128
      %v3428 = vpop.trf.xlu0
      %v3429 = vpop.trf.xlu0
      %v3430 = vpop.trf.xlu0
      %v3431 = vpop.trf.xlu0
      %v3432 = vpop.trf.xlu0
      %v3433 = vpop.trf.xlu0
      %v3434 = vpop.trf.xlu0
      %v3435 = vpop.trf.xlu0
      %v3436 = vpop.trf.xlu0
      %v3437 = vpop.trf.xlu0
      %v3438 = vpop.trf.xlu0
      %v3439 = vpop.trf.xlu0
      %v3440 = vpop.trf.xlu0
      %v3441 = vpop.trf.xlu0
      %v3442 = vpop.trf.xlu0
      %v3443 = vpop.trf.xlu0
      %3444 = vxpose.xlu0.b32.start [1/16] %v3153, 128
      %3445 = vxpose.xlu0.b32.cont [2/16] %v3155, 128
      %3446 = vxpose.xlu0.b32.cont [3/16] %v3157, 128
      %3447 = vxpose.xlu0.b32.cont [4/16] %v3159, 128
      %3448 = vxpose.xlu0.b32.cont [5/16] %v3161, 128
      %3449 = vxpose.xlu0.b32.cont [6/16] %v3163, 128
      %3450 = vxpose.xlu0.b32.cont [7/16] %v3165, 128
      %3451 = vxpose.xlu0.b32.cont [8/16] %v3167, 128
      %3452 = vxpose.xlu0.b32.cont [9/16] %v3169, 128
      %3453 = vxpose.xlu0.b32.cont [10/16] %v3171, 128
      %3454 = vxpose.xlu0.b32.cont [11/16] %v3173, 128
      %3455 = vxpose.xlu0.b32.cont [12/16] %v3175, 128
      %3456 = vxpose.xlu0.b32.cont [13/16] %v3177, 128
      %3457 = vxpose.xlu0.b32.cont [14/16] %v3179, 128
      %3458 = vxpose.xlu0.b32.cont [15/16] %v3181, 128
      %3459 = vxpose.xlu0.b32.end [16/16] %v3183, 128
      %v3460 = vpop.trf.xlu0
      %v3461 = vpop.trf.xlu0
      %v3462 = vpop.trf.xlu0
      %v3463 = vpop.trf.xlu0
      %v3464 = vpop.trf.xlu0
      %v3465 = vpop.trf.xlu0
      %v3466 = vpop.trf.xlu0
      %v3467 = vpop.trf.xlu0
      %v3468 = vpop.trf.xlu0
      %v3469 = vpop.trf.xlu0
      %v3470 = vpop.trf.xlu0
      %v3471 = vpop.trf.xlu0
      %v3472 = vpop.trf.xlu0
      %v3473 = vpop.trf.xlu0
      %v3474 = vpop.trf.xlu0
      %v3475 = vpop.trf.xlu0
      %3476 = vxpose.xlu0.b32.start [1/16] %v3185, 128
      %3477 = vxpose.xlu0.b32.cont [2/16] %v3187, 128
      %3478 = vxpose.xlu0.b32.cont [3/16] %v3189, 128
      %3479 = vxpose.xlu0.b32.cont [4/16] %v3191, 128
      %3480 = vxpose.xlu0.b32.cont [5/16] %v3193, 128
      %3481 = vxpose.xlu0.b32.cont [6/16] %v3195, 128
      %3482 = vxpose.xlu0.b32.cont [7/16] %v3197, 128
      %3483 = vxpose.xlu0.b32.cont [8/16] %v3199, 128
      %3484 = vxpose.xlu0.b32.cont [9/16] %v3201, 128
      %3485 = vxpose.xlu0.b32.cont [10/16] %v3203, 128
      %3486 = vxpose.xlu0.b32.cont [11/16] %v3205, 128
      %3487 = vxpose.xlu0.b32.cont [12/16] %v3207, 128
      %3488 = vxpose.xlu0.b32.cont [13/16] %v3209, 128
      %3489 = vxpose.xlu0.b32.cont [14/16] %v3211, 128
      %3490 = vxpose.xlu0.b32.cont [15/16] %v3213, 128
      %3491 = vxpose.xlu0.b32.end [16/16] %v3215, 128
      %v3492 = vpop.trf.xlu0
      %v3493 = vpop.trf.xlu0
      %v3494 = vpop.trf.xlu0
      %v3495 = vpop.trf.xlu0
      %v3496 = vpop.trf.xlu0
      %v3497 = vpop.trf.xlu0
      %v3498 = vpop.trf.xlu0
      %v3499 = vpop.trf.xlu0
      %v3500 = vpop.trf.xlu0
      %v3501 = vpop.trf.xlu0
      %v3502 = vpop.trf.xlu0
      %v3503 = vpop.trf.xlu0
      %v3504 = vpop.trf.xlu0
      %v3505 = vpop.trf.xlu0
      %v3506 = vpop.trf.xlu0
      %v3507 = vpop.trf.xlu0
      %v3508 = vpack.c.bf16 %v3397, %v3396
      %v3509 = vpack.c.bf16 %v3429, %v3428
      %v3510 = vpack.c.bf16 %v3461, %v3460
      %v3511 = vpack.c.bf16 %v3493, %v3492
      %v3512 = vpack.c.bf16 %v3399, %v3398
      %v3513 = vpack.c.bf16 %v3431, %v3430
      %v3514 = vpack.c.bf16 %v3463, %v3462
      %v3515 = vpack.c.bf16 %v3495, %v3494
      %v3516 = vpack.c.bf16 %v3401, %v3400
      %v3517 = vpack.c.bf16 %v3433, %v3432
      %v3518 = vpack.c.bf16 %v3465, %v3464
      %v3519 = vpack.c.bf16 %v3497, %v3496
      %v3520 = vpack.c.bf16 %v3403, %v3402
      %v3521 = vpack.c.bf16 %v3435, %v3434
      %v3522 = vpack.c.bf16 %v3467, %v3466
      %v3523 = vpack.c.bf16 %v3499, %v3498
      %v3524 = vpack.c.bf16 %v3405, %v3404
      %v3525 = vpack.c.bf16 %v3437, %v3436
      %v3526 = vpack.c.bf16 %v3469, %v3468
      %v3527 = vpack.c.bf16 %v3501, %v3500
      %v3528 = vpack.c.bf16 %v3407, %v3406
      %v3529 = vpack.c.bf16 %v3439, %v3438
      %v3530 = vpack.c.bf16 %v3471, %v3470
      %v3531 = vpack.c.bf16 %v3503, %v3502
      %v3532 = vpack.c.bf16 %v3409, %v3408
      %v3533 = vpack.c.bf16 %v3441, %v3440
      %v3534 = vpack.c.bf16 %v3473, %v3472
      %v3535 = vpack.c.bf16 %v3505, %v3504
      %v3536 = vpack.c.bf16 %v3411, %v3410
      %v3537 = vpack.c.bf16 %v3443, %v3442
      %v3538 = vpack.c.bf16 %v3475, %v3474
      %v3539 = vpack.c.bf16 %v3507, %v3506
      %3540 = vmatpush.bf16.msra.mxu0 %v3355
      %3541 = vmatpush.bf16.msra.mxu0 %v3354
      %3542 = vmatpush.bf16.msra.mxu0 %v3353
      %3543 = vmatpush.bf16.msra.mxu0 %v3352
      %3544 = vmatpush.bf16.msra.mxu0 %v3351
      %3545 = vmatpush.bf16.msra.mxu0 %v3350
      %3546 = vmatpush.bf16.msra.mxu0 %v3349
      %3547 = vmatpush.bf16.msra.mxu0 %v3348
      %3548 = vmatmul.bf16.gmra.mxu0 %v3508
      %v3549 = vpop.f32.mrf.mxu0
      %v3550 = vadd.f32 0.0, %v3549
      %v3551 = vpop.f32.mrf.mxu0
      %v3552 = vadd.f32 0.0, %v3551
      %3553 = vmatmul.bf16.gmra.mxu0 %v3512
      %v3554 = vpop.f32.mrf.mxu0
      %v3555 = vadd.f32 0.0, %v3554
      %v3556 = vpop.f32.mrf.mxu0
      %v3557 = vadd.f32 0.0, %v3556
      %3558 = vmatmul.bf16.gmra.mxu0 %v3516
      %v3559 = vpop.f32.mrf.mxu0
      %v3560 = vadd.f32 0.0, %v3559
      %v3561 = vpop.f32.mrf.mxu0
      %v3562 = vadd.f32 0.0, %v3561
      %3563 = vmatmul.bf16.gmra.mxu0 %v3520
      %v3564 = vpop.f32.mrf.mxu0
      %v3565 = vadd.f32 0.0, %v3564
      %v3566 = vpop.f32.mrf.mxu0
      %v3567 = vadd.f32 0.0, %v3566
      %3568 = vmatmul.bf16.gmra.mxu0 %v3524
      %v3569 = vpop.f32.mrf.mxu0
      %v3570 = vadd.f32 0.0, %v3569
      %v3571 = vpop.f32.mrf.mxu0
      %v3572 = vadd.f32 0.0, %v3571
      %3573 = vmatmul.bf16.gmra.mxu0 %v3528
      %v3574 = vpop.f32.mrf.mxu0
      %v3575 = vadd.f32 0.0, %v3574
      %v3576 = vpop.f32.mrf.mxu0
      %v3577 = vadd.f32 0.0, %v3576
      %3578 = vmatmul.bf16.gmra.mxu0 %v3532
      %v3579 = vpop.f32.mrf.mxu0
      %v3580 = vadd.f32 0.0, %v3579
      %v3581 = vpop.f32.mrf.mxu0
      %v3582 = vadd.f32 0.0, %v3581
      %3583 = vmatmul.bf16.gmra.mxu0 %v3536
      %v3584 = vpop.f32.mrf.mxu0
      %v3585 = vadd.f32 0.0, %v3584
      %v3586 = vpop.f32.mrf.mxu0
      %v3587 = vadd.f32 0.0, %v3586
      %3588 = vdwg.mxu0
      %3589 = vmatpush.bf16.msra.mxu0 %v3363
      %3590 = vmatpush.bf16.msra.mxu0 %v3362
      %3591 = vmatpush.bf16.msra.mxu0 %v3361
      %3592 = vmatpush.bf16.msra.mxu0 %v3360
      %3593 = vmatpush.bf16.msra.mxu0 %v3359
      %3594 = vmatpush.bf16.msra.mxu0 %v3358
      %3595 = vmatpush.bf16.msra.mxu0 %v3357
      %3596 = vmatpush.bf16.msra.mxu0 %v3356
      %3597 = vmatmul.bf16.gmra.mxu0 %v3509
      %v3598 = vpop.f32.mrf.mxu0
      %v3599 = vadd.f32 %v3550, %v3598
      %v3600 = vpop.f32.mrf.mxu0
      %v3601 = vadd.f32 %v3552, %v3600
      %3602 = vmatmul.bf16.gmra.mxu0 %v3513
      %v3603 = vpop.f32.mrf.mxu0
      %v3604 = vadd.f32 %v3555, %v3603
      %v3605 = vpop.f32.mrf.mxu0
      %v3606 = vadd.f32 %v3557, %v3605
      %3607 = vmatmul.bf16.gmra.mxu0 %v3517
      %v3608 = vpop.f32.mrf.mxu0
      %v3609 = vadd.f32 %v3560, %v3608
      %v3610 = vpop.f32.mrf.mxu0
      %v3611 = vadd.f32 %v3562, %v3610
      %3612 = vmatmul.bf16.gmra.mxu0 %v3521
      %v3613 = vpop.f32.mrf.mxu0
      %v3614 = vadd.f32 %v3565, %v3613
      %v3615 = vpop.f32.mrf.mxu0
      %v3616 = vadd.f32 %v3567, %v3615
      %3617 = vmatmul.bf16.gmra.mxu0 %v3525
      %v3618 = vpop.f32.mrf.mxu0
      %v3619 = vadd.f32 %v3570, %v3618
      %v3620 = vpop.f32.mrf.mxu0
      %v3621 = vadd.f32 %v3572, %v3620
      %3622 = vmatmul.bf16.gmra.mxu0 %v3529
      %v3623 = vpop.f32.mrf.mxu0
      %v3624 = vadd.f32 %v3575, %v3623
      %v3625 = vpop.f32.mrf.mxu0
      %v3626 = vadd.f32 %v3577, %v3625
      %3627 = vmatmul.bf16.gmra.mxu0 %v3533
      %v3628 = vpop.f32.mrf.mxu0
      %v3629 = vadd.f32 %v3580, %v3628
      %v3630 = vpop.f32.mrf.mxu0
      %v3631 = vadd.f32 %v3582, %v3630
      %3632 = vmatmul.bf16.gmra.mxu0 %v3537
      %v3633 = vpop.f32.mrf.mxu0
      %v3634 = vadd.f32 %v3585, %v3633
      %v3635 = vpop.f32.mrf.mxu0
      %v3636 = vadd.f32 %v3587, %v3635
      %3637 = vdwg.mxu0
      %3638 = vmatpush.bf16.msra.mxu0 %v3371
      %3639 = vmatpush.bf16.msra.mxu0 %v3370
      %3640 = vmatpush.bf16.msra.mxu0 %v3369
      %3641 = vmatpush.bf16.msra.mxu0 %v3368
      %3642 = vmatpush.bf16.msra.mxu0 %v3367
      %3643 = vmatpush.bf16.msra.mxu0 %v3366
      %3644 = vmatpush.bf16.msra.mxu0 %v3365
      %3645 = vmatpush.bf16.msra.mxu0 %v3364
      %3646 = vmatmul.bf16.gmra.mxu0 %v3510
      %v3647 = vpop.f32.mrf.mxu0
      %v3648 = vadd.f32 %v3599, %v3647
      %v3649 = vpop.f32.mrf.mxu0
      %v3650 = vadd.f32 %v3601, %v3649
      %3651 = vmatmul.bf16.gmra.mxu0 %v3514
      %v3652 = vpop.f32.mrf.mxu0
      %v3653 = vadd.f32 %v3604, %v3652
      %v3654 = vpop.f32.mrf.mxu0
      %v3655 = vadd.f32 %v3606, %v3654
      %3656 = vmatmul.bf16.gmra.mxu0 %v3518
      %v3657 = vpop.f32.mrf.mxu0
      %v3658 = vadd.f32 %v3609, %v3657
      %v3659 = vpop.f32.mrf.mxu0
      %v3660 = vadd.f32 %v3611, %v3659
      %3661 = vmatmul.bf16.gmra.mxu0 %v3522
      %v3662 = vpop.f32.mrf.mxu0
      %v3663 = vadd.f32 %v3614, %v3662
      %v3664 = vpop.f32.mrf.mxu0
      %v3665 = vadd.f32 %v3616, %v3664
      %3666 = vmatmul.bf16.gmra.mxu0 %v3526
      %v3667 = vpop.f32.mrf.mxu0
      %v3668 = vadd.f32 %v3619, %v3667
      %v3669 = vpop.f32.mrf.mxu0
      %v3670 = vadd.f32 %v3621, %v3669
      %3671 = vmatmul.bf16.gmra.mxu0 %v3530
      %v3672 = vpop.f32.mrf.mxu0
      %v3673 = vadd.f32 %v3624, %v3672
      %v3674 = vpop.f32.mrf.mxu0
      %v3675 = vadd.f32 %v3626, %v3674
      %3676 = vmatmul.bf16.gmra.mxu0 %v3534
      %v3677 = vpop.f32.mrf.mxu0
      %v3678 = vadd.f32 %v3629, %v3677
      %v3679 = vpop.f32.mrf.mxu0
      %v3680 = vadd.f32 %v3631, %v3679
      %3681 = vmatmul.bf16.gmra.mxu0 %v3538
      %v3682 = vpop.f32.mrf.mxu0
      %v3683 = vadd.f32 %v3634, %v3682
      %v3684 = vpop.f32.mrf.mxu0
      %v3685 = vadd.f32 %v3636, %v3684
      %3686 = vdwg.mxu0
      %3687 = vmatpush.bf16.msra.mxu0 %v3379
      %3688 = vmatpush.bf16.msra.mxu0 %v3378
      %3689 = vmatpush.bf16.msra.mxu0 %v3377
      %3690 = vmatpush.bf16.msra.mxu0 %v3376
      %3691 = vmatpush.bf16.msra.mxu0 %v3375
      %3692 = vmatpush.bf16.msra.mxu0 %v3374
      %3693 = vmatpush.bf16.msra.mxu0 %v3373
      %3694 = vmatpush.bf16.msra.mxu0 %v3372
      %3695 = vmatmul.bf16.gmra.mxu0 %v3511
      %v3696 = vpop.f32.mrf.mxu0
      %v3697 = vadd.f32 %v3648, %v3696
      %v3698 = vpop.f32.mrf.mxu0
      %v3699 = vadd.f32 %v3650, %v3698
      %3700 = vmatmul.bf16.gmra.mxu0 %v3515
      %v3701 = vpop.f32.mrf.mxu0
      %v3702 = vadd.f32 %v3653, %v3701
      %v3703 = vpop.f32.mrf.mxu0
      %v3704 = vadd.f32 %v3655, %v3703
      %3705 = vmatmul.bf16.gmra.mxu0 %v3519
      %v3706 = vpop.f32.mrf.mxu0
      %v3707 = vadd.f32 %v3658, %v3706
      %v3708 = vpop.f32.mrf.mxu0
      %v3709 = vadd.f32 %v3660, %v3708
      %3710 = vmatmul.bf16.gmra.mxu0 %v3523
      %v3711 = vpop.f32.mrf.mxu0
      %v3712 = vadd.f32 %v3663, %v3711
      %v3713 = vpop.f32.mrf.mxu0
      %v3714 = vadd.f32 %v3665, %v3713
      %3715 = vmatmul.bf16.gmra.mxu0 %v3527
      %v3716 = vpop.f32.mrf.mxu0
      %v3717 = vadd.f32 %v3668, %v3716
      %v3718 = vpop.f32.mrf.mxu0
      %v3719 = vadd.f32 %v3670, %v3718
      %3720 = vmatmul.bf16.gmra.mxu0 %v3531
      %v3721 = vpop.f32.mrf.mxu0
      %v3722 = vadd.f32 %v3673, %v3721
      %v3723 = vpop.f32.mrf.mxu0
      %v3724 = vadd.f32 %v3675, %v3723
      %3725 = vmatmul.bf16.gmra.mxu0 %v3535
      %v3726 = vpop.f32.mrf.mxu0
      %v3727 = vadd.f32 %v3678, %v3726
      %v3728 = vpop.f32.mrf.mxu0
      %v3729 = vadd.f32 %v3680, %v3728
      %3730 = vmatmul.bf16.gmra.mxu0 %v3539
      %v3731 = vpop.f32.mrf.mxu0
      %v3732 = vadd.f32 %v3683, %v3731
      %v3733 = vpop.f32.mrf.mxu0
      %v3734 = vadd.f32 %v3685, %v3733
      %3735 = vdwg.mxu0
      %3736 = vst [vmem:[#allocation9] sm:$0xff] %v3697
      %3737 = vst [vmem:[#allocation9 + $0x8] sm:$0xff] %v3699
      %3738 = vst [vmem:[#allocation9 + $0x10] sm:$0xff] %v3702
      %3739 = vst [vmem:[#allocation9 + $0x18] sm:$0xff] %v3704
      %3740 = vst [vmem:[#allocation9 + $0x20] sm:$0xff] %v3707
      %3741 = vst [vmem:[#allocation9 + $0x28] sm:$0xff] %v3709
      %3742 = vst [vmem:[#allocation9 + $0x30] sm:$0xff] %v3712
      %3743 = vst [vmem:[#allocation9 + $0x38] sm:$0xff] %v3714
      %3744 = vst [vmem:[#allocation9 + $0x40] sm:$0xff] %v3717
      %3745 = vst [vmem:[#allocation9 + $0x48] sm:$0xff] %v3719
      %3746 = vst [vmem:[#allocation9 + $0x50] sm:$0xff] %v3722
      %3747 = vst [vmem:[#allocation9 + $0x58] sm:$0xff] %v3724
      %3748 = vst [vmem:[#allocation9 + $0x60] sm:$0xff] %v3727
      %3749 = vst [vmem:[#allocation9 + $0x68] sm:$0xff] %v3729
      %3750 = vst [vmem:[#allocation9 + $0x70] sm:$0xff] %v3732
      %3751 = vst [vmem:[#allocation9 + $0x78] sm:$0xff] %v3734
    $region37: #{tpu_custom_call.1} parent=1 // pred_fallthru
      _
    // Predicated region
    $region38: #{tpu_custom_call.1} parent=1 // pred_check
      _
    $region39: #{tpu_custom_call.1} parent=1 // pred_check_branch
      %3753 = sbr.rel (0) target = $region41
    $region40: #{tpu_custom_call.1} parent=1 // pred_region
      %3755 = vsyncadd [#allocation5], 0
      %s3756 = sshll.u32 [#allocation9], 4
      %s3757 = int_to_ptr.vmem [resolvable:$true] %s3756
      %s3758 = sshll.u32 %s4, 4
      %s3759 = int_to_ptr.hbm [resolvable:$true] %s3758
      %3764 = dma.vmem_to_hbm [thread:$0]  %s3757, 2048, %s3759, [#allocation5], 128, 128, 8
    $region41: #{tpu_custom_call.1} parent=1 // pred_fallthru
      _
    // Predicated region
    $region42: #{tpu_custom_call.1} parent=1 // pred_check
      _
    $region43: #{tpu_custom_call.1} parent=1 // pred_check_branch
      %3766 = sbr.rel (0) target = $region45
    $region44: #{tpu_custom_call.1} parent=1 // pred_region
      %3768 = dma.done [#allocation5], 2048
    $region45: #{tpu_custom_call.1} parent=1 // pred_fallthru
      _
    %3769 = vsyncpa [#allocation4], 1
    %3770 = vsyncpa [#allocation7], 1
    %3771 = vsyncpa [#allocation5], 1

</llo_original>
